<compile_context>
chip_gen: v7x
topology: tpu7x:2x2x1
jax: 0.10.0
libtpu: 0.0.40
codegen_flags: <defaults>
</compile_context>

<pallas_src>
import jax
import jax.numpy as jnp
from jax.experimental import pallas as pl
from jax.experimental.pallas import tpu as pltpu

_R = 16  # bf16 (16,128) sublane-tile-aligned start row of the image inside the scratch


def block_kernel(x_ref, a1_ref, b1_ref, wf_ref, bf_ref, wg_ref, bg_ref,
                 a2_ref, b2_ref, o_ref, pad_ref):
    # x_ref: (Nb, H, P) packed input block; pad_ref: (Nb, H + 2*_R, P) bf16 scratch.
    Nb, H, P = x_ref.shape
    R = _R
    M = Nb * H                       # row (M) dimension fed to every matmul
    bf16 = jnp.bfloat16

    # Zero only the halo rows the shifted slabs read (4-row, packing-aligned ranges),
    # every step: under megacore "parallel" sharding a core other than 0 never sees
    # program_id 0, so a once-only zero would leave it reading garbage.
    pad_ref[:, R - 4:R, :] = jnp.zeros((Nb, 4, P), dtype=bf16)
    pad_ref[:, R + H:R + H + 4, :] = jnp.zeros((Nb, 4, P), dtype=bf16)

    def dwconv7x7(img_bf16, a_ref):
        """Depthwise 7x7 'same' conv in packed (H, W*C) layout.

        Horizontal taps + channel structure live in the banded block-diagonal
        matrix A (built in pack_weights), so the whole conv is one MXU matmul
        of the 7 vertically shifted row slabs against A.
        """
        pad_ref[:, R:R + H, :] = img_bf16                         # tile-aligned store
        slabs = [pad_ref[:, R - 3 + i:R - 3 + i + H, :] for i in range(7)]
        lhs = jnp.concatenate(slabs, axis=2).reshape(M, 7 * P)    # (M, 7P) bf16
        return jnp.dot(lhs, a_ref[...], preferred_element_type=jnp.float32)

    x = x_ref[...]                                                # (Nb, H, P) f32
    xf = x.reshape(M, P)                                          # residual rows

    # ---- depthwise 7x7 conv #1 (eval-mode BN folded into a1/b1) ----
    y = dwconv7x7(x.astype(bf16), a1_ref) + b1_ref[...]           # (M, P)

    # ---- f1|f2 fused into one 1x1 matmul (bf16 in / f32 acc) + ReLU6 gate ----
    a = jnp.dot(y.astype(bf16), wf_ref[...],
                preferred_element_type=jnp.float32) + bf_ref[...]  # (M, 2*W*MC)
    half = a.shape[-1] // 2
    z = jnp.clip(a[:, :half], 0.0, 6.0) * a[:, half:]             # relu6(f1)*f2

    # ---- g: 1x1 conv back to dim (BN folded into wg/bg) ----
    g = jnp.dot(z.astype(bf16), wg_ref[...],
                preferred_element_type=jnp.float32) + bg_ref[...]  # (M, P)

    # ---- depthwise 7x7 conv #2 + residual (DropPath(p=0) == identity) ----
    out = xf + dwconv7x7(g.reshape(Nb, H, P).astype(bf16), a2_ref) + b2_ref[...]
    o_ref[...] = out.reshape(Nb, H, P)


def pack_weights(p, W, eps=1e-5):
    """Fold eval-mode BN and build lane-dense matmul operands.

    Plain-JAX preprocessing — call ONCE per parameter set (hoisted out of the
    per-call path per review), then reuse the packed dict for every forward.
    """
    C = p["w_dw1"].shape[-1]
    MC = p["w_f1"].shape[1]
    P = W * C
    bf16 = jnp.bfloat16

    s1 = p["bn1_gamma"] / jnp.sqrt(p["bn1_var"] + eps)
    w1f = p["w_dw1"] * s1[None, None, :]
    b1f = (p["b_dw1"] - p["bn1_mean"]) * s1 + p["bn1_beta"]
    sg = p["bng_gamma"] / jnp.sqrt(p["bng_var"] + eps)
    wgf = p["w_g"] * sg[None, :]
    bgf = (p["b_g"] - p["bng_mean"]) * sg + p["bng_beta"]

    def dw_matrix(wgt):
        """(7,7,C) depthwise taps -> (7*P, P) stacked banded block matrix.

        Row i*P + w'*C + c, column w*C + c' holds wgt[i, w'-w+3, c] * (c==c')
        when |w'-w| <= 3, else 0, so  out = concat_i(shifted_rows_i) @ A
        reproduces the depthwise conv incl. the horizontal zero padding.
        """
        wp = jnp.arange(W)[:, None]                    # source column w'
        wo = jnp.arange(W)[None, :]                    # output column w
        j = wp - wo + 3                                # horizontal tap index
        valid = ((j >= 0) & (j <= 6)).astype(wgt.dtype)                # (W, W)
        taps = wgt[:, jnp.clip(j, 0, 6), :] * valid[None, :, :, None]  # (7,W',W,C)
        eye_c = jnp.eye(C, dtype=wgt.dtype)
        a5 = taps[:, :, :, :, None] * eye_c[None, None, None, :, :]    # (7,W',W,C,C')
        return a5.transpose(0, 1, 3, 2, 4).reshape(7 * P, P)

    def block_diag(w):
        """Per-pixel block-diagonal 1x1-conv weight: (cin, cout) -> (W*cin, W*cout)."""
        cin, cout = w.shape
        eye = jnp.eye(W, dtype=w.dtype)
        return jnp.einsum("uv,io->uivo", eye, w).reshape(W * cin, W * cout)

    tile_b = lambda b: jnp.tile(b, W).reshape(1, -1)

    return dict(
        A1=dw_matrix(w1f).astype(bf16),                 # (7P, P)
        A2=dw_matrix(p["w_dw2"]).astype(bf16),          # (7P, P)
        wf=jnp.concatenate([block_diag(p["w_f1"]), block_diag(p["w_f2"])],
                           axis=1).astype(bf16),        # (P, 2*W*MC)
        wg=block_diag(wgf).astype(bf16),                # (W*MC, P)
        b1=tile_b(b1f),                                 # (1, P)
        bf=jnp.concatenate([jnp.tile(p["b_f1"], W),
                            jnp.tile(p["b_f2"], W)]).reshape(1, -1),
        bg=tile_b(bgf),                                 # (1, P)
        b2=tile_b(p["b_dw2"]),                          # (1, P)
        C=C, MC=MC,
    )


def _pick_batch_block(N, H, target_rows=256):
    """Images per grid step: fatten the matmul M = Nb*H dim toward target_rows
    (256 fills a v6e/v7x MXU, 128 a v5e MXU) while keeping >= 2 grid steps when
    the batch allows, so v7x's two TensorCores both get work."""
    nb = max(1, min(N, target_rows // max(1, H)))
    while nb > 1 and N // nb < 2:
        nb -= 1
    while N % nb:
        nb -= 1
    return nb


def block_forward(x, packed):
    """x: (N, H, W, C) float32 NHWC.  `packed` comes from pack_weights()."""
    N, H, W, C = x.shape
    assert C == packed["C"], "packed weights built for a different channel count"
    MC = packed["MC"]
    P = W * C
    HALF = W * MC
    Nb = _pick_batch_block(N, H)

    xp = x.reshape(N, H, P)            # lane-dense packing: pixel (w, c) -> lane w*C + c

    # Advisory cost estimate (useful flops only).
    flops = N * (2 * 2 * 49 * H * W * C          # two depthwise 7x7 convs
                 + 2 * H * W * C * 2 * MC        # fused f1|f2
                 + 2 * H * W * MC * C)           # g
    bytes_accessed = (2 * N * H * P * 4
                      + (packed["A1"].size + packed["A2"].size
                         + packed["wf"].size + packed["wg"].size) * 2
                      + (packed["b1"].size + packed["bf"].size
                         + packed["bg"].size + packed["b2"].size) * 4)

    def build(single_buffer_weights):
        def wspec(shape):
            idx = lambda b: (0,) * len(shape)
            if single_buffer_weights:
                # Grid-invariant blocks are fetched once; don't pay 2x VMEM for them.
                return pl.BlockSpec(shape, idx, pipeline_mode=pl.Buffered(1))
            return pl.BlockSpec(shape, idx)

        grid_spec = pltpu.PrefetchScalarGridSpec(
            num_scalar_prefetch=0,
            grid=(N // Nb,),
            in_specs=[
                pl.BlockSpec((Nb, H, P), lambda b: (b, 0, 0)),   # x (packed)
                wspec((7 * P, P)), wspec((1, P)),                # dwconv1 (BN folded)
                wspec((P, 2 * HALF)), wspec((1, 2 * HALF)),      # fused f1|f2
                wspec((HALF, P)), wspec((1, P)),                 # g (BN folded)
                wspec((7 * P, P)), wspec((1, P)),                # dwconv2
            ],
            out_specs=pl.BlockSpec((Nb, H, P), lambda b: (b, 0, 0)),
            scratch_shapes=[pltpu.VMEM((Nb, H + 2 * _R, P), jnp.bfloat16)],
        )
        return pl.pallas_call(
            block_kernel,
            out_shape=jax.ShapeDtypeStruct((N, H, P), jnp.float32),
            grid_spec=grid_spec,
            compiler_params=pltpu.CompilerParams(
                dimension_semantics=("parallel",)),
            cost_estimate=pl.CostEstimate(flops=int(flops), transcendentals=0,
                                          bytes_accessed=int(bytes_accessed)),
        )

    args = (xp, packed["A1"], packed["b1"], packed["wf"], packed["bf"],
            packed["wg"], packed["bg"], packed["A2"], packed["b2"])
    try:
        out = build(single_buffer_weights=True)(*args)
    except Exception:
        # pipeline_mode=pl.Buffered(1) not supported by this jax/libtpu build:
        # fall back to default (double-buffered) weight blocks.  Semantics identical.
        out = build(single_buffer_weights=False)(*args)

    return out.reshape(N, H, W, C)


# ----------------------- pure-JAX reference -----------------------
def _depthwise7x7_ref(x, w, b):
    k = w[:, :, None, :]  # HWIO, I = 1 (depthwise)
    y = jax.lax.conv_general_dilated(
        x, k, window_strides=(1, 1), padding=((3, 3), (3, 3)),
        dimension_numbers=("NHWC", "HWIO", "NHWC"),
        feature_group_count=x.shape[-1],
        precision=jax.lax.Precision.HIGHEST)
    return y + b


def ref_forward(x, p, eps=1e-5):
    y = _depthwise7x7_ref(x, p["w_dw1"], p["b_dw1"])
    y = (y - p["bn1_mean"]) * (p["bn1_gamma"] / jnp.sqrt(p["bn1_var"] + eps)) + p["bn1_beta"]
    a1 = jnp.einsum("nhwc,cd->nhwd", y, p["w_f1"], precision="highest") + p["b_f1"]
    a2 = jnp.einsum("nhwc,cd->nhwd", y, p["w_f2"], precision="highest") + p["b_f2"]
    z = jnp.clip(a1, 0.0, 6.0) * a2
    g = jnp.einsum("nhwd,dc->nhwc", z, p["w_g"], precision="highest") + p["b_g"]
    g = (g - p["bng_mean"]) * (p["bng_gamma"] / jnp.sqrt(p["bng_var"] + eps)) + p["bng_beta"]
    out = _depthwise7x7_ref(g, p["w_dw2"], p["b_dw2"])
    return x + out


if __name__ == "__main__":
    N, H, W, dim, mlp_ratio = 2, 16, 16, 8, 3
    MC = mlp_ratio * dim

    key = jax.random.PRNGKey(0)
    ks = jax.random.split(key, 20)
    f32 = jnp.float32
    p = {
        "w_dw1": 0.1 * jax.random.normal(ks[0], (7, 7, dim), f32),
        "b_dw1": 0.1 * jax.random.normal(ks[1], (dim,), f32),
        "bn1_gamma": 1.0 + 0.1 * jax.random.normal(ks[2], (dim,), f32),
        "bn1_beta": 0.1 * jax.random.normal(ks[3], (dim,), f32),
        "bn1_mean": 0.1 * jax.random.normal(ks[4], (dim,), f32),
        "bn1_var": jax.random.uniform(ks[5], (dim,), f32, 0.5, 1.5),
        "w_f1": 0.1 * jax.random.normal(ks[6], (dim, MC), f32),
        "b_f1": 0.1 * jax.random.normal(ks[7], (MC,), f32),
        "w_f2": 0.1 * jax.random.normal(ks[8], (dim, MC), f32),
        "b_f2": 0.1 * jax.random.normal(ks[9], (MC,), f32),
        "w_g": 0.1 * jax.random.normal(ks[10], (MC, dim), f32),
        "b_g": 0.1 * jax.random.normal(ks[11], (dim,), f32),
        "bng_gamma": 1.0 + 0.1 * jax.random.normal(ks[12], (dim,), f32),
        "bng_beta": 0.1 * jax.random.normal(ks[13], (dim,), f32),
        "bng_mean": 0.1 * jax.random.normal(ks[14], (dim,), f32),
        "bng_var": jax.random.uniform(ks[15], (dim,), f32, 0.5, 1.5),
        "w_dw2": 0.1 * jax.random.normal(ks[16], (7, 7, dim), f32),
        "b_dw2": 0.1 * jax.random.normal(ks[17], (dim,), f32),
    }
    x = jax.random.normal(ks[18], (N, H, W, dim), f32)

    packed = pack_weights(p, W)            # hoisted preprocessing: done once
    out = block_forward(x, packed)
    jax.block_until_ready(out)

    ref = ref_forward(x, p)
    assert out.shape == ref.shape == (N, H, W, dim)
    err = float(jnp.max(jnp.abs(out - ref)))
    # matmul operands are bf16 (f32 accumulate), hence the slightly looser tolerance
    assert bool(jnp.allclose(out, ref, atol=2e-2, rtol=2e-2)), f"max abs err {err}"

    print("KERNEL_OK")
</pallas_src>

<mosaic_0001>
module attributes {stable_mosaic.version = 11 : i64} {
  func.func @block_kernel(%arg0: i32, %arg1: memref<1x16x128xf32, #tpu.memory_space<vmem>>, %arg2: memref<896x128xbf16, #tpu.memory_space<vmem>>, %arg3: memref<1x128xf32, #tpu.memory_space<vmem>>, %arg4: memref<128x768xbf16, #tpu.memory_space<vmem>>, %arg5: memref<1x768xf32, #tpu.memory_space<vmem>>, %arg6: memref<384x128xbf16, #tpu.memory_space<vmem>>, %arg7: memref<1x128xf32, #tpu.memory_space<vmem>>, %arg8: memref<896x128xbf16, #tpu.memory_space<vmem>>, %arg9: memref<1x128xf32, #tpu.memory_space<vmem>>, %arg10: memref<1x16x128xf32, #tpu.memory_space<vmem>>, %arg11: memref<1x48x128xbf16, #tpu.memory_space<vmem>>) attributes {dimension_semantics = [#tpu.dimension_semantics<parallel>], iteration_bounds = array<i64: 2>, scalar_prefetch = 0 : i64, scratch_operands = 1 : i64, tpu.core_type = #tpu.core_type<tc>, window_params = [{transform_indices = @transform_0, window_bounds = array<i64: 1, 16, 128>}, {pipeline_mode = #tpu.pipeline_mode<synchronous>, transform_indices = @transform_1, window_bounds = array<i64: 896, 128>}, {pipeline_mode = #tpu.pipeline_mode<synchronous>, transform_indices = @transform_2, window_bounds = array<i64: 1, 128>}, {pipeline_mode = #tpu.pipeline_mode<synchronous>, transform_indices = @transform_3, window_bounds = array<i64: 128, 768>}, {pipeline_mode = #tpu.pipeline_mode<synchronous>, transform_indices = @transform_4, window_bounds = array<i64: 1, 768>}, {pipeline_mode = #tpu.pipeline_mode<synchronous>, transform_indices = @transform_5, window_bounds = array<i64: 384, 128>}, {pipeline_mode = #tpu.pipeline_mode<synchronous>, transform_indices = @transform_6, window_bounds = array<i64: 1, 128>}, {pipeline_mode = #tpu.pipeline_mode<synchronous>, transform_indices = @transform_7, window_bounds = array<i64: 896, 128>}, {pipeline_mode = #tpu.pipeline_mode<synchronous>, transform_indices = @transform_8, window_bounds = array<i64: 1, 128>}, {transform_indices = @transform_9, window_bounds = array<i64: 1, 16, 128>}]} {
    %cst = arith.constant 0.000000e+00 : bf16
    %0 = vector.broadcast %cst : bf16 to vector<1x4x128xbf16>
    %c0 = arith.constant 0 : index
    %c12 = arith.constant 12 : index
    %c0_0 = arith.constant 0 : index
    %1 = vector.load %arg11[%c0, %c12, %c0_0] : memref<1x48x128xbf16, #tpu.memory_space<vmem>>, vector<1x4x128xbf16>
    tpu.vector_store %arg11[%c0, %c12, %c0_0], %0 {strides = array<i32>} : memref<1x48x128xbf16, #tpu.memory_space<vmem>>, vector<1x4x128xbf16>,
    %cst_1 = arith.constant 0.000000e+00 : bf16
    %2 = vector.broadcast %cst_1 : bf16 to vector<1x4x128xbf16>
    %c0_2 = arith.constant 0 : index
    %c32 = arith.constant 32 : index
    %c0_3 = arith.constant 0 : index
    %3 = vector.load %arg11[%c0_2, %c32, %c0_3] : memref<1x48x128xbf16, #tpu.memory_space<vmem>>, vector<1x4x128xbf16>
    tpu.vector_store %arg11[%c0_2, %c32, %c0_3], %2 {strides = array<i32>} : memref<1x48x128xbf16, #tpu.memory_space<vmem>>, vector<1x4x128xbf16>,
    %c0_4 = arith.constant 0 : index
    %c0_5 = arith.constant 0 : index
    %c0_6 = arith.constant 0 : index
    %4 = vector.load %arg1[%c0_4, %c0_5, %c0_6] : memref<1x16x128xf32, #tpu.memory_space<vmem>>, vector<1x16x128xf32>
    %5 = vector.shape_cast %4 : vector<1x16x128xf32> to vector<16x128xf32>
    %6 = arith.truncf %4 : vector<1x16x128xf32> to vector<1x16x128xbf16>
    %c0_7 = arith.constant 0 : index
    %c16 = arith.constant 16 : index
    %c0_8 = arith.constant 0 : index
    %7 = vector.load %arg11[%c0_7, %c16, %c0_8] : memref<1x48x128xbf16, #tpu.memory_space<vmem>>, vector<1x16x128xbf16>
    tpu.vector_store %arg11[%c0_7, %c16, %c0_8], %6 {strides = array<i32>} : memref<1x48x128xbf16, #tpu.memory_space<vmem>>, vector<1x16x128xbf16>,
    %c0_9 = arith.constant 0 : index
    %c13 = arith.constant 13 : index
    %c0_10 = arith.constant 0 : index
    %8 = vector.load %arg11[%c0_9, %c13, %c0_10] : memref<1x48x128xbf16, #tpu.memory_space<vmem>>, vector<1x16x128xbf16>
    %c0_11 = arith.constant 0 : index
    %c14 = arith.constant 14 : index
    %c0_12 = arith.constant 0 : index
    %9 = vector.load %arg11[%c0_11, %c14, %c0_12] : memref<1x48x128xbf16, #tpu.memory_space<vmem>>, vector<1x16x128xbf16>
    %c0_13 = arith.constant 0 : index
    %c15 = arith.constant 15 : index
    %c0_14 = arith.constant 0 : index
    %10 = vector.load %arg11[%c0_13, %c15, %c0_14] : memref<1x48x128xbf16, #tpu.memory_space<vmem>>, vector<1x16x128xbf16>
    %c0_15 = arith.constant 0 : index
    %c16_16 = arith.constant 16 : index
    %c0_17 = arith.constant 0 : index
    %11 = vector.load %arg11[%c0_15, %c16_16, %c0_17] : memref<1x48x128xbf16, #tpu.memory_space<vmem>>, vector<1x16x128xbf16>
    %c0_18 = arith.constant 0 : index
    %c17 = arith.constant 17 : index
    %c0_19 = arith.constant 0 : index
    %12 = vector.load %arg11[%c0_18, %c17, %c0_19] : memref<1x48x128xbf16, #tpu.memory_space<vmem>>, vector<1x16x128xbf16>
    %c0_20 = arith.constant 0 : index
    %c18 = arith.constant 18 : index
    %c0_21 = arith.constant 0 : index
    %13 = vector.load %arg11[%c0_20, %c18, %c0_21] : memref<1x48x128xbf16, #tpu.memory_space<vmem>>, vector<1x16x128xbf16>
    %c0_22 = arith.constant 0 : index
    %c19 = arith.constant 19 : index
    %c0_23 = arith.constant 0 : index
    %14 = vector.load %arg11[%c0_22, %c19, %c0_23] : memref<1x48x128xbf16, #tpu.memory_space<vmem>>, vector<1x16x128xbf16>
    %15 = tpu.concatenate %8, %9, %10, %11, %12, %13, %14 in 2 : vector<1x16x128xbf16>, vector<1x16x128xbf16>, vector<1x16x128xbf16>, vector<1x16x128xbf16>, vector<1x16x128xbf16>, vector<1x16x128xbf16>, vector<1x16x128xbf16> -> vector<1x16x896xbf16>
    %16 = vector.shape_cast %15 : vector<1x16x896xbf16> to vector<16x896xbf16>
    %c0_24 = arith.constant 0 : index
    %c0_25 = arith.constant 0 : index
    %17 = vector.load %arg2[%c0_24, %c0_25] : memref<896x128xbf16, #tpu.memory_space<vmem>>, vector<896x128xbf16>
    %cst_26 = arith.constant dense<0.000000e+00> : vector<16x128xf32>
    %18 = tpu.matmul %16, %17, %cst_26 {dimension_numbers = #tpu.dot_dimension_numbers<[1], [0], [0], [1], [0, 0, 1, 1], [], []>} : vector<16x896xbf16>, vector<896x128xbf16>, vector<16x128xf32> -> vector<16x128xf32>
    %c0_27 = arith.constant 0 : index
    %c0_28 = arith.constant 0 : index
    %19 = vector.load %arg3[%c0_27, %c0_28] : memref<1x128xf32, #tpu.memory_space<vmem>>, vector<1x128xf32>
    %20 = vector.broadcast %19 : vector<1x128xf32> to vector<16x128xf32>
    %21 = arith.addf %18, %20 : vector<16x128xf32>
    %22 = arith.truncf %21 : vector<16x128xf32> to vector<16x128xbf16>
    %c0_29 = arith.constant 0 : index
    %c0_30 = arith.constant 0 : index
    %23 = vector.load %arg4[%c0_29, %c0_30] : memref<128x768xbf16, #tpu.memory_space<vmem>>, vector<128x768xbf16>
    %cst_31 = arith.constant dense<0.000000e+00> : vector<16x768xf32>
    %24 = tpu.matmul %22, %23, %cst_31 {dimension_numbers = #tpu.dot_dimension_numbers<[1], [0], [0], [1], [0, 0, 1, 1], [], []>} : vector<16x128xbf16>, vector<128x768xbf16>, vector<16x768xf32> -> vector<16x768xf32>
    %c0_32 = arith.constant 0 : index
    %c0_33 = arith.constant 0 : index
    %25 = vector.load %arg5[%c0_32, %c0_33] : memref<1x768xf32, #tpu.memory_space<vmem>>, vector<1x768xf32>
    %26 = vector.broadcast %25 : vector<1x768xf32> to vector<16x768xf32>
    %27 = arith.addf %24, %26 : vector<16x768xf32>
    %28 = vector.extract_strided_slice %27 {offsets = [0, 0], sizes = [16, 384], strides = [1, 1]} : vector<16x768xf32> to vector<16x384xf32>
    %cst_34 = arith.constant 0.000000e+00 : f32
    %cst_35 = arith.constant 6.000000e+00 : f32
    %29 = vector.broadcast %cst_34 : f32 to vector<16x384xf32>
    %30 = arith.maximumf %29, %28 : vector<16x384xf32>
    %31 = vector.broadcast %cst_35 : f32 to vector<16x384xf32>
    %32 = arith.minimumf %31, %30 : vector<16x384xf32>
    %33 = vector.extract_strided_slice %27 {offsets = [0, 384], sizes = [16, 384], strides = [1, 1]} : vector<16x768xf32> to vector<16x384xf32>
    %34 = arith.mulf %32, %33 : vector<16x384xf32>
    %35 = arith.truncf %34 : vector<16x384xf32> to vector<16x384xbf16>
    %c0_36 = arith.constant 0 : index
    %c0_37 = arith.constant 0 : index
    %36 = vector.load %arg6[%c0_36, %c0_37] : memref<384x128xbf16, #tpu.memory_space<vmem>>, vector<384x128xbf16>
    %cst_38 = arith.constant dense<0.000000e+00> : vector<16x128xf32>
    %37 = tpu.matmul %35, %36, %cst_38 {dimension_numbers = #tpu.dot_dimension_numbers<[1], [0], [0], [1], [0, 0, 1, 1], [], []>} : vector<16x384xbf16>, vector<384x128xbf16>, vector<16x128xf32> -> vector<16x128xf32>
    %c0_39 = arith.constant 0 : index
    %c0_40 = arith.constant 0 : index
    %38 = vector.load %arg7[%c0_39, %c0_40] : memref<1x128xf32, #tpu.memory_space<vmem>>, vector<1x128xf32>
    %39 = vector.broadcast %38 : vector<1x128xf32> to vector<16x128xf32>
    %40 = arith.addf %37, %39 : vector<16x128xf32>
    %41 = vector.shape_cast %40 : vector<16x128xf32> to vector<1x16x128xf32>
    %42 = arith.truncf %41 : vector<1x16x128xf32> to vector<1x16x128xbf16>
    %c0_41 = arith.constant 0 : index
    %c16_42 = arith.constant 16 : index
    %c0_43 = arith.constant 0 : index
    %43 = vector.load %arg11[%c0_41, %c16_42, %c0_43] : memref<1x48x128xbf16, #tpu.memory_space<vmem>>, vector<1x16x128xbf16>
    tpu.vector_store %arg11[%c0_41, %c16_42, %c0_43], %42 {strides = array<i32>} : memref<1x48x128xbf16, #tpu.memory_space<vmem>>, vector<1x16x128xbf16>,
    %c0_44 = arith.constant 0 : index
    %c13_45 = arith.constant 13 : index
    %c0_46 = arith.constant 0 : index
    %44 = vector.load %arg11[%c0_44, %c13_45, %c0_46] : memref<1x48x128xbf16, #tpu.memory_space<vmem>>, vector<1x16x128xbf16>
    %c0_47 = arith.constant 0 : index
    %c14_48 = arith.constant 14 : index
    %c0_49 = arith.constant 0 : index
    %45 = vector.load %arg11[%c0_47, %c14_48, %c0_49] : memref<1x48x128xbf16, #tpu.memory_space<vmem>>, vector<1x16x128xbf16>
    %c0_50 = arith.constant 0 : index
    %c15_51 = arith.constant 15 : index
    %c0_52 = arith.constant 0 : index
    %46 = vector.load %arg11[%c0_50, %c15_51, %c0_52] : memref<1x48x128xbf16, #tpu.memory_space<vmem>>, vector<1x16x128xbf16>
    %c0_53 = arith.constant 0 : index
    %c16_54 = arith.constant 16 : index
    %c0_55 = arith.constant 0 : index
    %47 = vector.load %arg11[%c0_53, %c16_54, %c0_55] : memref<1x48x128xbf16, #tpu.memory_space<vmem>>, vector<1x16x128xbf16>
    %c0_56 = arith.constant 0 : index
    %c17_57 = arith.constant 17 : index
    %c0_58 = arith.constant 0 : index
    %48 = vector.load %arg11[%c0_56, %c17_57, %c0_58] : memref<1x48x128xbf16, #tpu.memory_space<vmem>>, vector<1x16x128xbf16>
    %c0_59 = arith.constant 0 : index
    %c18_60 = arith.constant 18 : index
    %c0_61 = arith.constant 0 : index
    %49 = vector.load %arg11[%c0_59, %c18_60, %c0_61] : memref<1x48x128xbf16, #tpu.memory_space<vmem>>, vector<1x16x128xbf16>
    %c0_62 = arith.constant 0 : index
    %c19_63 = arith.constant 19 : index
    %c0_64 = arith.constant 0 : index
    %50 = vector.load %arg11[%c0_62, %c19_63, %c0_64] : memref<1x48x128xbf16, #tpu.memory_space<vmem>>, vector<1x16x128xbf16>
    %51 = tpu.concatenate %44, %45, %46, %47, %48, %49, %50 in 2 : vector<1x16x128xbf16>, vector<1x16x128xbf16>, vector<1x16x128xbf16>, vector<1x16x128xbf16>, vector<1x16x128xbf16>, vector<1x16x128xbf16>, vector<1x16x128xbf16> -> vector<1x16x896xbf16>
    %52 = vector.shape_cast %51 : vector<1x16x896xbf16> to vector<16x896xbf16>
    %c0_65 = arith.constant 0 : index
    %c0_66 = arith.constant 0 : index
    %53 = vector.load %arg8[%c0_65, %c0_66] : memref<896x128xbf16, #tpu.memory_space<vmem>>, vector<896x128xbf16>
    %cst_67 = arith.constant dense<0.000000e+00> : vector<16x128xf32>
    %54 = tpu.matmul %52, %53, %cst_67 {dimension_numbers = #tpu.dot_dimension_numbers<[1], [0], [0], [1], [0, 0, 1, 1], [], []>} : vector<16x896xbf16>, vector<896x128xbf16>, vector<16x128xf32> -> vector<16x128xf32>
    %55 = arith.addf %5, %54 : vector<16x128xf32>
    %c0_68 = arith.constant 0 : index
    %c0_69 = arith.constant 0 : index
    %56 = vector.load %arg9[%c0_68, %c0_69] : memref<1x128xf32, #tpu.memory_space<vmem>>, vector<1x128xf32>
    %57 = vector.broadcast %56 : vector<1x128xf32> to vector<16x128xf32>
    %58 = arith.addf %55, %57 : vector<16x128xf32>
    %59 = vector.shape_cast %58 : vector<16x128xf32> to vector<1x16x128xf32>
    %c0_70 = arith.constant 0 : index
    %c0_71 = arith.constant 0 : index
    %c0_72 = arith.constant 0 : index
    %60 = vector.load %arg10[%c0_70, %c0_71, %c0_72] : memref<1x16x128xf32, #tpu.memory_space<vmem>>, vector<1x16x128xf32>
    tpu.vector_store %arg10[%c0_70, %c0_71, %c0_72], %59 {strides = array<i32>} : memref<1x16x128xf32, #tpu.memory_space<vmem>>, vector<1x16x128xf32>,
    return
  }
  func.func @transform_0(%arg0: i32) -> (i32, i32, i32) {
    %c0_i32 = arith.constant 0 : i32
    %c0_i32_0 = arith.constant 0 : i32
    %c0_i32_1 = arith.constant 0 : i32
    return %arg0, %c0_i32, %c0_i32_0 : i32, i32, i32
  }
  func.func @transform_1(%arg0: i32) -> (i32, i32) {
    %c0_i32 = arith.constant 0 : i32
    %c0_i32_0 = arith.constant 0 : i32
    %c0_i32_1 = arith.constant 0 : i32
    return %c0_i32, %c0_i32_0 : i32, i32
  }
  func.func @transform_2(%arg0: i32) -> (i32, i32) {
    %c0_i32 = arith.constant 0 : i32
    %c0_i32_0 = arith.constant 0 : i32
    %c0_i32_1 = arith.constant 0 : i32
    return %c0_i32, %c0_i32_0 : i32, i32
  }
  func.func @transform_3(%arg0: i32) -> (i32, i32) {
    %c0_i32 = arith.constant 0 : i32
    %c0_i32_0 = arith.constant 0 : i32
    %c0_i32_1 = arith.constant 0 : i32
    return %c0_i32, %c0_i32_0 : i32, i32
  }
  func.func @transform_4(%arg0: i32) -> (i32, i32) {
    %c0_i32 = arith.constant 0 : i32
    %c0_i32_0 = arith.constant 0 : i32
    %c0_i32_1 = arith.constant 0 : i32
    return %c0_i32, %c0_i32_0 : i32, i32
  }
  func.func @transform_5(%arg0: i32) -> (i32, i32) {
    %c0_i32 = arith.constant 0 : i32
    %c0_i32_0 = arith.constant 0 : i32
    %c0_i32_1 = arith.constant 0 : i32
    return %c0_i32, %c0_i32_0 : i32, i32
  }
  func.func @transform_6(%arg0: i32) -> (i32, i32) {
    %c0_i32 = arith.constant 0 : i32
    %c0_i32_0 = arith.constant 0 : i32
    %c0_i32_1 = arith.constant 0 : i32
    return %c0_i32, %c0_i32_0 : i32, i32
  }
  func.func @transform_7(%arg0: i32) -> (i32, i32) {
    %c0_i32 = arith.constant 0 : i32
    %c0_i32_0 = arith.constant 0 : i32
    %c0_i32_1 = arith.constant 0 : i32
    return %c0_i32, %c0_i32_0 : i32, i32
  }
  func.func @transform_8(%arg0: i32) -> (i32, i32) {
    %c0_i32 = arith.constant 0 : i32
    %c0_i32_0 = arith.constant 0 : i32
    %c0_i32_1 = arith.constant 0 : i32
    return %c0_i32, %c0_i32_0 : i32, i32
  }
  func.func @transform_9(%arg0: i32) -> (i32, i32, i32) {
    %c0_i32 = arith.constant 0 : i32
    %c0_i32_0 = arith.constant 0 : i32
    %c0_i32_1 = arith.constant 0 : i32
    return %arg0, %c0_i32, %c0_i32_0 : i32, i32, i32
  }
}

module attributes {stable_mosaic.version = 11 : i64} {
  func.func @block_kernel(%arg0: i32, %arg1: memref<1x16x128xf32, #tpu.memory_space<vmem>>, %arg2: memref<896x128xbf16, #tpu.memory_space<vmem>>, %arg3: memref<1x128xf32, #tpu.memory_space<vmem>>, %arg4: memref<128x768xbf16, #tpu.memory_space<vmem>>, %arg5: memref<1x768xf32, #tpu.memory_space<vmem>>, %arg6: memref<384x128xbf16, #tpu.memory_space<vmem>>, %arg7: memref<1x128xf32, #tpu.memory_space<vmem>>, %arg8: memref<896x128xbf16, #tpu.memory_space<vmem>>, %arg9: memref<1x128xf32, #tpu.memory_space<vmem>>, %arg10: memref<1x16x128xf32, #tpu.memory_space<vmem>>, %arg11: memref<1x48x128xbf16, #tpu.memory_space<vmem>>) attributes {dimension_semantics = [#tpu.dimension_semantics<parallel>], iteration_bounds = array<i64: 2>, scalar_prefetch = 0 : i64, scratch_operands = 1 : i64, tpu.core_type = #tpu.core_type<tc>, window_params = [{transform_indices = @transform_0, window_bounds = array<i64: 1, 16, 128>}, {pipeline_mode = #tpu.pipeline_mode<synchronous>, transform_indices = @transform_1, window_bounds = array<i64: 896, 128>}, {pipeline_mode = #tpu.pipeline_mode<synchronous>, transform_indices = @transform_2, window_bounds = array<i64: 1, 128>}, {pipeline_mode = #tpu.pipeline_mode<synchronous>, transform_indices = @transform_3, window_bounds = array<i64: 128, 768>}, {pipeline_mode = #tpu.pipeline_mode<synchronous>, transform_indices = @transform_4, window_bounds = array<i64: 1, 768>}, {pipeline_mode = #tpu.pipeline_mode<synchronous>, transform_indices = @transform_5, window_bounds = array<i64: 384, 128>}, {pipeline_mode = #tpu.pipeline_mode<synchronous>, transform_indices = @transform_6, window_bounds = array<i64: 1, 128>}, {pipeline_mode = #tpu.pipeline_mode<synchronous>, transform_indices = @transform_7, window_bounds = array<i64: 896, 128>}, {pipeline_mode = #tpu.pipeline_mode<synchronous>, transform_indices = @transform_8, window_bounds = array<i64: 1, 128>}, {transform_indices = @transform_9, window_bounds = array<i64: 1, 16, 128>}]} {
    %cst = arith.constant 0.000000e+00 : bf16
    %0 = vector.broadcast %cst : bf16 to vector<1x4x128xbf16>
    %c0 = arith.constant 0 : index
    %c12 = arith.constant 12 : index
    %c0_0 = arith.constant 0 : index
    %1 = vector.load %arg11[%c0, %c12, %c0_0] : memref<1x48x128xbf16, #tpu.memory_space<vmem>>, vector<1x4x128xbf16>
    tpu.vector_store %arg11[%c0, %c12, %c0_0], %0 {strides = array<i32>} : memref<1x48x128xbf16, #tpu.memory_space<vmem>>, vector<1x4x128xbf16>,
    %cst_1 = arith.constant 0.000000e+00 : bf16
    %2 = vector.broadcast %cst_1 : bf16 to vector<1x4x128xbf16>
    %c0_2 = arith.constant 0 : index
    %c32 = arith.constant 32 : index
    %c0_3 = arith.constant 0 : index
    %3 = vector.load %arg11[%c0_2, %c32, %c0_3] : memref<1x48x128xbf16, #tpu.memory_space<vmem>>, vector<1x4x128xbf16>
    tpu.vector_store %arg11[%c0_2, %c32, %c0_3], %2 {strides = array<i32>} : memref<1x48x128xbf16, #tpu.memory_space<vmem>>, vector<1x4x128xbf16>,
    %c0_4 = arith.constant 0 : index
    %c0_5 = arith.constant 0 : index
    %c0_6 = arith.constant 0 : index
    %4 = vector.load %arg1[%c0_4, %c0_5, %c0_6] : memref<1x16x128xf32, #tpu.memory_space<vmem>>, vector<1x16x128xf32>
    %5 = vector.shape_cast %4 : vector<1x16x128xf32> to vector<16x128xf32>
    %6 = arith.truncf %4 : vector<1x16x128xf32> to vector<1x16x128xbf16>
    %c0_7 = arith.constant 0 : index
    %c16 = arith.constant 16 : index
    %c0_8 = arith.constant 0 : index
    %7 = vector.load %arg11[%c0_7, %c16, %c0_8] : memref<1x48x128xbf16, #tpu.memory_space<vmem>>, vector<1x16x128xbf16>
    tpu.vector_store %arg11[%c0_7, %c16, %c0_8], %6 {strides = array<i32>} : memref<1x48x128xbf16, #tpu.memory_space<vmem>>, vector<1x16x128xbf16>,
    %c0_9 = arith.constant 0 : index
    %c13 = arith.constant 13 : index
    %c0_10 = arith.constant 0 : index
    %8 = vector.load %arg11[%c0_9, %c13, %c0_10] : memref<1x48x128xbf16, #tpu.memory_space<vmem>>, vector<1x16x128xbf16>
    %c0_11 = arith.constant 0 : index
    %c14 = arith.constant 14 : index
    %c0_12 = arith.constant 0 : index
    %9 = vector.load %arg11[%c0_11, %c14, %c0_12] : memref<1x48x128xbf16, #tpu.memory_space<vmem>>, vector<1x16x128xbf16>
    %c0_13 = arith.constant 0 : index
    %c15 = arith.constant 15 : index
    %c0_14 = arith.constant 0 : index
    %10 = vector.load %arg11[%c0_13, %c15, %c0_14] : memref<1x48x128xbf16, #tpu.memory_space<vmem>>, vector<1x16x128xbf16>
    %c0_15 = arith.constant 0 : index
    %c16_16 = arith.constant 16 : index
    %c0_17 = arith.constant 0 : index
    %11 = vector.load %arg11[%c0_15, %c16_16, %c0_17] : memref<1x48x128xbf16, #tpu.memory_space<vmem>>, vector<1x16x128xbf16>
    %c0_18 = arith.constant 0 : index
    %c17 = arith.constant 17 : index
    %c0_19 = arith.constant 0 : index
    %12 = vector.load %arg11[%c0_18, %c17, %c0_19] : memref<1x48x128xbf16, #tpu.memory_space<vmem>>, vector<1x16x128xbf16>
    %c0_20 = arith.constant 0 : index
    %c18 = arith.constant 18 : index
    %c0_21 = arith.constant 0 : index
    %13 = vector.load %arg11[%c0_20, %c18, %c0_21] : memref<1x48x128xbf16, #tpu.memory_space<vmem>>, vector<1x16x128xbf16>
    %c0_22 = arith.constant 0 : index
    %c19 = arith.constant 19 : index
    %c0_23 = arith.constant 0 : index
    %14 = vector.load %arg11[%c0_22, %c19, %c0_23] : memref<1x48x128xbf16, #tpu.memory_space<vmem>>, vector<1x16x128xbf16>
    %15 = tpu.concatenate %8, %9, %10, %11, %12, %13, %14 in 2 : vector<1x16x128xbf16>, vector<1x16x128xbf16>, vector<1x16x128xbf16>, vector<1x16x128xbf16>, vector<1x16x128xbf16>, vector<1x16x128xbf16>, vector<1x16x128xbf16> -> vector<1x16x896xbf16>
    %16 = vector.shape_cast %15 : vector<1x16x896xbf16> to vector<16x896xbf16>
    %c0_24 = arith.constant 0 : index
    %c0_25 = arith.constant 0 : index
    %17 = vector.load %arg2[%c0_24, %c0_25] : memref<896x128xbf16, #tpu.memory_space<vmem>>, vector<896x128xbf16>
    %cst_26 = arith.constant dense<0.000000e+00> : vector<16x128xf32>
    %18 = tpu.matmul %16, %17, %cst_26 {dimension_numbers = #tpu.dot_dimension_numbers<[1], [0], [0], [1], [0, 0, 1, 1], [], []>} : vector<16x896xbf16>, vector<896x128xbf16>, vector<16x128xf32> -> vector<16x128xf32>
    %c0_27 = arith.constant 0 : index
    %c0_28 = arith.constant 0 : index
    %19 = vector.load %arg3[%c0_27, %c0_28] : memref<1x128xf32, #tpu.memory_space<vmem>>, vector<1x128xf32>
    %20 = vector.broadcast %19 : vector<1x128xf32> to vector<16x128xf32>
    %21 = arith.addf %18, %20 : vector<16x128xf32>
    %22 = arith.truncf %21 : vector<16x128xf32> to vector<16x128xbf16>
    %c0_29 = arith.constant 0 : index
    %c0_30 = arith.constant 0 : index
    %23 = vector.load %arg4[%c0_29, %c0_30] : memref<128x768xbf16, #tpu.memory_space<vmem>>, vector<128x768xbf16>
    %cst_31 = arith.constant dense<0.000000e+00> : vector<16x768xf32>
    %24 = tpu.matmul %22, %23, %cst_31 {dimension_numbers = #tpu.dot_dimension_numbers<[1], [0], [0], [1], [0, 0, 1, 1], [], []>} : vector<16x128xbf16>, vector<128x768xbf16>, vector<16x768xf32> -> vector<16x768xf32>
    %c0_32 = arith.constant 0 : index
    %c0_33 = arith.constant 0 : index
    %25 = vector.load %arg5[%c0_32, %c0_33] : memref<1x768xf32, #tpu.memory_space<vmem>>, vector<1x768xf32>
    %26 = vector.broadcast %25 : vector<1x768xf32> to vector<16x768xf32>
    %27 = arith.addf %24, %26 : vector<16x768xf32>
    %28 = vector.extract_strided_slice %27 {offsets = [0, 0], sizes = [16, 384], strides = [1, 1]} : vector<16x768xf32> to vector<16x384xf32>
    %cst_34 = arith.constant 0.000000e+00 : f32
    %cst_35 = arith.constant 6.000000e+00 : f32
    %29 = vector.broadcast %cst_34 : f32 to vector<16x384xf32>
    %30 = arith.maximumf %29, %28 : vector<16x384xf32>
    %31 = vector.broadcast %cst_35 : f32 to vector<16x384xf32>
    %32 = arith.minimumf %31, %30 : vector<16x384xf32>
    %33 = vector.extract_strided_slice %27 {offsets = [0, 384], sizes = [16, 384], strides = [1, 1]} : vector<16x768xf32> to vector<16x384xf32>
    %34 = arith.mulf %32, %33 : vector<16x384xf32>
    %35 = arith.truncf %34 : vector<16x384xf32> to vector<16x384xbf16>
    %c0_36 = arith.constant 0 : index
    %c0_37 = arith.constant 0 : index
    %36 = vector.load %arg6[%c0_36, %c0_37] : memref<384x128xbf16, #tpu.memory_space<vmem>>, vector<384x128xbf16>
    %cst_38 = arith.constant dense<0.000000e+00> : vector<16x128xf32>
    %37 = tpu.matmul %35, %36, %cst_38 {dimension_numbers = #tpu.dot_dimension_numbers<[1], [0], [0], [1], [0, 0, 1, 1], [], []>} : vector<16x384xbf16>, vector<384x128xbf16>, vector<16x128xf32> -> vector<16x128xf32>
    %c0_39 = arith.constant 0 : index
    %c0_40 = arith.constant 0 : index
    %38 = vector.load %arg7[%c0_39, %c0_40] : memref<1x128xf32, #tpu.memory_space<vmem>>, vector<1x128xf32>
    %39 = vector.broadcast %38 : vector<1x128xf32> to vector<16x128xf32>
    %40 = arith.addf %37, %39 : vector<16x128xf32>
    %41 = vector.shape_cast %40 : vector<16x128xf32> to vector<1x16x128xf32>
    %42 = arith.truncf %41 : vector<1x16x128xf32> to vector<1x16x128xbf16>
    %c0_41 = arith.constant 0 : index
    %c16_42 = arith.constant 16 : index
    %c0_43 = arith.constant 0 : index
    %43 = vector.load %arg11[%c0_41, %c16_42, %c0_43] : memref<1x48x128xbf16, #tpu.memory_space<vmem>>, vector<1x16x128xbf16>
    tpu.vector_store %arg11[%c0_41, %c16_42, %c0_43], %42 {strides = array<i32>} : memref<1x48x128xbf16, #tpu.memory_space<vmem>>, vector<1x16x128xbf16>,
    %c0_44 = arith.constant 0 : index
    %c13_45 = arith.constant 13 : index
    %c0_46 = arith.constant 0 : index
    %44 = vector.load %arg11[%c0_44, %c13_45, %c0_46] : memref<1x48x128xbf16, #tpu.memory_space<vmem>>, vector<1x16x128xbf16>
    %c0_47 = arith.constant 0 : index
    %c14_48 = arith.constant 14 : index
    %c0_49 = arith.constant 0 : index
    %45 = vector.load %arg11[%c0_47, %c14_48, %c0_49] : memref<1x48x128xbf16, #tpu.memory_space<vmem>>, vector<1x16x128xbf16>
    %c0_50 = arith.constant 0 : index
    %c15_51 = arith.constant 15 : index
    %c0_52 = arith.constant 0 : index
    %46 = vector.load %arg11[%c0_50, %c15_51, %c0_52] : memref<1x48x128xbf16, #tpu.memory_space<vmem>>, vector<1x16x128xbf16>
    %c0_53 = arith.constant 0 : index
    %c16_54 = arith.constant 16 : index
    %c0_55 = arith.constant 0 : index
    %47 = vector.load %arg11[%c0_53, %c16_54, %c0_55] : memref<1x48x128xbf16, #tpu.memory_space<vmem>>, vector<1x16x128xbf16>
    %c0_56 = arith.constant 0 : index
    %c17_57 = arith.constant 17 : index
    %c0_58 = arith.constant 0 : index
    %48 = vector.load %arg11[%c0_56, %c17_57, %c0_58] : memref<1x48x128xbf16, #tpu.memory_space<vmem>>, vector<1x16x128xbf16>
    %c0_59 = arith.constant 0 : index
    %c18_60 = arith.constant 18 : index
    %c0_61 = arith.constant 0 : index
    %49 = vector.load %arg11[%c0_59, %c18_60, %c0_61] : memref<1x48x128xbf16, #tpu.memory_space<vmem>>, vector<1x16x128xbf16>
    %c0_62 = arith.constant 0 : index
    %c19_63 = arith.constant 19 : index
    %c0_64 = arith.constant 0 : index
    %50 = vector.load %arg11[%c0_62, %c19_63, %c0_64] : memref<1x48x128xbf16, #tpu.memory_space<vmem>>, vector<1x16x128xbf16>
    %51 = tpu.concatenate %44, %45, %46, %47, %48, %49, %50 in 2 : vector<1x16x128xbf16>, vector<1x16x128xbf16>, vector<1x16x128xbf16>, vector<1x16x128xbf16>, vector<1x16x128xbf16>, vector<1x16x128xbf16>, vector<1x16x128xbf16> -> vector<1x16x896xbf16>
    %52 = vector.shape_cast %51 : vector<1x16x896xbf16> to vector<16x896xbf16>
    %c0_65 = arith.constant 0 : index
    %c0_66 = arith.constant 0 : index
    %53 = vector.load %arg8[%c0_65, %c0_66] : memref<896x128xbf16, #tpu.memory_space<vmem>>, vector<896x128xbf16>
    %cst_67 = arith.constant dense<0.000000e+00> : vector<16x128xf32>
    %54 = tpu.matmul %52, %53, %cst_67 {dimension_numbers = #tpu.dot_dimension_numbers<[1], [0], [0], [1], [0, 0, 1, 1], [], []>} : vector<16x896xbf16>, vector<896x128xbf16>, vector<16x128xf32> -> vector<16x128xf32>
    %55 = arith.addf %5, %54 : vector<16x128xf32>
    %c0_68 = arith.constant 0 : index
    %c0_69 = arith.constant 0 : index
    %56 = vector.load %arg9[%c0_68, %c0_69] : memref<1x128xf32, #tpu.memory_space<vmem>>, vector<1x128xf32>
    %57 = vector.broadcast %56 : vector<1x128xf32> to vector<16x128xf32>
    %58 = arith.addf %55, %57 : vector<16x128xf32>
    %59 = vector.shape_cast %58 : vector<16x128xf32> to vector<1x16x128xf32>
    %c0_70 = arith.constant 0 : index
    %c0_71 = arith.constant 0 : index
    %c0_72 = arith.constant 0 : index
    %60 = vector.load %arg10[%c0_70, %c0_71, %c0_72] : memref<1x16x128xf32, #tpu.memory_space<vmem>>, vector<1x16x128xf32>
    tpu.vector_store %arg10[%c0_70, %c0_71, %c0_72], %59 {strides = array<i32>} : memref<1x16x128xf32, #tpu.memory_space<vmem>>, vector<1x16x128xf32>,
    return
  }
  func.func @transform_0(%arg0: i32) -> (i32, i32, i32) {
    %c0_i32 = arith.constant 0 : i32
    %c0_i32_0 = arith.constant 0 : i32
    %c0_i32_1 = arith.constant 0 : i32
    return %arg0, %c0_i32, %c0_i32_0 : i32, i32, i32
  }
  func.func @transform_1(%arg0: i32) -> (i32, i32) {
    %c0_i32 = arith.constant 0 : i32
    %c0_i32_0 = arith.constant 0 : i32
    %c0_i32_1 = arith.constant 0 : i32
    return %c0_i32, %c0_i32_0 : i32, i32
  }
  func.func @transform_2(%arg0: i32) -> (i32, i32) {
    %c0_i32 = arith.constant 0 : i32
    %c0_i32_0 = arith.constant 0 : i32
    %c0_i32_1 = arith.constant 0 : i32
    return %c0_i32, %c0_i32_0 : i32, i32
  }
  func.func @transform_3(%arg0: i32) -> (i32, i32) {
    %c0_i32 = arith.constant 0 : i32
    %c0_i32_0 = arith.constant 0 : i32
    %c0_i32_1 = arith.constant 0 : i32
    return %c0_i32, %c0_i32_0 : i32, i32
  }
  func.func @transform_4(%arg0: i32) -> (i32, i32) {
    %c0_i32 = arith.constant 0 : i32
    %c0_i32_0 = arith.constant 0 : i32
    %c0_i32_1 = arith.constant 0 : i32
    return %c0_i32, %c0_i32_0 : i32, i32
  }
  func.func @transform_5(%arg0: i32) -> (i32, i32) {
    %c0_i32 = arith.constant 0 : i32
    %c0_i32_0 = arith.constant 0 : i32
    %c0_i32_1 = arith.constant 0 : i32
    return %c0_i32, %c0_i32_0 : i32, i32
  }
  func.func @transform_6(%arg0: i32) -> (i32, i32) {
    %c0_i32 = arith.constant 0 : i32
    %c0_i32_0 = arith.constant 0 : i32
    %c0_i32_1 = arith.constant 0 : i32
    return %c0_i32, %c0_i32_0 : i32, i32
  }
  func.func @transform_7(%arg0: i32) -> (i32, i32) {
    %c0_i32 = arith.constant 0 : i32
    %c0_i32_0 = arith.constant 0 : i32
    %c0_i32_1 = arith.constant 0 : i32
    return %c0_i32, %c0_i32_0 : i32, i32
  }
  func.func @transform_8(%arg0: i32) -> (i32, i32) {
    %c0_i32 = arith.constant 0 : i32
    %c0_i32_0 = arith.constant 0 : i32
    %c0_i32_1 = arith.constant 0 : i32
    return %c0_i32, %c0_i32_0 : i32, i32
  }
  func.func @transform_9(%arg0: i32) -> (i32, i32, i32) {
    %c0_i32 = arith.constant 0 : i32
    %c0_i32_0 = arith.constant 0 : i32
    %c0_i32_1 = arith.constant 0 : i32
    return %arg0, %c0_i32, %c0_i32_0 : i32, i32, i32
  }
}

</mosaic_0001>

<llo_original>
// kernel: tpu_custom_call.1
$region0: #{tpu_custom_call.1}
  #allocation0 [shape = 'u32[]', space=smem, size = 0x4, offset = 0x4, fixed_abs, tag = 'smem constant byte address 0x4 - core index']
  #allocation1 [shape = 'u32[144,128]{1,0:T(1,128)}', space=vmem, size = 0x12000, scoped, tag = 'internal scratch']
  #allocation2 [shape = 'bf16[1,48,128]{2,1,0:T(16,128)(2,1)}', space=vmem, size = 0x3000, scoped, tag = 'scratch operand']
  %s0 = inlined_call_operand.hbm [shape: f32[2,16,128], index: 0, kind: input, shape index: {}]
  %s1 = inlined_call_operand.hbm [shape: bf16[896,128], index: 1, kind: input, shape index: {}]
  %s2 = inlined_call_operand.vmem [shape: f32[1,128], index: 2, kind: input, shape index: {}]
  %s3 = inlined_call_operand.hbm [shape: bf16[128,768], index: 3, kind: input, shape index: {}]
  %s4 = inlined_call_operand.vmem [shape: f32[1,768], index: 4, kind: input, shape index: {}]
  %s5 = inlined_call_operand.hbm [shape: bf16[384,128], index: 5, kind: input, shape index: {}]
  %s6 = inlined_call_operand.vmem [shape: f32[1,128], index: 6, kind: input, shape index: {}]
  %s7 = inlined_call_operand.hbm [shape: bf16[896,128], index: 7, kind: input, shape index: {}]
  %s8 = inlined_call_operand.vmem [shape: f32[1,128], index: 8, kind: input, shape index: {}]
  %s9 = inlined_call_operand.hbm [shape: f32[2,16,128], index: 9, kind: output, shape index: {}]
  %s10 = sld [smem:[#allocation0]]
  $region89: #{tpu_custom_call.1} parent=0
    _
  %s12 = ssub.s32 1, %s10
  %s13 = scalar_select 0, %s12, %s10
  $region1: #{tpu_custom_call.1} parent=0
    #allocation3 [shape = 'u8[16384]{0}', space=vmem, size = 0x4000, scoped, tag = 'input window, operand 0']
    #allocation4 [shape = 's32[2]{0}', space=sflag, size = 0x8, scoped, tag = 'scoped memory for tpu_custom_call.1']
    #allocation5 [shape = 's32[2]{0}', space=sflag, size = 0x8, scoped, tag = 'scoped memory for tpu_custom_call.1']
    #allocation6 [shape = 'u8[229376]{0}', space=vmem, size = 0x38000, scoped, tag = 'input window, operand 1, single buffered']
    #allocation7 [shape = 's32[1]{0}', space=sflag, size = 0x4, scoped, tag = 'scoped memory for tpu_custom_call.1']
    #allocation8 [shape = 'u8[196608]{0}', space=vmem, size = 0x30000, scoped, tag = 'input window, operand 3, single buffered']
    #allocation9 [shape = 'u8[98304]{0}', space=vmem, size = 0x18000, scoped, tag = 'input window, operand 5, single buffered']
    #allocation10 [shape = 's32[1]{0}', space=sflag, size = 0x4, scoped, tag = 'scoped memory for tpu_custom_call.1']
    #allocation11 [shape = 'u8[229376]{0}', space=vmem, size = 0x38000, scoped, tag = 'input window, operand 7, single buffered']
    #allocation12 [shape = 'u8[16384]{0}', space=vmem, size = 0x4000, scoped, tag = 'output window, operand 0']
    %14 = vsyncpa [#allocation4], 0
    %s15 = scalar_lea.sflag [#allocation4], 1
    %16 = vsyncpa %s15, 0
    %17 = vsyncpa [#allocation7], 0
    %18 = vsyncpa [#allocation10], 0
    %19 = vsyncpa [#allocation5], 0
    %s20 = scalar_lea.sflag [#allocation5], 1
    %21 = vsyncpa %s20, 0
    loop: start=0, step=1, limit=4
    $region2: #{tpu_custom_call.1} parent=1 // loop_pre_header
      _
    $region3: #{tpu_custom_call.1} parent=1 // loop_header
      %s23 = sphi 0, %s27
      %p24 = scmp.ge.s32.totalorder %s23, 4
      %s33 = sphi 0, %s35
      %s36 = sphi 0, %s33
      %s37 = sphi 0, %s36
      %s53 = sphi 0, %s37
      %s57 = sphi 0, %s57
      %s59 = sphi 0, %s57
      %s60 = sphi 0, %s59
      %s74 = sphi 0, %s60
      %s78 = sphi 0, %s78
      %s80 = sphi 0, %s78
      %s81 = sphi 0, %s80
      %s95 = sphi 0, %s81
      %s99 = sphi 0, %s99
      %s101 = sphi 0, %s99
      %s102 = sphi 0, %s101
      %s116 = sphi 0, %s102
      %s120 = sphi 0, %s120
      %s122 = sphi 0, %s120
      %s123 = sphi 0, %s122
      %s137 = sphi 0, %s123
      %s141 = sphi 0, %s141
      %s143 = sphi 0, %s141
      %s144 = sphi 0, %s143
      %s158 = sphi 0, %s144
      %s162 = sphi 0, %s162
      %s164 = sphi 0, %s162
      %s165 = sphi 0, %s164
      %s179 = sphi 0, %s165
      %s183 = sphi 0, %s183
      %s185 = sphi 0, %s183
      %s186 = sphi 0, %s185
      %s200 = sphi 0, %s186
      %s204 = sphi 0, %s204
      %s206 = sphi 0, %s204
      %s207 = sphi 0, %s206
      %s221 = sphi 0, %s207
      %s227 = sphi 0, %s229
      %s230 = sphi 0, %s227
      %s231 = sphi 0, %s230
      %s247 = sphi 0, %s231
    $region4: #{tpu_custom_call.1} parent=1 // loop_header_branch
      %26 = sbr.rel (%p24) target = $region8
    $region5: #{tpu_custom_call.1} parent=1 // loop_body
      %s28 = ssub.s32 %s23, 1
      %s29 = ssub.s32 %s23, 2
      %s30 = sadd.s32 %s23, 1
      %s31 = ssub.s32 %s23, %s30
      %p32 = scmp.eq.s32.totalorder %s31, 0
      %s34 = sadd.s32 %s33, 1
      %s35 = scalar_select %p32, %s33, %s34
      %p38 = pneg %p32
      %p39 = scmp.eq.s32.totalorder %s23, 1
      %p40 = por %p38, %p39
      %p41 = scmp.ne.s32.totalorder %s33, %s36
      %p42 = scmp.eq.s32.totalorder %s23, 0
      %p43 = por %p41, %p42
      %p44 = scmp.ne.s32.totalorder %s33, %s36
      %p45 = scmp.eq.s32.totalorder %s28, 1
      %p46 = por %p44, %p45
      %p47 = scmp.ne.s32.totalorder %s36, %s37
      %p48 = scmp.eq.s32.totalorder %s28, 0
      %p49 = por %p47, %p48
      %p50 = scmp.ne.s32.totalorder %s36, %s37
      %p51 = scmp.eq.s32.totalorder %s29, 1
      %p52 = por %p50, %p51
      %p54 = scmp.ne.s32.totalorder %s37, %s53
      %p55 = scmp.eq.s32.totalorder %s29, 0
      %p56 = por %p54, %p55
      %s58 = sadd.s32 %s57, 1
      %p61 = scmp.eq.s32.totalorder %s23, 1
      %p62 = scmp.ne.s32.totalorder %s57, %s59
      %p63 = scmp.eq.s32.totalorder %s23, 0
      %p64 = por %p62, %p63
      %p65 = scmp.ne.s32.totalorder %s57, %s59
      %p66 = scmp.eq.s32.totalorder %s28, 1
      %p67 = por %p65, %p66
      %p68 = scmp.ne.s32.totalorder %s59, %s60
      %p69 = scmp.eq.s32.totalorder %s28, 0
      %p70 = por %p68, %p69
      %p71 = scmp.ne.s32.totalorder %s59, %s60
      %p72 = scmp.eq.s32.totalorder %s29, 1
      %p73 = por %p71, %p72
      %p75 = scmp.ne.s32.totalorder %s60, %s74
      %p76 = scmp.eq.s32.totalorder %s29, 0
      %p77 = por %p75, %p76
      %s79 = sadd.s32 %s78, 1
      %p82 = scmp.eq.s32.totalorder %s23, 1
      %p83 = scmp.ne.s32.totalorder %s78, %s80
      %p84 = scmp.eq.s32.totalorder %s23, 0
      %p85 = por %p83, %p84
      %p86 = scmp.ne.s32.totalorder %s78, %s80
      %p87 = scmp.eq.s32.totalorder %s28, 1
      %p88 = por %p86, %p87
      %p89 = scmp.ne.s32.totalorder %s80, %s81
      %p90 = scmp.eq.s32.totalorder %s28, 0
      %p91 = por %p89, %p90
      %p92 = scmp.ne.s32.totalorder %s80, %s81
      %p93 = scmp.eq.s32.totalorder %s29, 1
      %p94 = por %p92, %p93
      %p96 = scmp.ne.s32.totalorder %s81, %s95
      %p97 = scmp.eq.s32.totalorder %s29, 0
      %p98 = por %p96, %p97
      %s100 = sadd.s32 %s99, 1
      %p103 = scmp.eq.s32.totalorder %s23, 1
      %p104 = scmp.ne.s32.totalorder %s99, %s101
      %p105 = scmp.eq.s32.totalorder %s23, 0
      %p106 = por %p104, %p105
      %p107 = scmp.ne.s32.totalorder %s99, %s101
      %p108 = scmp.eq.s32.totalorder %s28, 1
      %p109 = por %p107, %p108
      %p110 = scmp.ne.s32.totalorder %s101, %s102
      %p111 = scmp.eq.s32.totalorder %s28, 0
      %p112 = por %p110, %p111
      %p113 = scmp.ne.s32.totalorder %s101, %s102
      %p114 = scmp.eq.s32.totalorder %s29, 1
      %p115 = por %p113, %p114
      %p117 = scmp.ne.s32.totalorder %s102, %s116
      %p118 = scmp.eq.s32.totalorder %s29, 0
      %p119 = por %p117, %p118
      %s121 = sadd.s32 %s120, 1
      %p124 = scmp.eq.s32.totalorder %s23, 1
      %p125 = scmp.ne.s32.totalorder %s120, %s122
      %p126 = scmp.eq.s32.totalorder %s23, 0
      %p127 = por %p125, %p126
      %p128 = scmp.ne.s32.totalorder %s120, %s122
      %p129 = scmp.eq.s32.totalorder %s28, 1
      %p130 = por %p128, %p129
      %p131 = scmp.ne.s32.totalorder %s122, %s123
      %p132 = scmp.eq.s32.totalorder %s28, 0
      %p133 = por %p131, %p132
      %p134 = scmp.ne.s32.totalorder %s122, %s123
      %p135 = scmp.eq.s32.totalorder %s29, 1
      %p136 = por %p134, %p135
      %p138 = scmp.ne.s32.totalorder %s123, %s137
      %p139 = scmp.eq.s32.totalorder %s29, 0
      %p140 = por %p138, %p139
      %s142 = sadd.s32 %s141, 1
      %p145 = scmp.eq.s32.totalorder %s23, 1
      %p146 = scmp.ne.s32.totalorder %s141, %s143
      %p147 = scmp.eq.s32.totalorder %s23, 0
      %p148 = por %p146, %p147
      %p149 = scmp.ne.s32.totalorder %s141, %s143
      %p150 = scmp.eq.s32.totalorder %s28, 1
      %p151 = por %p149, %p150
      %p152 = scmp.ne.s32.totalorder %s143, %s144
      %p153 = scmp.eq.s32.totalorder %s28, 0
      %p154 = por %p152, %p153
      %p155 = scmp.ne.s32.totalorder %s143, %s144
      %p156 = scmp.eq.s32.totalorder %s29, 1
      %p157 = por %p155, %p156
      %p159 = scmp.ne.s32.totalorder %s144, %s158
      %p160 = scmp.eq.s32.totalorder %s29, 0
      %p161 = por %p159, %p160
      %s163 = sadd.s32 %s162, 1
      %p166 = scmp.eq.s32.totalorder %s23, 1
      %p167 = scmp.ne.s32.totalorder %s162, %s164
      %p168 = scmp.eq.s32.totalorder %s23, 0
      %p169 = por %p167, %p168
      %p170 = scmp.ne.s32.totalorder %s162, %s164
      %p171 = scmp.eq.s32.totalorder %s28, 1
      %p172 = por %p170, %p171
      %p173 = scmp.ne.s32.totalorder %s164, %s165
      %p174 = scmp.eq.s32.totalorder %s28, 0
      %p175 = por %p173, %p174
      %p176 = scmp.ne.s32.totalorder %s164, %s165
      %p177 = scmp.eq.s32.totalorder %s29, 1
      %p178 = por %p176, %p177
      %p180 = scmp.ne.s32.totalorder %s165, %s179
      %p181 = scmp.eq.s32.totalorder %s29, 0
      %p182 = por %p180, %p181
      %s184 = sadd.s32 %s183, 1
      %p187 = scmp.eq.s32.totalorder %s23, 1
      %p188 = scmp.ne.s32.totalorder %s183, %s185
      %p189 = scmp.eq.s32.totalorder %s23, 0
      %p190 = por %p188, %p189
      %p191 = scmp.ne.s32.totalorder %s183, %s185
      %p192 = scmp.eq.s32.totalorder %s28, 1
      %p193 = por %p191, %p192
      %p194 = scmp.ne.s32.totalorder %s185, %s186
      %p195 = scmp.eq.s32.totalorder %s28, 0
      %p196 = por %p194, %p195
      %p197 = scmp.ne.s32.totalorder %s185, %s186
      %p198 = scmp.eq.s32.totalorder %s29, 1
      %p199 = por %p197, %p198
      %p201 = scmp.ne.s32.totalorder %s186, %s200
      %p202 = scmp.eq.s32.totalorder %s29, 0
      %p203 = por %p201, %p202
      %s205 = sadd.s32 %s204, 1
      %p208 = scmp.eq.s32.totalorder %s23, 1
      %p209 = scmp.ne.s32.totalorder %s204, %s206
      %p210 = scmp.eq.s32.totalorder %s23, 0
      %p211 = por %p209, %p210
      %p212 = scmp.ne.s32.totalorder %s204, %s206
      %p213 = scmp.eq.s32.totalorder %s28, 1
      %p214 = por %p212, %p213
      %p215 = scmp.ne.s32.totalorder %s206, %s207
      %p216 = scmp.eq.s32.totalorder %s28, 0
      %p217 = por %p215, %p216
      %p218 = scmp.ne.s32.totalorder %s206, %s207
      %p219 = scmp.eq.s32.totalorder %s29, 1
      %p220 = por %p218, %p219
      %p222 = scmp.ne.s32.totalorder %s207, %s221
      %p223 = scmp.eq.s32.totalorder %s29, 0
      %p224 = por %p222, %p223
      %s225 = ssub.s32 %s23, %s30
      %p226 = scmp.eq.s32.totalorder %s225, 0
      %s228 = sadd.s32 %s227, 1
      %s229 = scalar_select %p226, %s227, %s228
      %p232 = pneg %p226
      %p233 = scmp.eq.s32.totalorder %s23, 1
      %p234 = por %p232, %p233
      %p235 = scmp.ne.s32.totalorder %s227, %s230
      %p236 = scmp.eq.s32.totalorder %s23, 0
      %p237 = por %p235, %p236
      %p238 = scmp.ne.s32.totalorder %s227, %s230
      %p239 = scmp.eq.s32.totalorder %s28, 1
      %p240 = por %p238, %p239
      %p241 = scmp.ne.s32.totalorder %s230, %s231
      %p242 = scmp.eq.s32.totalorder %s28, 0
      %p243 = por %p241, %p242
      %p244 = scmp.ne.s32.totalorder %s230, %s231
      %p245 = scmp.eq.s32.totalorder %s29, 1
      %p246 = por %p244, %p245
      %p248 = scmp.ne.s32.totalorder %s231, %s247
      %p249 = scmp.eq.s32.totalorder %s29, 0
      %p250 = por %p248, %p249
      %p251 = scmp.le.s32.totalorder 1, %s23
      %p252 = scmp.lt.s32.totalorder %s23, 3
      %p253 = pnand %p251, %p252
      %p254 = pneg %p253
      // Predicated region
      $region9: #{tpu_custom_call.1} parent=5 // pred_check
        _
      $region10: #{tpu_custom_call.1} parent=5 // pred_check_branch
        %256 = sbr.rel (%p253) target = $region12
      $region11: #{tpu_custom_call.1} parent=5 // pred_region
        %s257 = ssub.s32 %s23, 1
        // Predicated region
        $region13: #{tpu_custom_call.1} parent=11 // pred_check
          %p258 = pneg %p70
        $region14: #{tpu_custom_call.1} parent=11 // pred_check_branch
          %260 = sbr.rel (%p258) target = $region16
        $region15: #{tpu_custom_call.1} parent=11 // pred_region
          %s262 = ssub.s32 7168, 7168
          %263 = vsyncadd [#allocation7], %s262
          %s264 = sshll.u32 [#allocation6], 4
          %s265 = int_to_ptr.vmem [resolvable:$true] %s264
          %270 = dma.hbm_to_vmem [thread:$0]  %s1, 7168, %s265, [#allocation7], 64, 64, 4
        $region16: #{tpu_custom_call.1} parent=11 // pred_fallthru
          _
        // Predicated region
        $region17: #{tpu_custom_call.1} parent=11 // pred_check
          %p271 = pneg %p91
        $region18: #{tpu_custom_call.1} parent=11 // pred_check_branch
          %273 = sbr.rel (%p271) target = $region20
        $region19: #{tpu_custom_call.1} parent=11 // pred_region
          _
        $region20: #{tpu_custom_call.1} parent=11 // pred_fallthru
          _
        // Predicated region
        $region21: #{tpu_custom_call.1} parent=11 // pred_check
          %p274 = pneg %p112
        $region22: #{tpu_custom_call.1} parent=11 // pred_check_branch
          %276 = sbr.rel (%p274) target = $region24
        $region23: #{tpu_custom_call.1} parent=11 // pred_region
          %s278 = ssub.s32 6144, 6144
          %279 = vsyncadd [#allocation7], %s278
          %s280 = sshll.u32 [#allocation8], 4
          %s281 = int_to_ptr.vmem [resolvable:$true] %s280
          %286 = dma.hbm_to_vmem [thread:$0]  %s3, 6144, %s281, [#allocation7], 384, 384, 24
        $region24: #{tpu_custom_call.1} parent=11 // pred_fallthru
          _
        // Predicated region
        $region25: #{tpu_custom_call.1} parent=11 // pred_check
          %p287 = pneg %p133
        $region26: #{tpu_custom_call.1} parent=11 // pred_check_branch
          %289 = sbr.rel (%p287) target = $region28
        $region27: #{tpu_custom_call.1} parent=11 // pred_region
          _
        $region28: #{tpu_custom_call.1} parent=11 // pred_fallthru
          _
        // Predicated region
        $region29: #{tpu_custom_call.1} parent=11 // pred_check
          %p290 = pneg %p154
        $region30: #{tpu_custom_call.1} parent=11 // pred_check_branch
          %292 = sbr.rel (%p290) target = $region32
        $region31: #{tpu_custom_call.1} parent=11 // pred_region
          %s294 = ssub.s32 3072, 3072
          %295 = vsyncadd [#allocation10], %s294
          %s296 = sshll.u32 [#allocation9], 4
          %s297 = int_to_ptr.vmem [resolvable:$true] %s296
          %302 = dma.hbm_to_vmem [thread:$0]  %s5, 3072, %s297, [#allocation10], 64, 64, 4
        $region32: #{tpu_custom_call.1} parent=11 // pred_fallthru
          _
        // Predicated region
        $region33: #{tpu_custom_call.1} parent=11 // pred_check
          %p303 = pneg %p175
        $region34: #{tpu_custom_call.1} parent=11 // pred_check_branch
          %305 = sbr.rel (%p303) target = $region36
        $region35: #{tpu_custom_call.1} parent=11 // pred_region
          _
        $region36: #{tpu_custom_call.1} parent=11 // pred_fallthru
          _
        // Predicated region
        $region37: #{tpu_custom_call.1} parent=11 // pred_check
          %p306 = pneg %p196
        $region38: #{tpu_custom_call.1} parent=11 // pred_check_branch
          %308 = sbr.rel (%p306) target = $region40
        $region39: #{tpu_custom_call.1} parent=11 // pred_region
          %s310 = ssub.s32 7168, 7168
          %311 = vsyncadd [#allocation10], %s310
          %s312 = sshll.u32 [#allocation11], 4
          %s313 = int_to_ptr.vmem [resolvable:$true] %s312
          %318 = dma.hbm_to_vmem [thread:$0]  %s7, 7168, %s313, [#allocation10], 64, 64, 4
        $region40: #{tpu_custom_call.1} parent=11 // pred_fallthru
          _
        // Predicated region
        $region41: #{tpu_custom_call.1} parent=11 // pred_check
          %p319 = pneg %p217
        $region42: #{tpu_custom_call.1} parent=11 // pred_check_branch
          %321 = sbr.rel (%p319) target = $region44
        $region43: #{tpu_custom_call.1} parent=11 // pred_region
          _
        $region44: #{tpu_custom_call.1} parent=11 // pred_fallthru
          _
      $region12: #{tpu_custom_call.1} parent=5 // pred_fallthru
        _
      %p322 = scmp.lt.s32.totalorder %s23, 2
      // Predicated region
      $region45: #{tpu_custom_call.1} parent=5 // pred_check
        %p323 = pneg %p322
      $region46: #{tpu_custom_call.1} parent=5 // pred_check_branch
        %325 = sbr.rel (%p323) target = $region48
      $region47: #{tpu_custom_call.1} parent=5 // pred_region
        // Predicated region
        $region49: #{tpu_custom_call.1} parent=47 // pred_check
          %p326 = pneg %p43
        $region50: #{tpu_custom_call.1} parent=47 // pred_check_branch
          %328 = sbr.rel (%p326) target = $region52
        $region51: #{tpu_custom_call.1} parent=47 // pred_region
          %s329 = sand.u32 %s33, 1
          %s330 = scalar_lea.sflag [#allocation4], %s329
          %s331 = sand.u32 %s33, 1
          %s332 = smul.addr %s331, 16
          %s333 = scalar_lea.vmem [#allocation3], %s332
          %s335 = ssub.s32 256, 256
          %336 = vsyncadd %s330, %s335
          %s337 = smul.addr %s23, 2
          %s338 = smul.addr %s337, 128
          %s339 = scalar_lea.hbm %s0, %s338
          %s340 = sshll.u32 %s333, 4
          %s341 = int_to_ptr.vmem [resolvable:$true] %s340
          %346 = dma.hbm_to_vmem [thread:$0]  %s339, 256, %s341, %s330, 128, 128, 8
        $region52: #{tpu_custom_call.1} parent=47 // pred_fallthru
          _
      $region48: #{tpu_custom_call.1} parent=5 // pred_fallthru
        _
      %p347 = scmp.le.s32.totalorder 1, %s23
      %p348 = scmp.lt.s32.totalorder %s23, 3
      %p349 = pnand %p347, %p348
      %p350 = pneg %p349
      // Predicated region
      $region53: #{tpu_custom_call.1} parent=5 // pred_check
        _
      $region54: #{tpu_custom_call.1} parent=5 // pred_check_branch
        %352 = sbr.rel (%p349) target = $region56
      $region55: #{tpu_custom_call.1} parent=5 // pred_region
        %s353 = ssub.s32 %s23, 1
        %s354 = sand.u32 %s36, 1
        %s355 = scalar_lea.sflag [#allocation4], %s354
        %s356 = sand.u32 %s36, 1
        %s357 = smul.addr %s356, 16
        %s358 = scalar_lea.vmem [#allocation3], %s357
        // Predicated region
        $region57: #{tpu_custom_call.1} parent=55 // pred_check
          %p359 = pneg %p49
        $region58: #{tpu_custom_call.1} parent=55 // pred_check_branch
          %361 = sbr.rel (%p359) target = $region60
        $region59: #{tpu_custom_call.1} parent=55 // pred_region
          %362 = dma.done %s355, 256
        $region60: #{tpu_custom_call.1} parent=55 // pred_fallthru
          _
        // Predicated region
        $region61: #{tpu_custom_call.1} parent=55 // pred_check
          %p363 = pneg %p70
        $region62: #{tpu_custom_call.1} parent=55 // pred_check_branch
          %365 = sbr.rel (%p363) target = $region64
        $region63: #{tpu_custom_call.1} parent=55 // pred_region
          %366 = dma.done [#allocation7], 7168
        $region64: #{tpu_custom_call.1} parent=55 // pred_fallthru
          _
        // Predicated region
        $region65: #{tpu_custom_call.1} parent=55 // pred_check
          %p367 = pneg %p112
        $region66: #{tpu_custom_call.1} parent=55 // pred_check_branch
          %369 = sbr.rel (%p367) target = $region68
        $region67: #{tpu_custom_call.1} parent=55 // pred_region
          %370 = dma.done [#allocation7], 6144
        $region68: #{tpu_custom_call.1} parent=55 // pred_fallthru
          _
        // Predicated region
        $region69: #{tpu_custom_call.1} parent=55 // pred_check
          %p371 = pneg %p154
        $region70: #{tpu_custom_call.1} parent=55 // pred_check_branch
          %373 = sbr.rel (%p371) target = $region72
        $region71: #{tpu_custom_call.1} parent=55 // pred_region
          %374 = dma.done [#allocation10], 3072
        $region72: #{tpu_custom_call.1} parent=55 // pred_fallthru
          _
        // Predicated region
        $region73: #{tpu_custom_call.1} parent=55 // pred_check
          %p375 = pneg %p196
        $region74: #{tpu_custom_call.1} parent=55 // pred_check_branch
          %377 = sbr.rel (%p375) target = $region76
        $region75: #{tpu_custom_call.1} parent=55 // pred_region
          %378 = dma.done [#allocation10], 7168
        $region76: #{tpu_custom_call.1} parent=55 // pred_fallthru
          _
        %s379 = sand.u32 %s36, 1
        %s380 = scalar_lea.sflag [#allocation4], %s379
        %s381 = sand.u32 %s36, 1
        %s382 = smul.addr %s381, 16
        %s383 = scalar_lea.vmem [#allocation3], %s382
        %p384 = pneg %p49
        %p385 = pneg %p46
        %p386 = pneg %p70
        %p387 = pneg %p67
        %p388 = pneg %p91
        %p389 = pneg %p88
        %p390 = pneg %p112
        %p391 = pneg %p109
        %p392 = pneg %p133
        %p393 = pneg %p130
        %p394 = pneg %p154
        %p395 = pneg %p151
        %p396 = pneg %p175
        %p397 = pneg %p172
        %p398 = pneg %p196
        %p399 = pneg %p193
        %p400 = pneg %p217
        %p401 = pneg %p214
        %p402 = pneg %p243
        %p403 = pneg %p240
        %s404 = sand.u32 %s230, 1
        %s405 = scalar_lea.sflag [#allocation5], %s404
        %s406 = sand.u32 %s230, 1
        %s407 = smul.addr %s406, 16
        %s408 = scalar_lea.vmem [#allocation12], %s407
        %410 = vst [vmem:[#allocation2] sm:$0xc0] 0
        %411 = vst [vmem:[#allocation2 + $0x10] sm:$0x3] 0
        %v412 = vld [vmem:[%s358] sm:$0xff]
        %v413 = vld [vmem:[%s358 + $0x8] sm:$0xff]
        %v414 = vpack.c.bf16 %v413, %v412
        %415 = vst [vmem:[#allocation2 + $0x8] sm:$0xff] %v414
        %v416 = vld [vmem:[#allocation2] sm:$0xc0]
        %v417 = vld [vmem:[#allocation2 + $0x8] sm:$0x7f]
        %v418 = vld [vmem:[#allocation2] sm:$0x80]
        %v419 = vld [vmem:[#allocation2 + $0x8] sm:$0xff]
        %v420 = vld [vmem:[#allocation2 + $0x8] sm:$0xff]
        %v421 = vld [vmem:[#allocation2 + $0x10] sm:$0x1]
        %v422 = vld [vmem:[#allocation2 + $0x8] sm:$0xfe]
        %v423 = vld [vmem:[#allocation2 + $0x10] sm:$0x3]
        %vm424 = vsmask.f32 7424
        %v426 = vshrl.u32 %v418, 16
        %v428 = vshll.u32 %v418, 16
        %v430 = vrot.slane %v428, 1
        %v431 = vor.u32 %v426, %v430
        %v433 = vshll.u32 %v417, 16
        %v435 = vrot.slane %v433, 1
        %v436 = vsel %vm424, %v431, %v435
        %v437 = vshrl.u32 %v417, 16
        %v439 = vor.u32 %v437, %v435
        %vm442 = vcmask 1046528
        %v443 = vrot.slane %v418, 1
        %v444 = vrot.slane %v419, 1
        %v445 = vsel %vm442, %v443, %v444
        %v447 = vshrl.u32 %v419, 16
        %v449 = vrot.slane %v447, 1
        %v450 = vshll.u32 %v419, 16
        %v452 = vrot.slane %v450, 2
        %v453 = vor.u32 %v449, %v452
        %vm456 = vcmask 1045504
        %v457 = vrot.slane %v420, 2
        %v458 = vrot.slane %v421, 2
        %v459 = vsel %vm456, %v457, %v458
        %vm460 = vsmask.f32 5376
        %v462 = vshrl.u32 %v422, 16
        %v464 = vrot.slane %v462, 2
        %v465 = vshll.u32 %v422, 16
        %v467 = vrot.slane %v465, 3
        %v468 = vor.u32 %v464, %v467
        %v470 = vshrl.u32 %v421, 16
        %v472 = vrot.slane %v470, 2
        %v473 = vshll.u32 %v421, 16
        %v475 = vrot.slane %v473, 3
        %v476 = vor.u32 %v472, %v475
        %v477 = vsel %vm460, %v468, %v476
        %vm480 = vcmask 1044480
        %v481 = vrot.slane %v422, 3
        %v482 = vrot.slane %v423, 3
        %v483 = vsel %vm480, %v481, %v482
        %v484 = vld [vmem:[#allocation6] sm:$0xf]
        %v485 = vld [vmem:[#allocation6 + $0x4] sm:$0xf]
        %v486 = vld [vmem:[#allocation6 + $0x8] sm:$0xf]
        %v487 = vld [vmem:[#allocation6 + $0xc] sm:$0xf]
        %v488 = vld [vmem:[#allocation6 + $0x10] sm:$0xf]
        %v489 = vld [vmem:[#allocation6 + $0x14] sm:$0xf]
        %v490 = vld [vmem:[#allocation6 + $0x18] sm:$0xf]
        %v491 = vld [vmem:[#allocation6 + $0x1c] sm:$0xf]
        %v492 = vld [vmem:[#allocation6 + $0x20] sm:$0xf]
        %v493 = vld [vmem:[#allocation6 + $0x24] sm:$0xf]
        %v494 = vld [vmem:[#allocation6 + $0x28] sm:$0xf]
        %v495 = vld [vmem:[#allocation6 + $0x2c] sm:$0xf]
        %v496 = vld [vmem:[#allocation6 + $0x30] sm:$0xf]
        %v497 = vld [vmem:[#allocation6 + $0x34] sm:$0xf]
        %v498 = vld [vmem:[#allocation6 + $0x38] sm:$0xf]
        %v499 = vld [vmem:[#allocation6 + $0x3c] sm:$0xf]
        %v500 = vld [vmem:[#allocation6 + $0x40] sm:$0xf]
        %v501 = vld [vmem:[#allocation6 + $0x44] sm:$0xf]
        %v502 = vld [vmem:[#allocation6 + $0x48] sm:$0xf]
        %v503 = vld [vmem:[#allocation6 + $0x4c] sm:$0xf]
        %v504 = vld [vmem:[#allocation6 + $0x50] sm:$0xf]
        %v505 = vld [vmem:[#allocation6 + $0x54] sm:$0xf]
        %v506 = vld [vmem:[#allocation6 + $0x58] sm:$0xf]
        %v507 = vld [vmem:[#allocation6 + $0x5c] sm:$0xf]
        %v508 = vld [vmem:[#allocation6 + $0x60] sm:$0xf]
        %v509 = vld [vmem:[#allocation6 + $0x64] sm:$0xf]
        %v510 = vld [vmem:[#allocation6 + $0x68] sm:$0xf]
        %v511 = vld [vmem:[#allocation6 + $0x6c] sm:$0xf]
        %v512 = vld [vmem:[#allocation6 + $0x70] sm:$0xf]
        %v513 = vld [vmem:[#allocation6 + $0x74] sm:$0xf]
        %v514 = vld [vmem:[#allocation6 + $0x78] sm:$0xf]
        %v515 = vld [vmem:[#allocation6 + $0x7c] sm:$0xf]
        %v516 = vld [vmem:[#allocation6 + $0x80] sm:$0xf]
        %v517 = vld [vmem:[#allocation6 + $0x84] sm:$0xf]
        %v518 = vld [vmem:[#allocation6 + $0x88] sm:$0xf]
        %v519 = vld [vmem:[#allocation6 + $0x8c] sm:$0xf]
        %v520 = vld [vmem:[#allocation6 + $0x90] sm:$0xf]
        %v521 = vld [vmem:[#allocation6 + $0x94] sm:$0xf]
        %v522 = vld [vmem:[#allocation6 + $0x98] sm:$0xf]
        %v523 = vld [vmem:[#allocation6 + $0x9c] sm:$0xf]
        %v524 = vld [vmem:[#allocation6 + $0xa0] sm:$0xf]
        %v525 = vld [vmem:[#allocation6 + $0xa4] sm:$0xf]
        %v526 = vld [vmem:[#allocation6 + $0xa8] sm:$0xf]
        %v527 = vld [vmem:[#allocation6 + $0xac] sm:$0xf]
        %v528 = vld [vmem:[#allocation6 + $0xb0] sm:$0xf]
        %v529 = vld [vmem:[#allocation6 + $0xb4] sm:$0xf]
        %v530 = vld [vmem:[#allocation6 + $0xb8] sm:$0xf]
        %v531 = vld [vmem:[#allocation6 + $0xbc] sm:$0xf]
        %v532 = vld [vmem:[#allocation6 + $0xc0] sm:$0xf]
        %v533 = vld [vmem:[#allocation6 + $0xc4] sm:$0xf]
        %v534 = vld [vmem:[#allocation6 + $0xc8] sm:$0xf]
        %v535 = vld [vmem:[#allocation6 + $0xcc] sm:$0xf]
        %v536 = vld [vmem:[#allocation6 + $0xd0] sm:$0xf]
        %v537 = vld [vmem:[#allocation6 + $0xd4] sm:$0xf]
        %v538 = vld [vmem:[#allocation6 + $0xd8] sm:$0xf]
        %v539 = vld [vmem:[#allocation6 + $0xdc] sm:$0xf]
        %v540 = vld [vmem:[#allocation6 + $0xe0] sm:$0xf]
        %v541 = vld [vmem:[#allocation6 + $0xe4] sm:$0xf]
        %v542 = vld [vmem:[#allocation6 + $0xe8] sm:$0xf]
        %v543 = vld [vmem:[#allocation6 + $0xec] sm:$0xf]
        %v544 = vld [vmem:[#allocation6 + $0xf0] sm:$0xf]
        %v545 = vld [vmem:[#allocation6 + $0xf4] sm:$0xf]
        %v546 = vld [vmem:[#allocation6 + $0xf8] sm:$0xf]
        %v547 = vld [vmem:[#allocation6 + $0xfc] sm:$0xf]
        %v548 = vld [vmem:[#allocation6 + $0x100] sm:$0xf]
        %v549 = vld [vmem:[#allocation6 + $0x104] sm:$0xf]
        %v550 = vld [vmem:[#allocation6 + $0x108] sm:$0xf]
        %v551 = vld [vmem:[#allocation6 + $0x10c] sm:$0xf]
        %v552 = vld [vmem:[#allocation6 + $0x110] sm:$0xf]
        %v553 = vld [vmem:[#allocation6 + $0x114] sm:$0xf]
        %v554 = vld [vmem:[#allocation6 + $0x118] sm:$0xf]
        %v555 = vld [vmem:[#allocation6 + $0x11c] sm:$0xf]
        %v556 = vld [vmem:[#allocation6 + $0x120] sm:$0xf]
        %v557 = vld [vmem:[#allocation6 + $0x124] sm:$0xf]
        %v558 = vld [vmem:[#allocation6 + $0x128] sm:$0xf]
        %v559 = vld [vmem:[#allocation6 + $0x12c] sm:$0xf]
        %v560 = vld [vmem:[#allocation6 + $0x130] sm:$0xf]
        %v561 = vld [vmem:[#allocation6 + $0x134] sm:$0xf]
        %v562 = vld [vmem:[#allocation6 + $0x138] sm:$0xf]
        %v563 = vld [vmem:[#allocation6 + $0x13c] sm:$0xf]
        %v564 = vld [vmem:[#allocation6 + $0x140] sm:$0xf]
        %v565 = vld [vmem:[#allocation6 + $0x144] sm:$0xf]
        %v566 = vld [vmem:[#allocation6 + $0x148] sm:$0xf]
        %v567 = vld [vmem:[#allocation6 + $0x14c] sm:$0xf]
        %v568 = vld [vmem:[#allocation6 + $0x150] sm:$0xf]
        %v569 = vld [vmem:[#allocation6 + $0x154] sm:$0xf]
        %v570 = vld [vmem:[#allocation6 + $0x158] sm:$0xf]
        %v571 = vld [vmem:[#allocation6 + $0x15c] sm:$0xf]
        %v572 = vld [vmem:[#allocation6 + $0x160] sm:$0xf]
        %v573 = vld [vmem:[#allocation6 + $0x164] sm:$0xf]
        %v574 = vld [vmem:[#allocation6 + $0x168] sm:$0xf]
        %v575 = vld [vmem:[#allocation6 + $0x16c] sm:$0xf]
        %v576 = vld [vmem:[#allocation6 + $0x170] sm:$0xf]
        %v577 = vld [vmem:[#allocation6 + $0x174] sm:$0xf]
        %v578 = vld [vmem:[#allocation6 + $0x178] sm:$0xf]
        %v579 = vld [vmem:[#allocation6 + $0x17c] sm:$0xf]
        %v580 = vld [vmem:[#allocation6 + $0x180] sm:$0xf]
        %v581 = vld [vmem:[#allocation6 + $0x184] sm:$0xf]
        %v582 = vld [vmem:[#allocation6 + $0x188] sm:$0xf]
        %v583 = vld [vmem:[#allocation6 + $0x18c] sm:$0xf]
        %v584 = vld [vmem:[#allocation6 + $0x190] sm:$0xf]
        %v585 = vld [vmem:[#allocation6 + $0x194] sm:$0xf]
        %v586 = vld [vmem:[#allocation6 + $0x198] sm:$0xf]
        %v587 = vld [vmem:[#allocation6 + $0x19c] sm:$0xf]
        %v588 = vld [vmem:[#allocation6 + $0x1a0] sm:$0xf]
        %v589 = vld [vmem:[#allocation6 + $0x1a4] sm:$0xf]
        %v590 = vld [vmem:[#allocation6 + $0x1a8] sm:$0xf]
        %v591 = vld [vmem:[#allocation6 + $0x1ac] sm:$0xf]
        %v592 = vld [vmem:[#allocation6 + $0x1b0] sm:$0xf]
        %v593 = vld [vmem:[#allocation6 + $0x1b4] sm:$0xf]
        %v594 = vld [vmem:[#allocation6 + $0x1b8] sm:$0xf]
        %v595 = vld [vmem:[#allocation6 + $0x1bc] sm:$0xf]
        %v596 = vld [vmem:[%s2] sm:$0x1]
        %v598 = vlaneseq
        %v599 = vshrl.u32 %v598, 7
        %v600 = vsub.s32 0, %v599
        %v601 = vrot.slane %v596, %v600
        %vm603 = vsmask.f32 1280
        %v605 = vshrl.u32 %v416, 16
        %v607 = vrot.slane %v605, 6
        %v608 = vshll.u32 %v416, 16
        %v610 = vrot.slane %v608, 7
        %v611 = vor.u32 %v607, %v610
        %v612 = vrot.slane %v437, 6
        %v613 = vrot.slane %v433, 7
        %v614 = vor.u32 %v612, %v613
        %v615 = vsel %vm603, %v611, %v614
        %v617 = vshrl.u32 %v436, 16
        %v619 = vrot.slane %v617, 6
        %v620 = vshll.u32 %v436, 16
        %v622 = vrot.slane %v620, 7
        %v623 = vor.u32 %v619, %v622
        %v625 = vshrl.u32 %v439, 16
        %v627 = vrot.slane %v625, 6
        %v628 = vshll.u32 %v439, 16
        %v630 = vrot.slane %v628, 7
        %v631 = vor.u32 %v627, %v630
        %v632 = vsel %vm603, %v623, %v631
        %v634 = vshrl.u32 %v445, 16
        %v636 = vrot.slane %v634, 6
        %v637 = vshll.u32 %v445, 16
        %v639 = vrot.slane %v637, 7
        %v640 = vor.u32 %v636, %v639
        %v642 = vshrl.u32 %v444, 16
        %v644 = vrot.slane %v642, 6
        %v645 = vshll.u32 %v444, 16
        %v647 = vrot.slane %v645, 7
        %v648 = vor.u32 %v644, %v647
        %v649 = vsel %vm603, %v640, %v648
        %v651 = vshrl.u32 %v453, 16
        %v653 = vrot.slane %v651, 6
        %v654 = vshll.u32 %v453, 16
        %v656 = vrot.slane %v654, 7
        %v657 = vor.u32 %v653, %v656
        %v658 = vsel %vm603, %v657, %v657
        %v660 = vshrl.u32 %v457, 16
        %v662 = vrot.slane %v660, 6
        %v663 = vshll.u32 %v457, 16
        %v665 = vrot.slane %v663, 7
        %v666 = vor.u32 %v662, %v665
        %v668 = vshrl.u32 %v459, 16
        %v670 = vrot.slane %v668, 6
        %v671 = vshll.u32 %v459, 16
        %v673 = vrot.slane %v671, 7
        %v674 = vor.u32 %v670, %v673
        %v675 = vsel %vm603, %v666, %v674
        %v677 = vshrl.u32 %v468, 16
        %v679 = vrot.slane %v677, 6
        %v680 = vshll.u32 %v468, 16
        %v682 = vrot.slane %v680, 7
        %v683 = vor.u32 %v679, %v682
        %v685 = vshrl.u32 %v477, 16
        %v687 = vrot.slane %v685, 6
        %v688 = vshll.u32 %v477, 16
        %v690 = vrot.slane %v688, 7
        %v691 = vor.u32 %v687, %v690
        %v692 = vsel %vm603, %v683, %v691
        %v694 = vshrl.u32 %v481, 16
        %v696 = vrot.slane %v694, 6
        %v697 = vshll.u32 %v481, 16
        %v699 = vrot.slane %v697, 7
        %v700 = vor.u32 %v696, %v699
        %v702 = vshrl.u32 %v483, 16
        %v704 = vrot.slane %v702, 6
        %v705 = vshll.u32 %v483, 16
        %v707 = vrot.slane %v705, 7
        %v708 = vor.u32 %v704, %v707
        %v709 = vsel %vm603, %v700, %v708
        %v829 = vunpack.c.l.b16 %v484
        %v830 = vunpack.c.l.b16 %v485
        %v831 = vunpack.c.l.b16 %v486
        %v832 = vunpack.c.l.b16 %v487
        %v833 = vunpack.c.l.b16 %v488
        %v834 = vunpack.c.l.b16 %v489
        %v835 = vunpack.c.l.b16 %v490
        %v836 = vunpack.c.l.b16 %v491
        %v837 = vunpack.c.l.b16 %v492
        %v838 = vunpack.c.l.b16 %v493
        %v839 = vunpack.c.l.b16 %v494
        %v840 = vunpack.c.l.b16 %v495
        %v841 = vunpack.c.l.b16 %v496
        %v842 = vunpack.c.l.b16 %v497
        %v843 = vunpack.c.l.b16 %v498
        %v844 = vunpack.c.l.b16 %v499
        %v845 = vunpack.c.l.b16 %v500
        %v846 = vunpack.c.l.b16 %v501
        %v847 = vunpack.c.l.b16 %v502
        %v848 = vunpack.c.l.b16 %v503
        %v849 = vunpack.c.l.b16 %v504
        %v850 = vunpack.c.l.b16 %v505
        %v851 = vunpack.c.l.b16 %v506
        %v852 = vunpack.c.l.b16 %v507
        %v853 = vunpack.c.l.b16 %v508
        %v854 = vunpack.c.l.b16 %v509
        %v855 = vunpack.c.l.b16 %v510
        %v856 = vunpack.c.l.b16 %v511
        %v857 = vunpack.c.l.b16 %v512
        %v858 = vunpack.c.l.b16 %v513
        %v859 = vunpack.c.l.b16 %v514
        %v860 = vunpack.c.l.b16 %v515
        %v861 = vunpack.c.l.b16 %v516
        %v862 = vunpack.c.l.b16 %v517
        %v863 = vunpack.c.l.b16 %v518
        %v864 = vunpack.c.l.b16 %v519
        %v865 = vunpack.c.l.b16 %v520
        %v866 = vunpack.c.l.b16 %v521
        %v867 = vunpack.c.l.b16 %v522
        %v868 = vunpack.c.l.b16 %v523
        %v869 = vunpack.c.l.b16 %v524
        %v870 = vunpack.c.l.b16 %v525
        %v871 = vunpack.c.l.b16 %v526
        %v872 = vunpack.c.l.b16 %v527
        %v873 = vunpack.c.l.b16 %v528
        %v874 = vunpack.c.l.b16 %v529
        %v875 = vunpack.c.l.b16 %v530
        %v876 = vunpack.c.l.b16 %v531
        %v877 = vunpack.c.l.b16 %v532
        %v878 = vunpack.c.l.b16 %v533
        %v879 = vunpack.c.l.b16 %v534
        %v880 = vunpack.c.l.b16 %v535
        %v881 = vunpack.c.l.b16 %v536
        %v882 = vunpack.c.l.b16 %v537
        %v883 = vunpack.c.l.b16 %v538
        %v884 = vunpack.c.l.b16 %v539
        %v885 = vunpack.c.l.b16 %v540
        %v886 = vunpack.c.l.b16 %v541
        %v887 = vunpack.c.l.b16 %v542
        %v888 = vunpack.c.l.b16 %v543
        %v889 = vunpack.c.l.b16 %v544
        %v890 = vunpack.c.l.b16 %v545
        %v891 = vunpack.c.l.b16 %v546
        %v892 = vunpack.c.l.b16 %v547
        %v893 = vunpack.c.l.b16 %v548
        %v894 = vunpack.c.l.b16 %v549
        %v895 = vunpack.c.l.b16 %v550
        %v896 = vunpack.c.l.b16 %v551
        %v897 = vunpack.c.l.b16 %v552
        %v898 = vunpack.c.l.b16 %v553
        %v899 = vunpack.c.l.b16 %v554
        %v900 = vunpack.c.l.b16 %v555
        %v901 = vunpack.c.l.b16 %v556
        %v902 = vunpack.c.l.b16 %v557
        %v903 = vunpack.c.l.b16 %v558
        %v904 = vunpack.c.l.b16 %v559
        %v905 = vunpack.c.l.b16 %v560
        %v906 = vunpack.c.l.b16 %v561
        %v907 = vunpack.c.l.b16 %v562
        %v908 = vunpack.c.l.b16 %v563
        %v909 = vunpack.c.l.b16 %v564
        %v910 = vunpack.c.l.b16 %v565
        %v911 = vunpack.c.l.b16 %v566
        %v912 = vunpack.c.l.b16 %v567
        %v913 = vunpack.c.l.b16 %v568
        %v914 = vunpack.c.l.b16 %v569
        %v915 = vunpack.c.l.b16 %v570
        %v916 = vunpack.c.l.b16 %v571
        %v917 = vunpack.c.l.b16 %v572
        %v918 = vunpack.c.l.b16 %v573
        %v919 = vunpack.c.l.b16 %v574
        %v920 = vunpack.c.l.b16 %v575
        %v921 = vunpack.c.l.b16 %v576
        %v922 = vunpack.c.l.b16 %v577
        %v923 = vunpack.c.l.b16 %v578
        %v924 = vunpack.c.l.b16 %v579
        %v925 = vunpack.c.l.b16 %v580
        %v926 = vunpack.c.l.b16 %v581
        %v927 = vunpack.c.l.b16 %v582
        %v928 = vunpack.c.l.b16 %v583
        %v929 = vunpack.c.l.b16 %v584
        %v930 = vunpack.c.l.b16 %v585
        %v931 = vunpack.c.l.b16 %v586
        %v932 = vunpack.c.l.b16 %v587
        %v933 = vunpack.c.l.b16 %v588
        %v934 = vunpack.c.l.b16 %v589
        %v935 = vunpack.c.l.b16 %v590
        %v936 = vunpack.c.l.b16 %v591
        %v937 = vunpack.c.l.b16 %v592
        %v938 = vunpack.c.l.b16 %v593
        %v939 = vunpack.c.l.b16 %v594
        %v940 = vunpack.c.l.b16 %v595
        %v941 = vpack.c.b16 %v830, %v829
        %v942 = vpack.c.b16 %v832, %v831
        %v943 = vpack.c.b16 %v834, %v833
        %v944 = vpack.c.b16 %v836, %v835
        %v945 = vpack.c.b16 %v838, %v837
        %v946 = vpack.c.b16 %v840, %v839
        %v947 = vpack.c.b16 %v842, %v841
        %v948 = vpack.c.b16 %v844, %v843
        %v949 = vpack.c.b16 %v846, %v845
        %v950 = vpack.c.b16 %v848, %v847
        %v951 = vpack.c.b16 %v850, %v849
        %v952 = vpack.c.b16 %v852, %v851
        %v953 = vpack.c.b16 %v854, %v853
        %v954 = vpack.c.b16 %v856, %v855
        %v955 = vpack.c.b16 %v858, %v857
        %v956 = vpack.c.b16 %v860, %v859
        %v957 = vpack.c.b16 %v862, %v861
        %v958 = vpack.c.b16 %v864, %v863
        %v959 = vpack.c.b16 %v866, %v865
        %v960 = vpack.c.b16 %v868, %v867
        %v961 = vpack.c.b16 %v870, %v869
        %v962 = vpack.c.b16 %v872, %v871
        %v963 = vpack.c.b16 %v874, %v873
        %v964 = vpack.c.b16 %v876, %v875
        %v965 = vpack.c.b16 %v878, %v877
        %v966 = vpack.c.b16 %v880, %v879
        %v967 = vpack.c.b16 %v882, %v881
        %v968 = vpack.c.b16 %v884, %v883
        %v969 = vpack.c.b16 %v886, %v885
        %v970 = vpack.c.b16 %v888, %v887
        %v971 = vpack.c.b16 %v890, %v889
        %v972 = vpack.c.b16 %v892, %v891
        %v973 = vpack.c.b16 %v894, %v893
        %v974 = vpack.c.b16 %v896, %v895
        %v975 = vpack.c.b16 %v898, %v897
        %v976 = vpack.c.b16 %v900, %v899
        %v977 = vpack.c.b16 %v902, %v901
        %v978 = vpack.c.b16 %v904, %v903
        %v979 = vpack.c.b16 %v906, %v905
        %v980 = vpack.c.b16 %v908, %v907
        %v981 = vpack.c.b16 %v910, %v909
        %v982 = vpack.c.b16 %v912, %v911
        %v983 = vpack.c.b16 %v914, %v913
        %v984 = vpack.c.b16 %v916, %v915
        %v985 = vpack.c.b16 %v918, %v917
        %v986 = vpack.c.b16 %v920, %v919
        %v987 = vpack.c.b16 %v922, %v921
        %v988 = vpack.c.b16 %v924, %v923
        %v989 = vpack.c.b16 %v926, %v925
        %v990 = vpack.c.b16 %v928, %v927
        %v991 = vpack.c.b16 %v930, %v929
        %v992 = vpack.c.b16 %v932, %v931
        %v993 = vpack.c.b16 %v934, %v933
        %v994 = vpack.c.b16 %v936, %v935
        %v995 = vpack.c.b16 %v938, %v937
        %v996 = vpack.c.b16 %v940, %v939
        %1053 = vmatprep.subr.bf16.mxu0 0
        %1054 = vmatpush1.bf16.msra.mxu0 %v941
        %1055 = vmatprep.subr.bf16.mxu0 0
        %1056 = vmatpush1.bf16.msra.mxu0 %v942
        %1057 = vmatprep.subr.bf16.mxu0 0
        %1058 = vmatpush1.bf16.msra.mxu0 %v943
        %1059 = vmatprep.subr.bf16.mxu0 0
        %1060 = vmatpush1.bf16.msra.mxu0 %v944
        %1061 = vmatprep.subr.bf16.mxu0 0
        %1062 = vmatpush1.bf16.msra.mxu0 %v945
        %1063 = vmatprep.subr.bf16.mxu0 0
        %1064 = vmatpush1.bf16.msra.mxu0 %v946
        %1065 = vmatprep.subr.bf16.mxu0 0
        %1066 = vmatpush1.bf16.msra.mxu0 %v947
        %1067 = vmatprep.subr.bf16.mxu0 0
        %1068 = vmatpush1.bf16.msra.mxu0 %v948
        %1069 = vmatprep.subr.bf16.mxu0 0
        %1070 = vmatpush1.bf16.msra.mxu0 %v949
        %1071 = vmatprep.subr.bf16.mxu0 0
        %1072 = vmatpush1.bf16.msra.mxu0 %v950
        %1073 = vmatprep.subr.bf16.mxu0 0
        %1074 = vmatpush1.bf16.msra.mxu0 %v951
        %1075 = vmatprep.subr.bf16.mxu0 0
        %1076 = vmatpush1.bf16.msra.mxu0 %v952
        %1077 = vmatprep.subr.bf16.mxu0 0
        %1078 = vmatpush1.bf16.msra.mxu0 %v953
        %1079 = vmatprep.subr.bf16.mxu0 0
        %1080 = vmatpush1.bf16.msra.mxu0 %v954
        %1081 = vmatprep.subr.bf16.mxu0 0
        %1082 = vmatpush1.bf16.msra.mxu0 %v955
        %1083 = vmatprep.subr.bf16.mxu0 0
        %1084 = vmatpush1.bf16.msra.mxu0 %v956
        %1085 = vmatprep.mubr.bf16.mxu0 %v632
        %1086 = vmatmul.mubr.bf16.gmra.mrb[0].mxu0 %v615
        %v1087 = vpop.f32.mrb[0].mxu0
        %v1088 = vadd.f32 %v601, %v1087
        %v1089 = vpop.f32.mrb[0].mxu0
        %v1090 = vpop.f32.mrb[0].mxu0
        %v1091 = vadd.f32 %v601, %v1090
        %v1092 = vpop.f32.mrb[0].mxu0
        %1093 = vdwg.mxu0
        %1094 = vmatprep.subr.bf16.mxu0 0
        %1095 = vmatpush1.bf16.msra.mxu0 %v957
        %1096 = vmatprep.subr.bf16.mxu0 0
        %1097 = vmatpush1.bf16.msra.mxu0 %v958
        %1098 = vmatprep.subr.bf16.mxu0 0
        %1099 = vmatpush1.bf16.msra.mxu0 %v959
        %1100 = vmatprep.subr.bf16.mxu0 0
        %1101 = vmatpush1.bf16.msra.mxu0 %v960
        %1102 = vmatprep.subr.bf16.mxu0 0
        %1103 = vmatpush1.bf16.msra.mxu0 %v961
        %1104 = vmatprep.subr.bf16.mxu0 0
        %1105 = vmatpush1.bf16.msra.mxu0 %v962
        %1106 = vmatprep.subr.bf16.mxu0 0
        %1107 = vmatpush1.bf16.msra.mxu0 %v963
        %1108 = vmatprep.subr.bf16.mxu0 0
        %1109 = vmatpush1.bf16.msra.mxu0 %v964
        %1110 = vmatprep.subr.bf16.mxu0 0
        %1111 = vmatpush1.bf16.msra.mxu0 %v965
        %1112 = vmatprep.subr.bf16.mxu0 0
        %1113 = vmatpush1.bf16.msra.mxu0 %v966
        %1114 = vmatprep.subr.bf16.mxu0 0
        %1115 = vmatpush1.bf16.msra.mxu0 %v967
        %1116 = vmatprep.subr.bf16.mxu0 0
        %1117 = vmatpush1.bf16.msra.mxu0 %v968
        %1118 = vmatprep.subr.bf16.mxu0 0
        %1119 = vmatpush1.bf16.msra.mxu0 %v969
        %1120 = vmatprep.subr.bf16.mxu0 0
        %1121 = vmatpush1.bf16.msra.mxu0 %v970
        %1122 = vmatprep.subr.bf16.mxu0 0
        %1123 = vmatpush1.bf16.msra.mxu0 %v971
        %1124 = vmatprep.subr.bf16.mxu0 0
        %1125 = vmatpush1.bf16.msra.mxu0 %v972
        %1126 = vmatprep.mubr.bf16.mxu0 %v658
        %1127 = vmatmul.mubr.bf16.gmra.mrb[0].mxu0 %v649
        %v1128 = vpop.f32.mrb[0].mxu0
        %v1129 = vadd.f32 %v1088, %v1128
        %v1130 = vpop.f32.mrb[0].mxu0
        %v1131 = vpop.f32.mrb[0].mxu0
        %v1132 = vadd.f32 %v1091, %v1131
        %v1133 = vpop.f32.mrb[0].mxu0
        %1134 = vdwg.mxu0
        %1135 = vmatprep.subr.bf16.mxu0 0
        %1136 = vmatpush1.bf16.msra.mxu0 %v973
        %1137 = vmatprep.subr.bf16.mxu0 0
        %1138 = vmatpush1.bf16.msra.mxu0 %v974
        %1139 = vmatprep.subr.bf16.mxu0 0
        %1140 = vmatpush1.bf16.msra.mxu0 %v975
        %1141 = vmatprep.subr.bf16.mxu0 0
        %1142 = vmatpush1.bf16.msra.mxu0 %v976
        %1143 = vmatprep.subr.bf16.mxu0 0
        %1144 = vmatpush1.bf16.msra.mxu0 %v977
        %1145 = vmatprep.subr.bf16.mxu0 0
        %1146 = vmatpush1.bf16.msra.mxu0 %v978
        %1147 = vmatprep.subr.bf16.mxu0 0
        %1148 = vmatpush1.bf16.msra.mxu0 %v979
        %1149 = vmatprep.subr.bf16.mxu0 0
        %1150 = vmatpush1.bf16.msra.mxu0 %v980
        %1151 = vmatprep.subr.bf16.mxu0 0
        %1152 = vmatpush1.bf16.msra.mxu0 %v981
        %1153 = vmatprep.subr.bf16.mxu0 0
        %1154 = vmatpush1.bf16.msra.mxu0 %v982
        %1155 = vmatprep.subr.bf16.mxu0 0
        %1156 = vmatpush1.bf16.msra.mxu0 %v983
        %1157 = vmatprep.subr.bf16.mxu0 0
        %1158 = vmatpush1.bf16.msra.mxu0 %v984
        %1159 = vmatprep.subr.bf16.mxu0 0
        %1160 = vmatpush1.bf16.msra.mxu0 %v985
        %1161 = vmatprep.subr.bf16.mxu0 0
        %1162 = vmatpush1.bf16.msra.mxu0 %v986
        %1163 = vmatprep.subr.bf16.mxu0 0
        %1164 = vmatpush1.bf16.msra.mxu0 %v987
        %1165 = vmatprep.subr.bf16.mxu0 0
        %1166 = vmatpush1.bf16.msra.mxu0 %v988
        %1167 = vmatprep.mubr.bf16.mxu0 %v692
        %1168 = vmatmul.mubr.bf16.gmra.mrb[0].mxu0 %v675
        %v1169 = vpop.f32.mrb[0].mxu0
        %v1170 = vadd.f32 %v1129, %v1169
        %v1171 = vpop.f32.mrb[0].mxu0
        %v1172 = vpop.f32.mrb[0].mxu0
        %v1173 = vadd.f32 %v1132, %v1172
        %v1174 = vpop.f32.mrb[0].mxu0
        %1175 = vdwg.mxu0
        %1176 = vmatprep.subr.bf16.mxu0 0
        %1177 = vmatpush1.bf16.msra.mxu0 %v989
        %1178 = vmatprep.subr.bf16.mxu0 0
        %1179 = vmatpush1.bf16.msra.mxu0 %v990
        %1180 = vmatprep.subr.bf16.mxu0 0
        %1181 = vmatpush1.bf16.msra.mxu0 %v991
        %1182 = vmatprep.subr.bf16.mxu0 0
        %1183 = vmatpush1.bf16.msra.mxu0 %v992
        %1184 = vmatprep.subr.bf16.mxu0 0
        %1185 = vmatpush1.bf16.msra.mxu0 %v993
        %1186 = vmatprep.subr.bf16.mxu0 0
        %1187 = vmatpush1.bf16.msra.mxu0 %v994
        %1188 = vmatprep.subr.bf16.mxu0 0
        %1189 = vmatpush1.bf16.msra.mxu0 %v995
        %1190 = vmatprep.subr.bf16.mxu0 0
        %1191 = vmatpush1.bf16.msra.mxu0 %v996
        %1192 = vmatprep.subr.bf16.mxu0 0
        %1193 = vmatpush1.bf16.msra.mxu0 0
        %1194 = vmatprep.subr.bf16.mxu0 0
        %1195 = vmatpush1.bf16.msra.mxu0 0
        %1196 = vmatprep.subr.bf16.mxu0 0
        %1197 = vmatpush1.bf16.msra.mxu0 0
        %1198 = vmatprep.subr.bf16.mxu0 0
        %1199 = vmatpush1.bf16.msra.mxu0 0
        %1200 = vmatprep.subr.bf16.mxu0 0
        %1201 = vmatpush1.bf16.msra.mxu0 0
        %1202 = vmatprep.subr.bf16.mxu0 0
        %1203 = vmatpush1.bf16.msra.mxu0 0
        %1204 = vmatprep.subr.bf16.mxu0 0
        %1205 = vmatpush1.bf16.msra.mxu0 0
        %1206 = vmatprep.subr.bf16.mxu0 0
        %1207 = vmatpush1.bf16.msra.mxu0 0
        %1208 = vmatprep.mubr.bf16.mxu0 0
        %1209 = vmatmul.mubr.bf16.gmra.mrb[0].mxu0 %v709
        %v1210 = vpop.f32.mrb[0].mxu0
        %v1211 = vadd.f32 %v1170, %v1210
        %v1212 = vpop.f32.mrb[0].mxu0
        %v1213 = vpop.f32.mrb[0].mxu0
        %v1214 = vadd.f32 %v1173, %v1213
        %v1215 = vpop.f32.mrb[0].mxu0
        %1216 = vdwg.mxu0
        %v1217 = vpack.c.bf16 %v1214, %v1211
        %v1218 = vld [vmem:[#allocation8] sm:$0xff]
        %v1219 = vld [vmem:[#allocation8 + $0x8] sm:$0xff]
        %v1220 = vld [vmem:[#allocation8 + $0x10] sm:$0xff]
        %v1221 = vld [vmem:[#allocation8 + $0x18] sm:$0xff]
        %v1222 = vld [vmem:[#allocation8 + $0x20] sm:$0xff]
        %v1223 = vld [vmem:[#allocation8 + $0x28] sm:$0xff]
        %v1224 = vld [vmem:[#allocation8 + $0x30] sm:$0xff]
        %v1225 = vld [vmem:[#allocation8 + $0x38] sm:$0xff]
        %v1226 = vld [vmem:[#allocation8 + $0x40] sm:$0xff]
        %v1227 = vld [vmem:[#allocation8 + $0x48] sm:$0xff]
        %v1228 = vld [vmem:[#allocation8 + $0x50] sm:$0xff]
        %v1229 = vld [vmem:[#allocation8 + $0x58] sm:$0xff]
        %v1230 = vld [vmem:[#allocation8 + $0x60] sm:$0xff]
        %v1231 = vld [vmem:[#allocation8 + $0x68] sm:$0xff]
        %v1232 = vld [vmem:[#allocation8 + $0x70] sm:$0xff]
        %v1233 = vld [vmem:[#allocation8 + $0x78] sm:$0xff]
        %v1234 = vld [vmem:[#allocation8 + $0x80] sm:$0xff]
        %v1235 = vld [vmem:[#allocation8 + $0x88] sm:$0xff]
        %v1236 = vld [vmem:[#allocation8 + $0x90] sm:$0xff]
        %v1237 = vld [vmem:[#allocation8 + $0x98] sm:$0xff]
        %v1238 = vld [vmem:[#allocation8 + $0xa0] sm:$0xff]
        %v1239 = vld [vmem:[#allocation8 + $0xa8] sm:$0xff]
        %v1240 = vld [vmem:[#allocation8 + $0xb0] sm:$0xff]
        %v1241 = vld [vmem:[#allocation8 + $0xb8] sm:$0xff]
        %v1242 = vld [vmem:[#allocation8 + $0xc0] sm:$0xff]
        %v1243 = vld [vmem:[#allocation8 + $0xc8] sm:$0xff]
        %v1244 = vld [vmem:[#allocation8 + $0xd0] sm:$0xff]
        %v1245 = vld [vmem:[#allocation8 + $0xd8] sm:$0xff]
        %v1246 = vld [vmem:[#allocation8 + $0xe0] sm:$0xff]
        %v1247 = vld [vmem:[#allocation8 + $0xe8] sm:$0xff]
        %v1248 = vld [vmem:[#allocation8 + $0xf0] sm:$0xff]
        %v1249 = vld [vmem:[#allocation8 + $0xf8] sm:$0xff]
        %v1250 = vld [vmem:[#allocation8 + $0x100] sm:$0xff]
        %v1251 = vld [vmem:[#allocation8 + $0x108] sm:$0xff]
        %v1252 = vld [vmem:[#allocation8 + $0x110] sm:$0xff]
        %v1253 = vld [vmem:[#allocation8 + $0x118] sm:$0xff]
        %v1254 = vld [vmem:[#allocation8 + $0x120] sm:$0xff]
        %v1255 = vld [vmem:[#allocation8 + $0x128] sm:$0xff]
        %v1256 = vld [vmem:[#allocation8 + $0x130] sm:$0xff]
        %v1257 = vld [vmem:[#allocation8 + $0x138] sm:$0xff]
        %v1258 = vld [vmem:[#allocation8 + $0x140] sm:$0xff]
        %v1259 = vld [vmem:[#allocation8 + $0x148] sm:$0xff]
        %v1260 = vld [vmem:[#allocation8 + $0x150] sm:$0xff]
        %v1261 = vld [vmem:[#allocation8 + $0x158] sm:$0xff]
        %v1262 = vld [vmem:[#allocation8 + $0x160] sm:$0xff]
        %v1263 = vld [vmem:[#allocation8 + $0x168] sm:$0xff]
        %v1264 = vld [vmem:[#allocation8 + $0x170] sm:$0xff]
        %v1265 = vld [vmem:[#allocation8 + $0x178] sm:$0xff]
        %v1266 = vld [vmem:[%s4] sm:$0x3f]
        %v1268 = vlaneseq
        %v1269 = vshrl.u32 %v1268, 7
        %v1270 = vsub.s32 0, %v1269
        %v1271 = vrot.slane %v1266, %v1270
        %v1272 = vlaneseq
        %v1273 = vshrl.u32 %v1272, 7
        %v1274 = vsub.s32 1, %v1273
        %v1275 = vrot.slane %v1266, %v1274
        %v1276 = vlaneseq
        %v1277 = vshrl.u32 %v1276, 7
        %v1278 = vsub.s32 2, %v1277
        %v1279 = vrot.slane %v1266, %v1278
        %v1280 = vlaneseq
        %v1281 = vshrl.u32 %v1280, 7
        %v1282 = vsub.s32 3, %v1281
        %v1283 = vrot.slane %v1266, %v1282
        %v1284 = vlaneseq
        %v1285 = vshrl.u32 %v1284, 7
        %v1286 = vsub.s32 4, %v1285
        %v1287 = vrot.slane %v1266, %v1286
        %v1288 = vlaneseq
        %v1289 = vshrl.u32 %v1288, 7
        %v1290 = vsub.s32 5, %v1289
        %v1291 = vrot.slane %v1266, %v1290
        %v1346 = vunpack.c.l.b16 %v1218
        %v1347 = vunpack.c.h.b16 %v1218
        %v1348 = vunpack.c.l.b16 %v1219
        %v1349 = vunpack.c.h.b16 %v1219
        %v1350 = vunpack.c.l.b16 %v1220
        %v1351 = vunpack.c.h.b16 %v1220
        %v1352 = vunpack.c.l.b16 %v1221
        %v1353 = vunpack.c.h.b16 %v1221
        %v1354 = vunpack.c.l.b16 %v1222
        %v1355 = vunpack.c.h.b16 %v1222
        %v1356 = vunpack.c.l.b16 %v1223
        %v1357 = vunpack.c.h.b16 %v1223
        %v1358 = vunpack.c.l.b16 %v1224
        %v1359 = vunpack.c.h.b16 %v1224
        %v1360 = vunpack.c.l.b16 %v1225
        %v1361 = vunpack.c.h.b16 %v1225
        %v1362 = vunpack.c.l.b16 %v1226
        %v1363 = vunpack.c.h.b16 %v1226
        %v1364 = vunpack.c.l.b16 %v1227
        %v1365 = vunpack.c.h.b16 %v1227
        %v1366 = vunpack.c.l.b16 %v1228
        %v1367 = vunpack.c.h.b16 %v1228
        %v1368 = vunpack.c.l.b16 %v1229
        %v1369 = vunpack.c.h.b16 %v1229
        %v1370 = vunpack.c.l.b16 %v1230
        %v1371 = vunpack.c.h.b16 %v1230
        %v1372 = vunpack.c.l.b16 %v1231
        %v1373 = vunpack.c.h.b16 %v1231
        %v1374 = vunpack.c.l.b16 %v1232
        %v1375 = vunpack.c.h.b16 %v1232
        %v1376 = vunpack.c.l.b16 %v1233
        %v1377 = vunpack.c.h.b16 %v1233
        %v1378 = vunpack.c.l.b16 %v1234
        %v1379 = vunpack.c.h.b16 %v1234
        %v1380 = vunpack.c.l.b16 %v1235
        %v1381 = vunpack.c.h.b16 %v1235
        %v1382 = vunpack.c.l.b16 %v1236
        %v1383 = vunpack.c.h.b16 %v1236
        %v1384 = vunpack.c.l.b16 %v1237
        %v1385 = vunpack.c.h.b16 %v1237
        %v1386 = vunpack.c.l.b16 %v1238
        %v1387 = vunpack.c.h.b16 %v1238
        %v1388 = vunpack.c.l.b16 %v1239
        %v1389 = vunpack.c.h.b16 %v1239
        %v1390 = vunpack.c.l.b16 %v1240
        %v1391 = vunpack.c.h.b16 %v1240
        %v1392 = vunpack.c.l.b16 %v1241
        %v1393 = vunpack.c.h.b16 %v1241
        %v1394 = vunpack.c.l.b16 %v1242
        %v1395 = vunpack.c.h.b16 %v1242
        %v1396 = vunpack.c.l.b16 %v1243
        %v1397 = vunpack.c.h.b16 %v1243
        %v1398 = vunpack.c.l.b16 %v1244
        %v1399 = vunpack.c.h.b16 %v1244
        %v1400 = vunpack.c.l.b16 %v1245
        %v1401 = vunpack.c.h.b16 %v1245
        %v1402 = vunpack.c.l.b16 %v1246
        %v1403 = vunpack.c.h.b16 %v1246
        %v1404 = vunpack.c.l.b16 %v1247
        %v1405 = vunpack.c.h.b16 %v1247
        %v1406 = vunpack.c.l.b16 %v1248
        %v1407 = vunpack.c.h.b16 %v1248
        %v1408 = vunpack.c.l.b16 %v1249
        %v1409 = vunpack.c.h.b16 %v1249
        %v1410 = vunpack.c.l.b16 %v1250
        %v1411 = vunpack.c.h.b16 %v1250
        %v1412 = vunpack.c.l.b16 %v1251
        %v1413 = vunpack.c.h.b16 %v1251
        %v1414 = vunpack.c.l.b16 %v1252
        %v1415 = vunpack.c.h.b16 %v1252
        %v1416 = vunpack.c.l.b16 %v1253
        %v1417 = vunpack.c.h.b16 %v1253
        %v1418 = vunpack.c.l.b16 %v1254
        %v1419 = vunpack.c.h.b16 %v1254
        %v1420 = vunpack.c.l.b16 %v1255
        %v1421 = vunpack.c.h.b16 %v1255
        %v1422 = vunpack.c.l.b16 %v1256
        %v1423 = vunpack.c.h.b16 %v1256
        %v1424 = vunpack.c.l.b16 %v1257
        %v1425 = vunpack.c.h.b16 %v1257
        %v1426 = vunpack.c.l.b16 %v1258
        %v1427 = vunpack.c.h.b16 %v1258
        %v1428 = vunpack.c.l.b16 %v1259
        %v1429 = vunpack.c.h.b16 %v1259
        %v1430 = vunpack.c.l.b16 %v1260
        %v1431 = vunpack.c.h.b16 %v1260
        %v1432 = vunpack.c.l.b16 %v1261
        %v1433 = vunpack.c.h.b16 %v1261
        %v1434 = vunpack.c.l.b16 %v1262
        %v1435 = vunpack.c.h.b16 %v1262
        %v1436 = vunpack.c.l.b16 %v1263
        %v1437 = vunpack.c.h.b16 %v1263
        %v1438 = vunpack.c.l.b16 %v1264
        %v1439 = vunpack.c.h.b16 %v1264
        %v1440 = vunpack.c.l.b16 %v1265
        %v1441 = vunpack.c.h.b16 %v1265
        %v1442 = vpack.c.b16 %v1352, %v1346
        %v1443 = vpack.c.b16 %v1353, %v1347
        %v1444 = vpack.c.b16 %v1354, %v1348
        %v1445 = vpack.c.b16 %v1355, %v1349
        %v1446 = vpack.c.b16 %v1356, %v1350
        %v1447 = vpack.c.b16 %v1357, %v1351
        %v1448 = vpack.c.b16 %v1364, %v1358
        %v1449 = vpack.c.b16 %v1365, %v1359
        %v1450 = vpack.c.b16 %v1366, %v1360
        %v1451 = vpack.c.b16 %v1367, %v1361
        %v1452 = vpack.c.b16 %v1368, %v1362
        %v1453 = vpack.c.b16 %v1369, %v1363
        %v1454 = vpack.c.b16 %v1376, %v1370
        %v1455 = vpack.c.b16 %v1377, %v1371
        %v1456 = vpack.c.b16 %v1378, %v1372
        %v1457 = vpack.c.b16 %v1379, %v1373
        %v1458 = vpack.c.b16 %v1380, %v1374
        %v1459 = vpack.c.b16 %v1381, %v1375
        %v1460 = vpack.c.b16 %v1388, %v1382
        %v1461 = vpack.c.b16 %v1389, %v1383
        %v1462 = vpack.c.b16 %v1390, %v1384
        %v1463 = vpack.c.b16 %v1391, %v1385
        %v1464 = vpack.c.b16 %v1392, %v1386
        %v1465 = vpack.c.b16 %v1393, %v1387
        %v1466 = vpack.c.b16 %v1400, %v1394
        %v1467 = vpack.c.b16 %v1401, %v1395
        %v1468 = vpack.c.b16 %v1402, %v1396
        %v1469 = vpack.c.b16 %v1403, %v1397
        %v1470 = vpack.c.b16 %v1404, %v1398
        %v1471 = vpack.c.b16 %v1405, %v1399
        %v1472 = vpack.c.b16 %v1412, %v1406
        %v1473 = vpack.c.b16 %v1413, %v1407
        %v1474 = vpack.c.b16 %v1414, %v1408
        %v1475 = vpack.c.b16 %v1415, %v1409
        %v1476 = vpack.c.b16 %v1416, %v1410
        %v1477 = vpack.c.b16 %v1417, %v1411
        %v1478 = vpack.c.b16 %v1424, %v1418
        %v1479 = vpack.c.b16 %v1425, %v1419
        %v1480 = vpack.c.b16 %v1426, %v1420
        %v1481 = vpack.c.b16 %v1427, %v1421
        %v1482 = vpack.c.b16 %v1428, %v1422
        %v1483 = vpack.c.b16 %v1429, %v1423
        %v1484 = vpack.c.b16 %v1436, %v1430
        %v1485 = vpack.c.b16 %v1437, %v1431
        %v1486 = vpack.c.b16 %v1438, %v1432
        %v1487 = vpack.c.b16 %v1439, %v1433
        %v1488 = vpack.c.b16 %v1440, %v1434
        %v1489 = vpack.c.b16 %v1441, %v1435
        %1538 = vmatprep.subr.bf16.mxu0 %v1443
        %1539 = vmatpush1.bf16.msra.mxu0 %v1442
        %1540 = vmatprep.subr.bf16.mxu0 %v1449
        %1541 = vmatpush1.bf16.msra.mxu0 %v1448
        %1542 = vmatprep.subr.bf16.mxu0 %v1455
        %1543 = vmatpush1.bf16.msra.mxu0 %v1454
        %1544 = vmatprep.subr.bf16.mxu0 %v1461
        %1545 = vmatpush1.bf16.msra.mxu0 %v1460
        %1546 = vmatprep.subr.bf16.mxu0 %v1467
        %1547 = vmatpush1.bf16.msra.mxu0 %v1466
        %1548 = vmatprep.subr.bf16.mxu0 %v1473
        %1549 = vmatpush1.bf16.msra.mxu0 %v1472
        %1550 = vmatprep.subr.bf16.mxu0 %v1479
        %1551 = vmatpush1.bf16.msra.mxu0 %v1478
        %1552 = vmatprep.subr.bf16.mxu0 %v1485
        %1553 = vmatpush1.bf16.msra.mxu0 %v1484
        %1554 = vmatprep.subr.bf16.mxu0 0
        %1555 = vmatpush1.bf16.msra.mxu0 0
        %1556 = vmatprep.subr.bf16.mxu0 0
        %1557 = vmatpush1.bf16.msra.mxu0 0
        %1558 = vmatprep.subr.bf16.mxu0 0
        %1559 = vmatpush1.bf16.msra.mxu0 0
        %1560 = vmatprep.subr.bf16.mxu0 0
        %1561 = vmatpush1.bf16.msra.mxu0 0
        %1562 = vmatprep.subr.bf16.mxu0 0
        %1563 = vmatpush1.bf16.msra.mxu0 0
        %1564 = vmatprep.subr.bf16.mxu0 0
        %1565 = vmatpush1.bf16.msra.mxu0 0
        %1566 = vmatprep.subr.bf16.mxu0 0
        %1567 = vmatpush1.bf16.msra.mxu0 0
        %1568 = vmatprep.subr.bf16.mxu0 0
        %1569 = vmatpush1.bf16.msra.mxu0 0
        %1570 = vmatprep.mubr.bf16.mxu0 0
        %1571 = vmatmul.mubr.bf16.gmra.mrb[0].mxu0 %v1217
        %v1572 = vpop.f32.mrb[0].mxu0
        %v1573 = vadd.f32 %v1271, %v1572
        %v1574 = vpop.f32.mrb[0].mxu0
        %v1575 = vadd.f32 %v1275, %v1574
        %v1576 = vpop.f32.mrb[0].mxu0
        %v1577 = vadd.f32 %v1271, %v1576
        %v1578 = vpop.f32.mrb[0].mxu0
        %v1579 = vadd.f32 %v1275, %v1578
        %1580 = vdwg.mxu0
        %1581 = vmatprep.subr.bf16.mxu0 %v1445
        %1582 = vmatpush1.bf16.msra.mxu0 %v1444
        %1583 = vmatprep.subr.bf16.mxu0 %v1451
        %1584 = vmatpush1.bf16.msra.mxu0 %v1450
        %1585 = vmatprep.subr.bf16.mxu0 %v1457
        %1586 = vmatpush1.bf16.msra.mxu0 %v1456
        %1587 = vmatprep.subr.bf16.mxu0 %v1463
        %1588 = vmatpush1.bf16.msra.mxu0 %v1462
        %1589 = vmatprep.subr.bf16.mxu0 %v1469
        %1590 = vmatpush1.bf16.msra.mxu0 %v1468
        %1591 = vmatprep.subr.bf16.mxu0 %v1475
        %1592 = vmatpush1.bf16.msra.mxu0 %v1474
        %1593 = vmatprep.subr.bf16.mxu0 %v1481
        %1594 = vmatpush1.bf16.msra.mxu0 %v1480
        %1595 = vmatprep.subr.bf16.mxu0 %v1487
        %1596 = vmatpush1.bf16.msra.mxu0 %v1486
        %1597 = vmatprep.subr.bf16.mxu0 0
        %1598 = vmatpush1.bf16.msra.mxu0 0
        %1599 = vmatprep.subr.bf16.mxu0 0
        %1600 = vmatpush1.bf16.msra.mxu0 0
        %1601 = vmatprep.subr.bf16.mxu0 0
        %1602 = vmatpush1.bf16.msra.mxu0 0
        %1603 = vmatprep.subr.bf16.mxu0 0
        %1604 = vmatpush1.bf16.msra.mxu0 0
        %1605 = vmatprep.subr.bf16.mxu0 0
        %1606 = vmatpush1.bf16.msra.mxu0 0
        %1607 = vmatprep.subr.bf16.mxu0 0
        %1608 = vmatpush1.bf16.msra.mxu0 0
        %1609 = vmatprep.subr.bf16.mxu0 0
        %1610 = vmatpush1.bf16.msra.mxu0 0
        %1611 = vmatprep.subr.bf16.mxu0 0
        %1612 = vmatpush1.bf16.msra.mxu0 0
        %1613 = vmatprep.mubr.bf16.mxu0 0
        %1614 = vmatmul.mubr.bf16.gmra.mrb[0].mxu0 %v1217
        %v1615 = vpop.f32.mrb[0].mxu0
        %v1616 = vadd.f32 %v1279, %v1615
        %v1617 = vpop.f32.mrb[0].mxu0
        %v1618 = vadd.f32 %v1283, %v1617
        %v1619 = vpop.f32.mrb[0].mxu0
        %v1620 = vadd.f32 %v1279, %v1619
        %v1621 = vpop.f32.mrb[0].mxu0
        %v1622 = vadd.f32 %v1283, %v1621
        %1623 = vdwg.mxu0
        %1624 = vmatprep.subr.bf16.mxu0 %v1447
        %1625 = vmatpush1.bf16.msra.mxu0 %v1446
        %1626 = vmatprep.subr.bf16.mxu0 %v1453
        %1627 = vmatpush1.bf16.msra.mxu0 %v1452
        %1628 = vmatprep.subr.bf16.mxu0 %v1459
        %1629 = vmatpush1.bf16.msra.mxu0 %v1458
        %1630 = vmatprep.subr.bf16.mxu0 %v1465
        %1631 = vmatpush1.bf16.msra.mxu0 %v1464
        %1632 = vmatprep.subr.bf16.mxu0 %v1471
        %1633 = vmatpush1.bf16.msra.mxu0 %v1470
        %1634 = vmatprep.subr.bf16.mxu0 %v1477
        %1635 = vmatpush1.bf16.msra.mxu0 %v1476
        %1636 = vmatprep.subr.bf16.mxu0 %v1483
        %1637 = vmatpush1.bf16.msra.mxu0 %v1482
        %1638 = vmatprep.subr.bf16.mxu0 %v1489
        %1639 = vmatpush1.bf16.msra.mxu0 %v1488
        %1640 = vmatprep.subr.bf16.mxu0 0
        %1641 = vmatpush1.bf16.msra.mxu0 0
        %1642 = vmatprep.subr.bf16.mxu0 0
        %1643 = vmatpush1.bf16.msra.mxu0 0
        %1644 = vmatprep.subr.bf16.mxu0 0
        %1645 = vmatpush1.bf16.msra.mxu0 0
        %1646 = vmatprep.subr.bf16.mxu0 0
        %1647 = vmatpush1.bf16.msra.mxu0 0
        %1648 = vmatprep.subr.bf16.mxu0 0
        %1649 = vmatpush1.bf16.msra.mxu0 0
        %1650 = vmatprep.subr.bf16.mxu0 0
        %1651 = vmatpush1.bf16.msra.mxu0 0
        %1652 = vmatprep.subr.bf16.mxu0 0
        %1653 = vmatpush1.bf16.msra.mxu0 0
        %1654 = vmatprep.subr.bf16.mxu0 0
        %1655 = vmatpush1.bf16.msra.mxu0 0
        %1656 = vmatprep.mubr.bf16.mxu0 0
        %1657 = vmatmul.mubr.bf16.gmra.mrb[0].mxu0 %v1217
        %v1658 = vpop.f32.mrb[0].mxu0
        %v1659 = vadd.f32 %v1287, %v1658
        %v1660 = vpop.f32.mrb[0].mxu0
        %v1661 = vadd.f32 %v1291, %v1660
        %v1662 = vpop.f32.mrb[0].mxu0
        %v1663 = vadd.f32 %v1287, %v1662
        %v1664 = vpop.f32.mrb[0].mxu0
        %v1665 = vadd.f32 %v1291, %v1664
        %1666 = vdwg.mxu0
        %v1667 = vmax.f32 %v1573, 0.0
        %v1668 = vmax.f32 %v1575, 0.0
        %v1669 = vmax.f32 %v1616, 0.0
        %v1670 = vmax.f32 %v1577, 0.0
        %v1671 = vmax.f32 %v1579, 0.0
        %v1672 = vmax.f32 %v1620, 0.0
        %v1673 = vmin.f32 %v1667, 6.0
        %v1674 = vmin.f32 %v1668, 6.0
        %v1675 = vmin.f32 %v1669, 6.0
        %v1676 = vmin.f32 %v1670, 6.0
        %v1677 = vmin.f32 %v1671, 6.0
        %v1678 = vmin.f32 %v1672, 6.0
        %v1679 = vmul.f32 %v1673, %v1618
        %v1680 = vmul.f32 %v1674, %v1659
        %v1681 = vmul.f32 %v1675, %v1661
        %v1682 = vmul.f32 %v1676, %v1622
        %v1683 = vmul.f32 %v1677, %v1663
        %v1684 = vmul.f32 %v1678, %v1665
        %v1685 = vpack.c.bf16 %v1682, %v1679
        %v1686 = vpack.c.bf16 %v1683, %v1680
        %v1687 = vpack.c.bf16 %v1684, %v1681
        %v1688 = vld [vmem:[#allocation9] sm:$0xf]
        %v1689 = vld [vmem:[#allocation9 + $0x4] sm:$0xf]
        %v1690 = vld [vmem:[#allocation9 + $0x8] sm:$0xf]
        %v1691 = vld [vmem:[#allocation9 + $0xc] sm:$0xf]
        %v1692 = vld [vmem:[#allocation9 + $0x10] sm:$0xf]
        %v1693 = vld [vmem:[#allocation9 + $0x14] sm:$0xf]
        %v1694 = vld [vmem:[#allocation9 + $0x18] sm:$0xf]
        %v1695 = vld [vmem:[#allocation9 + $0x1c] sm:$0xf]
        %v1696 = vld [vmem:[#allocation9 + $0x20] sm:$0xf]
        %v1697 = vld [vmem:[#allocation9 + $0x24] sm:$0xf]
        %v1698 = vld [vmem:[#allocation9 + $0x28] sm:$0xf]
        %v1699 = vld [vmem:[#allocation9 + $0x2c] sm:$0xf]
        %v1700 = vld [vmem:[#allocation9 + $0x30] sm:$0xf]
        %v1701 = vld [vmem:[#allocation9 + $0x34] sm:$0xf]
        %v1702 = vld [vmem:[#allocation9 + $0x38] sm:$0xf]
        %v1703 = vld [vmem:[#allocation9 + $0x3c] sm:$0xf]
        %v1704 = vld [vmem:[#allocation9 + $0x40] sm:$0xf]
        %v1705 = vld [vmem:[#allocation9 + $0x44] sm:$0xf]
        %v1706 = vld [vmem:[#allocation9 + $0x48] sm:$0xf]
        %v1707 = vld [vmem:[#allocation9 + $0x4c] sm:$0xf]
        %v1708 = vld [vmem:[#allocation9 + $0x50] sm:$0xf]
        %v1709 = vld [vmem:[#allocation9 + $0x54] sm:$0xf]
        %v1710 = vld [vmem:[#allocation9 + $0x58] sm:$0xf]
        %v1711 = vld [vmem:[#allocation9 + $0x5c] sm:$0xf]
        %v1712 = vld [vmem:[#allocation9 + $0x60] sm:$0xf]
        %v1713 = vld [vmem:[#allocation9 + $0x64] sm:$0xf]
        %v1714 = vld [vmem:[#allocation9 + $0x68] sm:$0xf]
        %v1715 = vld [vmem:[#allocation9 + $0x6c] sm:$0xf]
        %v1716 = vld [vmem:[#allocation9 + $0x70] sm:$0xf]
        %v1717 = vld [vmem:[#allocation9 + $0x74] sm:$0xf]
        %v1718 = vld [vmem:[#allocation9 + $0x78] sm:$0xf]
        %v1719 = vld [vmem:[#allocation9 + $0x7c] sm:$0xf]
        %v1720 = vld [vmem:[#allocation9 + $0x80] sm:$0xf]
        %v1721 = vld [vmem:[#allocation9 + $0x84] sm:$0xf]
        %v1722 = vld [vmem:[#allocation9 + $0x88] sm:$0xf]
        %v1723 = vld [vmem:[#allocation9 + $0x8c] sm:$0xf]
        %v1724 = vld [vmem:[#allocation9 + $0x90] sm:$0xf]
        %v1725 = vld [vmem:[#allocation9 + $0x94] sm:$0xf]
        %v1726 = vld [vmem:[#allocation9 + $0x98] sm:$0xf]
        %v1727 = vld [vmem:[#allocation9 + $0x9c] sm:$0xf]
        %v1728 = vld [vmem:[#allocation9 + $0xa0] sm:$0xf]
        %v1729 = vld [vmem:[#allocation9 + $0xa4] sm:$0xf]
        %v1730 = vld [vmem:[#allocation9 + $0xa8] sm:$0xf]
        %v1731 = vld [vmem:[#allocation9 + $0xac] sm:$0xf]
        %v1732 = vld [vmem:[#allocation9 + $0xb0] sm:$0xf]
        %v1733 = vld [vmem:[#allocation9 + $0xb4] sm:$0xf]
        %v1734 = vld [vmem:[#allocation9 + $0xb8] sm:$0xf]
        %v1735 = vld [vmem:[#allocation9 + $0xbc] sm:$0xf]
        %v1736 = vld [vmem:[%s6] sm:$0x1]
        %v1738 = vlaneseq
        %v1739 = vshrl.u32 %v1738, 7
        %v1740 = vsub.s32 0, %v1739
        %v1741 = vrot.slane %v1736, %v1740
        %v1791 = vunpack.c.l.b16 %v1688
        %v1792 = vunpack.c.l.b16 %v1689
        %v1793 = vunpack.c.l.b16 %v1690
        %v1794 = vunpack.c.l.b16 %v1691
        %v1795 = vunpack.c.l.b16 %v1692
        %v1796 = vunpack.c.l.b16 %v1693
        %v1797 = vunpack.c.l.b16 %v1694
        %v1798 = vunpack.c.l.b16 %v1695
        %v1799 = vunpack.c.l.b16 %v1696
        %v1800 = vunpack.c.l.b16 %v1697
        %v1801 = vunpack.c.l.b16 %v1698
        %v1802 = vunpack.c.l.b16 %v1699
        %v1803 = vunpack.c.l.b16 %v1700
        %v1804 = vunpack.c.l.b16 %v1701
        %v1805 = vunpack.c.l.b16 %v1702
        %v1806 = vunpack.c.l.b16 %v1703
        %v1807 = vunpack.c.l.b16 %v1704
        %v1808 = vunpack.c.l.b16 %v1705
        %v1809 = vunpack.c.l.b16 %v1706
        %v1810 = vunpack.c.l.b16 %v1707
        %v1811 = vunpack.c.l.b16 %v1708
        %v1812 = vunpack.c.l.b16 %v1709
        %v1813 = vunpack.c.l.b16 %v1710
        %v1814 = vunpack.c.l.b16 %v1711
        %v1815 = vunpack.c.l.b16 %v1712
        %v1816 = vunpack.c.l.b16 %v1713
        %v1817 = vunpack.c.l.b16 %v1714
        %v1818 = vunpack.c.l.b16 %v1715
        %v1819 = vunpack.c.l.b16 %v1716
        %v1820 = vunpack.c.l.b16 %v1717
        %v1821 = vunpack.c.l.b16 %v1718
        %v1822 = vunpack.c.l.b16 %v1719
        %v1823 = vunpack.c.l.b16 %v1720
        %v1824 = vunpack.c.l.b16 %v1721
        %v1825 = vunpack.c.l.b16 %v1722
        %v1826 = vunpack.c.l.b16 %v1723
        %v1827 = vunpack.c.l.b16 %v1724
        %v1828 = vunpack.c.l.b16 %v1725
        %v1829 = vunpack.c.l.b16 %v1726
        %v1830 = vunpack.c.l.b16 %v1727
        %v1831 = vunpack.c.l.b16 %v1728
        %v1832 = vunpack.c.l.b16 %v1729
        %v1833 = vunpack.c.l.b16 %v1730
        %v1834 = vunpack.c.l.b16 %v1731
        %v1835 = vunpack.c.l.b16 %v1732
        %v1836 = vunpack.c.l.b16 %v1733
        %v1837 = vunpack.c.l.b16 %v1734
        %v1838 = vunpack.c.l.b16 %v1735
        %v1839 = vpack.c.b16 %v1792, %v1791
        %v1840 = vpack.c.b16 %v1794, %v1793
        %v1841 = vpack.c.b16 %v1796, %v1795
        %v1842 = vpack.c.b16 %v1798, %v1797
        %v1843 = vpack.c.b16 %v1800, %v1799
        %v1844 = vpack.c.b16 %v1802, %v1801
        %v1845 = vpack.c.b16 %v1804, %v1803
        %v1846 = vpack.c.b16 %v1806, %v1805
        %v1847 = vpack.c.b16 %v1808, %v1807
        %v1848 = vpack.c.b16 %v1810, %v1809
        %v1849 = vpack.c.b16 %v1812, %v1811
        %v1850 = vpack.c.b16 %v1814, %v1813
        %v1851 = vpack.c.b16 %v1816, %v1815
        %v1852 = vpack.c.b16 %v1818, %v1817
        %v1853 = vpack.c.b16 %v1820, %v1819
        %v1854 = vpack.c.b16 %v1822, %v1821
        %v1855 = vpack.c.b16 %v1824, %v1823
        %v1856 = vpack.c.b16 %v1826, %v1825
        %v1857 = vpack.c.b16 %v1828, %v1827
        %v1858 = vpack.c.b16 %v1830, %v1829
        %v1859 = vpack.c.b16 %v1832, %v1831
        %v1860 = vpack.c.b16 %v1834, %v1833
        %v1861 = vpack.c.b16 %v1836, %v1835
        %v1862 = vpack.c.b16 %v1838, %v1837
        %1887 = vmatprep.subr.bf16.mxu0 0
        %1888 = vmatpush1.bf16.msra.mxu0 %v1839
        %1889 = vmatprep.subr.bf16.mxu0 0
        %1890 = vmatpush1.bf16.msra.mxu0 %v1840
        %1891 = vmatprep.subr.bf16.mxu0 0
        %1892 = vmatpush1.bf16.msra.mxu0 %v1841
        %1893 = vmatprep.subr.bf16.mxu0 0
        %1894 = vmatpush1.bf16.msra.mxu0 %v1842
        %1895 = vmatprep.subr.bf16.mxu0 0
        %1896 = vmatpush1.bf16.msra.mxu0 %v1843
        %1897 = vmatprep.subr.bf16.mxu0 0
        %1898 = vmatpush1.bf16.msra.mxu0 %v1844
        %1899 = vmatprep.subr.bf16.mxu0 0
        %1900 = vmatpush1.bf16.msra.mxu0 %v1845
        %1901 = vmatprep.subr.bf16.mxu0 0
        %1902 = vmatpush1.bf16.msra.mxu0 %v1846
        %1903 = vmatprep.subr.bf16.mxu0 0
        %1904 = vmatpush1.bf16.msra.mxu0 %v1847
        %1905 = vmatprep.subr.bf16.mxu0 0
        %1906 = vmatpush1.bf16.msra.mxu0 %v1848
        %1907 = vmatprep.subr.bf16.mxu0 0
        %1908 = vmatpush1.bf16.msra.mxu0 %v1849
        %1909 = vmatprep.subr.bf16.mxu0 0
        %1910 = vmatpush1.bf16.msra.mxu0 %v1850
        %1911 = vmatprep.subr.bf16.mxu0 0
        %1912 = vmatpush1.bf16.msra.mxu0 %v1851
        %1913 = vmatprep.subr.bf16.mxu0 0
        %1914 = vmatpush1.bf16.msra.mxu0 %v1852
        %1915 = vmatprep.subr.bf16.mxu0 0
        %1916 = vmatpush1.bf16.msra.mxu0 %v1853
        %1917 = vmatprep.subr.bf16.mxu0 0
        %1918 = vmatpush1.bf16.msra.mxu0 %v1854
        %1919 = vmatprep.mubr.bf16.mxu0 %v1686
        %1920 = vmatmul.mubr.bf16.gmra.mrb[0].mxu0 %v1685
        %v1921 = vpop.f32.mrb[0].mxu0
        %v1922 = vadd.f32 %v1741, %v1921
        %v1923 = vpop.f32.mrb[0].mxu0
        %v1924 = vpop.f32.mrb[0].mxu0
        %v1925 = vadd.f32 %v1741, %v1924
        %v1926 = vpop.f32.mrb[0].mxu0
        %1927 = vdwg.mxu0
        %1928 = vmatprep.subr.bf16.mxu0 0
        %1929 = vmatpush1.bf16.msra.mxu0 %v1855
        %1930 = vmatprep.subr.bf16.mxu0 0
        %1931 = vmatpush1.bf16.msra.mxu0 %v1856
        %1932 = vmatprep.subr.bf16.mxu0 0
        %1933 = vmatpush1.bf16.msra.mxu0 %v1857
        %1934 = vmatprep.subr.bf16.mxu0 0
        %1935 = vmatpush1.bf16.msra.mxu0 %v1858
        %1936 = vmatprep.subr.bf16.mxu0 0
        %1937 = vmatpush1.bf16.msra.mxu0 %v1859
        %1938 = vmatprep.subr.bf16.mxu0 0
        %1939 = vmatpush1.bf16.msra.mxu0 %v1860
        %1940 = vmatprep.subr.bf16.mxu0 0
        %1941 = vmatpush1.bf16.msra.mxu0 %v1861
        %1942 = vmatprep.subr.bf16.mxu0 0
        %1943 = vmatpush1.bf16.msra.mxu0 %v1862
        %1944 = vmatprep.subr.bf16.mxu0 0
        %1945 = vmatpush1.bf16.msra.mxu0 0
        %1946 = vmatprep.subr.bf16.mxu0 0
        %1947 = vmatpush1.bf16.msra.mxu0 0
        %1948 = vmatprep.subr.bf16.mxu0 0
        %1949 = vmatpush1.bf16.msra.mxu0 0
        %1950 = vmatprep.subr.bf16.mxu0 0
        %1951 = vmatpush1.bf16.msra.mxu0 0
        %1952 = vmatprep.subr.bf16.mxu0 0
        %1953 = vmatpush1.bf16.msra.mxu0 0
        %1954 = vmatprep.subr.bf16.mxu0 0
        %1955 = vmatpush1.bf16.msra.mxu0 0
        %1956 = vmatprep.subr.bf16.mxu0 0
        %1957 = vmatpush1.bf16.msra.mxu0 0
        %1958 = vmatprep.subr.bf16.mxu0 0
        %1959 = vmatpush1.bf16.msra.mxu0 0
        %1960 = vmatprep.mubr.bf16.mxu0 0
        %1961 = vmatmul.mubr.bf16.gmra.mrb[0].mxu0 %v1687
        %v1962 = vpop.f32.mrb[0].mxu0
        %v1963 = vadd.f32 %v1922, %v1962
        %v1964 = vpop.f32.mrb[0].mxu0
        %v1965 = vpop.f32.mrb[0].mxu0
        %v1966 = vadd.f32 %v1925, %v1965
        %v1967 = vpop.f32.mrb[0].mxu0
        %1968 = vdwg.mxu0
        %v1969 = vpack.c.bf16 %v1966, %v1963
        %1970 = vst [vmem:[#allocation2 + $0x8] sm:$0xff] %v1969
        %v1971 = vld [vmem:[#allocation2] sm:$0xc0]
        %v1972 = vld [vmem:[#allocation2 + $0x8] sm:$0x7f]
        %v1973 = vld [vmem:[#allocation2] sm:$0x80]
        %v1974 = vld [vmem:[#allocation2 + $0x8] sm:$0xff]
        %v1975 = vld [vmem:[#allocation2 + $0x8] sm:$0xff]
        %v1976 = vld [vmem:[#allocation2 + $0x10] sm:$0x1]
        %v1977 = vld [vmem:[#allocation2 + $0x8] sm:$0xfe]
        %v1978 = vld [vmem:[#allocation2 + $0x10] sm:$0x3]
        %v1980 = vshrl.u32 %v1973, 16
        %v1982 = vshll.u32 %v1973, 16
        %v1984 = vrot.slane %v1982, 1
        %v1985 = vor.u32 %v1980, %v1984
        %v1987 = vshll.u32 %v1972, 16
        %v1989 = vrot.slane %v1987, 1
        %v1990 = vsel %vm424, %v1985, %v1989
        %v1991 = vshrl.u32 %v1972, 16
        %v1993 = vor.u32 %v1991, %v1989
        %v1996 = vrot.slane %v1973, 1
        %v1997 = vrot.slane %v1974, 1
        %v1998 = vsel %vm442, %v1996, %v1997
        %v2000 = vshrl.u32 %v1974, 16
        %v2002 = vrot.slane %v2000, 1
        %v2003 = vshll.u32 %v1974, 16
        %v2005 = vrot.slane %v2003, 2
        %v2006 = vor.u32 %v2002, %v2005
        %v2009 = vrot.slane %v1975, 2
        %v2010 = vrot.slane %v1976, 2
        %v2011 = vsel %vm456, %v2009, %v2010
        %v2013 = vshrl.u32 %v1977, 16
        %v2015 = vrot.slane %v2013, 2
        %v2016 = vshll.u32 %v1977, 16
        %v2018 = vrot.slane %v2016, 3
        %v2019 = vor.u32 %v2015, %v2018
        %v2021 = vshrl.u32 %v1976, 16
        %v2023 = vrot.slane %v2021, 2
        %v2024 = vshll.u32 %v1976, 16
        %v2026 = vrot.slane %v2024, 3
        %v2027 = vor.u32 %v2023, %v2026
        %v2028 = vsel %vm460, %v2019, %v2027
        %v2031 = vrot.slane %v1977, 3
        %v2032 = vrot.slane %v1978, 3
        %v2033 = vsel %vm480, %v2031, %v2032
        %v2034 = vld [vmem:[#allocation11] sm:$0xf]
        %v2035 = vld [vmem:[#allocation11 + $0x4] sm:$0xf]
        %v2036 = vld [vmem:[#allocation11 + $0x8] sm:$0xf]
        %v2037 = vld [vmem:[#allocation11 + $0xc] sm:$0xf]
        %v2038 = vld [vmem:[#allocation11 + $0x10] sm:$0xf]
        %v2039 = vld [vmem:[#allocation11 + $0x14] sm:$0xf]
        %v2040 = vld [vmem:[#allocation11 + $0x18] sm:$0xf]
        %v2041 = vld [vmem:[#allocation11 + $0x1c] sm:$0xf]
        %v2042 = vld [vmem:[#allocation11 + $0x20] sm:$0xf]
        %v2043 = vld [vmem:[#allocation11 + $0x24] sm:$0xf]
        %v2044 = vld [vmem:[#allocation11 + $0x28] sm:$0xf]
        %v2045 = vld [vmem:[#allocation11 + $0x2c] sm:$0xf]
        %v2046 = vld [vmem:[#allocation11 + $0x30] sm:$0xf]
        %v2047 = vld [vmem:[#allocation11 + $0x34] sm:$0xf]
        %v2048 = vld [vmem:[#allocation11 + $0x38] sm:$0xf]
        %v2049 = vld [vmem:[#allocation11 + $0x3c] sm:$0xf]
        %v2050 = vld [vmem:[#allocation11 + $0x40] sm:$0xf]
        %v2051 = vld [vmem:[#allocation11 + $0x44] sm:$0xf]
        %v2052 = vld [vmem:[#allocation11 + $0x48] sm:$0xf]
        %v2053 = vld [vmem:[#allocation11 + $0x4c] sm:$0xf]
        %v2054 = vld [vmem:[#allocation11 + $0x50] sm:$0xf]
        %v2055 = vld [vmem:[#allocation11 + $0x54] sm:$0xf]
        %v2056 = vld [vmem:[#allocation11 + $0x58] sm:$0xf]
        %v2057 = vld [vmem:[#allocation11 + $0x5c] sm:$0xf]
        %v2058 = vld [vmem:[#allocation11 + $0x60] sm:$0xf]
        %v2059 = vld [vmem:[#allocation11 + $0x64] sm:$0xf]
        %v2060 = vld [vmem:[#allocation11 + $0x68] sm:$0xf]
        %v2061 = vld [vmem:[#allocation11 + $0x6c] sm:$0xf]
        %v2062 = vld [vmem:[#allocation11 + $0x70] sm:$0xf]
        %v2063 = vld [vmem:[#allocation11 + $0x74] sm:$0xf]
        %v2064 = vld [vmem:[#allocation11 + $0x78] sm:$0xf]
        %v2065 = vld [vmem:[#allocation11 + $0x7c] sm:$0xf]
        %v2066 = vld [vmem:[#allocation11 + $0x80] sm:$0xf]
        %v2067 = vld [vmem:[#allocation11 + $0x84] sm:$0xf]
        %v2068 = vld [vmem:[#allocation11 + $0x88] sm:$0xf]
        %v2069 = vld [vmem:[#allocation11 + $0x8c] sm:$0xf]
        %v2070 = vld [vmem:[#allocation11 + $0x90] sm:$0xf]
        %v2071 = vld [vmem:[#allocation11 + $0x94] sm:$0xf]
        %v2072 = vld [vmem:[#allocation11 + $0x98] sm:$0xf]
        %v2073 = vld [vmem:[#allocation11 + $0x9c] sm:$0xf]
        %v2074 = vld [vmem:[#allocation11 + $0xa0] sm:$0xf]
        %v2075 = vld [vmem:[#allocation11 + $0xa4] sm:$0xf]
        %v2076 = vld [vmem:[#allocation11 + $0xa8] sm:$0xf]
        %v2077 = vld [vmem:[#allocation11 + $0xac] sm:$0xf]
        %v2078 = vld [vmem:[#allocation11 + $0xb0] sm:$0xf]
        %v2079 = vld [vmem:[#allocation11 + $0xb4] sm:$0xf]
        %v2080 = vld [vmem:[#allocation11 + $0xb8] sm:$0xf]
        %v2081 = vld [vmem:[#allocation11 + $0xbc] sm:$0xf]
        %v2082 = vld [vmem:[#allocation11 + $0xc0] sm:$0xf]
        %v2083 = vld [vmem:[#allocation11 + $0xc4] sm:$0xf]
        %v2084 = vld [vmem:[#allocation11 + $0xc8] sm:$0xf]
        %v2085 = vld [vmem:[#allocation11 + $0xcc] sm:$0xf]
        %v2086 = vld [vmem:[#allocation11 + $0xd0] sm:$0xf]
        %v2087 = vld [vmem:[#allocation11 + $0xd4] sm:$0xf]
        %v2088 = vld [vmem:[#allocation11 + $0xd8] sm:$0xf]
        %v2089 = vld [vmem:[#allocation11 + $0xdc] sm:$0xf]
        %v2090 = vld [vmem:[#allocation11 + $0xe0] sm:$0xf]
        %v2091 = vld [vmem:[#allocation11 + $0xe4] sm:$0xf]
        %v2092 = vld [vmem:[#allocation11 + $0xe8] sm:$0xf]
        %v2093 = vld [vmem:[#allocation11 + $0xec] sm:$0xf]
        %v2094 = vld [vmem:[#allocation11 + $0xf0] sm:$0xf]
        %v2095 = vld [vmem:[#allocation11 + $0xf4] sm:$0xf]
        %v2096 = vld [vmem:[#allocation11 + $0xf8] sm:$0xf]
        %v2097 = vld [vmem:[#allocation11 + $0xfc] sm:$0xf]
        %v2098 = vld [vmem:[#allocation11 + $0x100] sm:$0xf]
        %v2099 = vld [vmem:[#allocation11 + $0x104] sm:$0xf]
        %v2100 = vld [vmem:[#allocation11 + $0x108] sm:$0xf]
        %v2101 = vld [vmem:[#allocation11 + $0x10c] sm:$0xf]
        %v2102 = vld [vmem:[#allocation11 + $0x110] sm:$0xf]
        %v2103 = vld [vmem:[#allocation11 + $0x114] sm:$0xf]
        %v2104 = vld [vmem:[#allocation11 + $0x118] sm:$0xf]
        %v2105 = vld [vmem:[#allocation11 + $0x11c] sm:$0xf]
        %v2106 = vld [vmem:[#allocation11 + $0x120] sm:$0xf]
        %v2107 = vld [vmem:[#allocation11 + $0x124] sm:$0xf]
        %v2108 = vld [vmem:[#allocation11 + $0x128] sm:$0xf]
        %v2109 = vld [vmem:[#allocation11 + $0x12c] sm:$0xf]
        %v2110 = vld [vmem:[#allocation11 + $0x130] sm:$0xf]
        %v2111 = vld [vmem:[#allocation11 + $0x134] sm:$0xf]
        %v2112 = vld [vmem:[#allocation11 + $0x138] sm:$0xf]
        %v2113 = vld [vmem:[#allocation11 + $0x13c] sm:$0xf]
        %v2114 = vld [vmem:[#allocation11 + $0x140] sm:$0xf]
        %v2115 = vld [vmem:[#allocation11 + $0x144] sm:$0xf]
        %v2116 = vld [vmem:[#allocation11 + $0x148] sm:$0xf]
        %v2117 = vld [vmem:[#allocation11 + $0x14c] sm:$0xf]
        %v2118 = vld [vmem:[#allocation11 + $0x150] sm:$0xf]
        %v2119 = vld [vmem:[#allocation11 + $0x154] sm:$0xf]
        %v2120 = vld [vmem:[#allocation11 + $0x158] sm:$0xf]
        %v2121 = vld [vmem:[#allocation11 + $0x15c] sm:$0xf]
        %v2122 = vld [vmem:[#allocation11 + $0x160] sm:$0xf]
        %v2123 = vld [vmem:[#allocation11 + $0x164] sm:$0xf]
        %v2124 = vld [vmem:[#allocation11 + $0x168] sm:$0xf]
        %v2125 = vld [vmem:[#allocation11 + $0x16c] sm:$0xf]
        %v2126 = vld [vmem:[#allocation11 + $0x170] sm:$0xf]
        %v2127 = vld [vmem:[#allocation11 + $0x174] sm:$0xf]
        %v2128 = vld [vmem:[#allocation11 + $0x178] sm:$0xf]
        %v2129 = vld [vmem:[#allocation11 + $0x17c] sm:$0xf]
        %v2130 = vld [vmem:[#allocation11 + $0x180] sm:$0xf]
        %v2131 = vld [vmem:[#allocation11 + $0x184] sm:$0xf]
        %v2132 = vld [vmem:[#allocation11 + $0x188] sm:$0xf]
        %v2133 = vld [vmem:[#allocation11 + $0x18c] sm:$0xf]
        %v2134 = vld [vmem:[#allocation11 + $0x190] sm:$0xf]
        %v2135 = vld [vmem:[#allocation11 + $0x194] sm:$0xf]
        %v2136 = vld [vmem:[#allocation11 + $0x198] sm:$0xf]
        %v2137 = vld [vmem:[#allocation11 + $0x19c] sm:$0xf]
        %v2138 = vld [vmem:[#allocation11 + $0x1a0] sm:$0xf]
        %v2139 = vld [vmem:[#allocation11 + $0x1a4] sm:$0xf]
        %v2140 = vld [vmem:[#allocation11 + $0x1a8] sm:$0xf]
        %v2141 = vld [vmem:[#allocation11 + $0x1ac] sm:$0xf]
        %v2142 = vld [vmem:[#allocation11 + $0x1b0] sm:$0xf]
        %v2143 = vld [vmem:[#allocation11 + $0x1b4] sm:$0xf]
        %v2144 = vld [vmem:[#allocation11 + $0x1b8] sm:$0xf]
        %v2145 = vld [vmem:[#allocation11 + $0x1bc] sm:$0xf]
        %v2147 = vshrl.u32 %v1971, 16
        %v2149 = vrot.slane %v2147, 6
        %v2150 = vshll.u32 %v1971, 16
        %v2152 = vrot.slane %v2150, 7
        %v2153 = vor.u32 %v2149, %v2152
        %v2154 = vrot.slane %v1991, 6
        %v2155 = vrot.slane %v1987, 7
        %v2156 = vor.u32 %v2154, %v2155
        %v2157 = vsel %vm603, %v2153, %v2156
        %v2159 = vshrl.u32 %v1990, 16
        %v2161 = vrot.slane %v2159, 6
        %v2162 = vshll.u32 %v1990, 16
        %v2164 = vrot.slane %v2162, 7
        %v2165 = vor.u32 %v2161, %v2164
        %v2167 = vshrl.u32 %v1993, 16
        %v2169 = vrot.slane %v2167, 6
        %v2170 = vshll.u32 %v1993, 16
        %v2172 = vrot.slane %v2170, 7
        %v2173 = vor.u32 %v2169, %v2172
        %v2174 = vsel %vm603, %v2165, %v2173
        %v2176 = vshrl.u32 %v1998, 16
        %v2178 = vrot.slane %v2176, 6
        %v2179 = vshll.u32 %v1998, 16
        %v2181 = vrot.slane %v2179, 7
        %v2182 = vor.u32 %v2178, %v2181
        %v2184 = vshrl.u32 %v1997, 16
        %v2186 = vrot.slane %v2184, 6
        %v2187 = vshll.u32 %v1997, 16
        %v2189 = vrot.slane %v2187, 7
        %v2190 = vor.u32 %v2186, %v2189
        %v2191 = vsel %vm603, %v2182, %v2190
        %v2193 = vshrl.u32 %v2006, 16
        %v2195 = vrot.slane %v2193, 6
        %v2196 = vshll.u32 %v2006, 16
        %v2198 = vrot.slane %v2196, 7
        %v2199 = vor.u32 %v2195, %v2198
        %v2200 = vsel %vm603, %v2199, %v2199
        %v2202 = vshrl.u32 %v2009, 16
        %v2204 = vrot.slane %v2202, 6
        %v2205 = vshll.u32 %v2009, 16
        %v2207 = vrot.slane %v2205, 7
        %v2208 = vor.u32 %v2204, %v2207
        %v2210 = vshrl.u32 %v2011, 16
        %v2212 = vrot.slane %v2210, 6
        %v2213 = vshll.u32 %v2011, 16
        %v2215 = vrot.slane %v2213, 7
        %v2216 = vor.u32 %v2212, %v2215
        %v2217 = vsel %vm603, %v2208, %v2216
        %v2219 = vshrl.u32 %v2019, 16
        %v2221 = vrot.slane %v2219, 6
        %v2222 = vshll.u32 %v2019, 16
        %v2224 = vrot.slane %v2222, 7
        %v2225 = vor.u32 %v2221, %v2224
        %v2227 = vshrl.u32 %v2028, 16
        %v2229 = vrot.slane %v2227, 6
        %v2230 = vshll.u32 %v2028, 16
        %v2232 = vrot.slane %v2230, 7
        %v2233 = vor.u32 %v2229, %v2232
        %v2234 = vsel %vm603, %v2225, %v2233
        %v2236 = vshrl.u32 %v2031, 16
        %v2238 = vrot.slane %v2236, 6
        %v2239 = vshll.u32 %v2031, 16
        %v2241 = vrot.slane %v2239, 7
        %v2242 = vor.u32 %v2238, %v2241
        %v2244 = vshrl.u32 %v2033, 16
        %v2246 = vrot.slane %v2244, 6
        %v2247 = vshll.u32 %v2033, 16
        %v2249 = vrot.slane %v2247, 7
        %v2250 = vor.u32 %v2246, %v2249
        %v2251 = vsel %vm603, %v2242, %v2250
        %v2371 = vunpack.c.l.b16 %v2034
        %v2372 = vunpack.c.l.b16 %v2035
        %v2373 = vunpack.c.l.b16 %v2036
        %v2374 = vunpack.c.l.b16 %v2037
        %v2375 = vunpack.c.l.b16 %v2038
        %v2376 = vunpack.c.l.b16 %v2039
        %v2377 = vunpack.c.l.b16 %v2040
        %v2378 = vunpack.c.l.b16 %v2041
        %v2379 = vunpack.c.l.b16 %v2042
        %v2380 = vunpack.c.l.b16 %v2043
        %v2381 = vunpack.c.l.b16 %v2044
        %v2382 = vunpack.c.l.b16 %v2045
        %v2383 = vunpack.c.l.b16 %v2046
        %v2384 = vunpack.c.l.b16 %v2047
        %v2385 = vunpack.c.l.b16 %v2048
        %v2386 = vunpack.c.l.b16 %v2049
        %v2387 = vunpack.c.l.b16 %v2050
        %v2388 = vunpack.c.l.b16 %v2051
        %v2389 = vunpack.c.l.b16 %v2052
        %v2390 = vunpack.c.l.b16 %v2053
        %v2391 = vunpack.c.l.b16 %v2054
        %v2392 = vunpack.c.l.b16 %v2055
        %v2393 = vunpack.c.l.b16 %v2056
        %v2394 = vunpack.c.l.b16 %v2057
        %v2395 = vunpack.c.l.b16 %v2058
        %v2396 = vunpack.c.l.b16 %v2059
        %v2397 = vunpack.c.l.b16 %v2060
        %v2398 = vunpack.c.l.b16 %v2061
        %v2399 = vunpack.c.l.b16 %v2062
        %v2400 = vunpack.c.l.b16 %v2063
        %v2401 = vunpack.c.l.b16 %v2064
        %v2402 = vunpack.c.l.b16 %v2065
        %v2403 = vunpack.c.l.b16 %v2066
        %v2404 = vunpack.c.l.b16 %v2067
        %v2405 = vunpack.c.l.b16 %v2068
        %v2406 = vunpack.c.l.b16 %v2069
        %v2407 = vunpack.c.l.b16 %v2070
        %v2408 = vunpack.c.l.b16 %v2071
        %v2409 = vunpack.c.l.b16 %v2072
        %v2410 = vunpack.c.l.b16 %v2073
        %v2411 = vunpack.c.l.b16 %v2074
        %v2412 = vunpack.c.l.b16 %v2075
        %v2413 = vunpack.c.l.b16 %v2076
        %v2414 = vunpack.c.l.b16 %v2077
        %v2415 = vunpack.c.l.b16 %v2078
        %v2416 = vunpack.c.l.b16 %v2079
        %v2417 = vunpack.c.l.b16 %v2080
        %v2418 = vunpack.c.l.b16 %v2081
        %v2419 = vunpack.c.l.b16 %v2082
        %v2420 = vunpack.c.l.b16 %v2083
        %v2421 = vunpack.c.l.b16 %v2084
        %v2422 = vunpack.c.l.b16 %v2085
        %v2423 = vunpack.c.l.b16 %v2086
        %v2424 = vunpack.c.l.b16 %v2087
        %v2425 = vunpack.c.l.b16 %v2088
        %v2426 = vunpack.c.l.b16 %v2089
        %v2427 = vunpack.c.l.b16 %v2090
        %v2428 = vunpack.c.l.b16 %v2091
        %v2429 = vunpack.c.l.b16 %v2092
        %v2430 = vunpack.c.l.b16 %v2093
        %v2431 = vunpack.c.l.b16 %v2094
        %v2432 = vunpack.c.l.b16 %v2095
        %v2433 = vunpack.c.l.b16 %v2096
        %v2434 = vunpack.c.l.b16 %v2097
        %v2435 = vunpack.c.l.b16 %v2098
        %v2436 = vunpack.c.l.b16 %v2099
        %v2437 = vunpack.c.l.b16 %v2100
        %v2438 = vunpack.c.l.b16 %v2101
        %v2439 = vunpack.c.l.b16 %v2102
        %v2440 = vunpack.c.l.b16 %v2103
        %v2441 = vunpack.c.l.b16 %v2104
        %v2442 = vunpack.c.l.b16 %v2105
        %v2443 = vunpack.c.l.b16 %v2106
        %v2444 = vunpack.c.l.b16 %v2107
        %v2445 = vunpack.c.l.b16 %v2108
        %v2446 = vunpack.c.l.b16 %v2109
        %v2447 = vunpack.c.l.b16 %v2110
        %v2448 = vunpack.c.l.b16 %v2111
        %v2449 = vunpack.c.l.b16 %v2112
        %v2450 = vunpack.c.l.b16 %v2113
        %v2451 = vunpack.c.l.b16 %v2114
        %v2452 = vunpack.c.l.b16 %v2115
        %v2453 = vunpack.c.l.b16 %v2116
        %v2454 = vunpack.c.l.b16 %v2117
        %v2455 = vunpack.c.l.b16 %v2118
        %v2456 = vunpack.c.l.b16 %v2119
        %v2457 = vunpack.c.l.b16 %v2120
        %v2458 = vunpack.c.l.b16 %v2121
        %v2459 = vunpack.c.l.b16 %v2122
        %v2460 = vunpack.c.l.b16 %v2123
        %v2461 = vunpack.c.l.b16 %v2124
        %v2462 = vunpack.c.l.b16 %v2125
        %v2463 = vunpack.c.l.b16 %v2126
        %v2464 = vunpack.c.l.b16 %v2127
        %v2465 = vunpack.c.l.b16 %v2128
        %v2466 = vunpack.c.l.b16 %v2129
        %v2467 = vunpack.c.l.b16 %v2130
        %v2468 = vunpack.c.l.b16 %v2131
        %v2469 = vunpack.c.l.b16 %v2132
        %v2470 = vunpack.c.l.b16 %v2133
        %v2471 = vunpack.c.l.b16 %v2134
        %v2472 = vunpack.c.l.b16 %v2135
        %v2473 = vunpack.c.l.b16 %v2136
        %v2474 = vunpack.c.l.b16 %v2137
        %v2475 = vunpack.c.l.b16 %v2138
        %v2476 = vunpack.c.l.b16 %v2139
        %v2477 = vunpack.c.l.b16 %v2140
        %v2478 = vunpack.c.l.b16 %v2141
        %v2479 = vunpack.c.l.b16 %v2142
        %v2480 = vunpack.c.l.b16 %v2143
        %v2481 = vunpack.c.l.b16 %v2144
        %v2482 = vunpack.c.l.b16 %v2145
        %v2483 = vpack.c.b16 %v2372, %v2371
        %v2484 = vpack.c.b16 %v2374, %v2373
        %v2485 = vpack.c.b16 %v2376, %v2375
        %v2486 = vpack.c.b16 %v2378, %v2377
        %v2487 = vpack.c.b16 %v2380, %v2379
        %v2488 = vpack.c.b16 %v2382, %v2381
        %v2489 = vpack.c.b16 %v2384, %v2383
        %v2490 = vpack.c.b16 %v2386, %v2385
        %v2491 = vpack.c.b16 %v2388, %v2387
        %v2492 = vpack.c.b16 %v2390, %v2389
        %v2493 = vpack.c.b16 %v2392, %v2391
        %v2494 = vpack.c.b16 %v2394, %v2393
        %v2495 = vpack.c.b16 %v2396, %v2395
        %v2496 = vpack.c.b16 %v2398, %v2397
        %v2497 = vpack.c.b16 %v2400, %v2399
        %v2498 = vpack.c.b16 %v2402, %v2401
        %v2499 = vpack.c.b16 %v2404, %v2403
        %v2500 = vpack.c.b16 %v2406, %v2405
        %v2501 = vpack.c.b16 %v2408, %v2407
        %v2502 = vpack.c.b16 %v2410, %v2409
        %v2503 = vpack.c.b16 %v2412, %v2411
        %v2504 = vpack.c.b16 %v2414, %v2413
        %v2505 = vpack.c.b16 %v2416, %v2415
        %v2506 = vpack.c.b16 %v2418, %v2417
        %v2507 = vpack.c.b16 %v2420, %v2419
        %v2508 = vpack.c.b16 %v2422, %v2421
        %v2509 = vpack.c.b16 %v2424, %v2423
        %v2510 = vpack.c.b16 %v2426, %v2425
        %v2511 = vpack.c.b16 %v2428, %v2427
        %v2512 = vpack.c.b16 %v2430, %v2429
        %v2513 = vpack.c.b16 %v2432, %v2431
        %v2514 = vpack.c.b16 %v2434, %v2433
        %v2515 = vpack.c.b16 %v2436, %v2435
        %v2516 = vpack.c.b16 %v2438, %v2437
        %v2517 = vpack.c.b16 %v2440, %v2439
        %v2518 = vpack.c.b16 %v2442, %v2441
        %v2519 = vpack.c.b16 %v2444, %v2443
        %v2520 = vpack.c.b16 %v2446, %v2445
        %v2521 = vpack.c.b16 %v2448, %v2447
        %v2522 = vpack.c.b16 %v2450, %v2449
        %v2523 = vpack.c.b16 %v2452, %v2451
        %v2524 = vpack.c.b16 %v2454, %v2453
        %v2525 = vpack.c.b16 %v2456, %v2455
        %v2526 = vpack.c.b16 %v2458, %v2457
        %v2527 = vpack.c.b16 %v2460, %v2459
        %v2528 = vpack.c.b16 %v2462, %v2461
        %v2529 = vpack.c.b16 %v2464, %v2463
        %v2530 = vpack.c.b16 %v2466, %v2465
        %v2531 = vpack.c.b16 %v2468, %v2467
        %v2532 = vpack.c.b16 %v2470, %v2469
        %v2533 = vpack.c.b16 %v2472, %v2471
        %v2534 = vpack.c.b16 %v2474, %v2473
        %v2535 = vpack.c.b16 %v2476, %v2475
        %v2536 = vpack.c.b16 %v2478, %v2477
        %v2537 = vpack.c.b16 %v2480, %v2479
        %v2538 = vpack.c.b16 %v2482, %v2481
        %2595 = vmatprep.subr.bf16.mxu0 0
        %2596 = vmatpush1.bf16.msra.mxu0 %v2483
        %2597 = vmatprep.subr.bf16.mxu0 0
        %2598 = vmatpush1.bf16.msra.mxu0 %v2484
        %2599 = vmatprep.subr.bf16.mxu0 0
        %2600 = vmatpush1.bf16.msra.mxu0 %v2485
        %2601 = vmatprep.subr.bf16.mxu0 0
        %2602 = vmatpush1.bf16.msra.mxu0 %v2486
        %2603 = vmatprep.subr.bf16.mxu0 0
        %2604 = vmatpush1.bf16.msra.mxu0 %v2487
        %2605 = vmatprep.subr.bf16.mxu0 0
        %2606 = vmatpush1.bf16.msra.mxu0 %v2488
        %2607 = vmatprep.subr.bf16.mxu0 0
        %2608 = vmatpush1.bf16.msra.mxu0 %v2489
        %2609 = vmatprep.subr.bf16.mxu0 0
        %2610 = vmatpush1.bf16.msra.mxu0 %v2490
        %2611 = vmatprep.subr.bf16.mxu0 0
        %2612 = vmatpush1.bf16.msra.mxu0 %v2491
        %2613 = vmatprep.subr.bf16.mxu0 0
        %2614 = vmatpush1.bf16.msra.mxu0 %v2492
        %2615 = vmatprep.subr.bf16.mxu0 0
        %2616 = vmatpush1.bf16.msra.mxu0 %v2493
        %2617 = vmatprep.subr.bf16.mxu0 0
        %2618 = vmatpush1.bf16.msra.mxu0 %v2494
        %2619 = vmatprep.subr.bf16.mxu0 0
        %2620 = vmatpush1.bf16.msra.mxu0 %v2495
        %2621 = vmatprep.subr.bf16.mxu0 0
        %2622 = vmatpush1.bf16.msra.mxu0 %v2496
        %2623 = vmatprep.subr.bf16.mxu0 0
        %2624 = vmatpush1.bf16.msra.mxu0 %v2497
        %2625 = vmatprep.subr.bf16.mxu0 0
        %2626 = vmatpush1.bf16.msra.mxu0 %v2498
        %2627 = vmatprep.mubr.bf16.mxu0 %v2174
        %2628 = vmatmul.mubr.bf16.gmra.mrb[0].mxu0 %v2157
        %v2629 = vpop.f32.mrb[0].mxu0
        %v2630 = vadd.f32 0.0, %v2629
        %v2631 = vpop.f32.mrb[0].mxu0
        %v2632 = vpop.f32.mrb[0].mxu0
        %v2633 = vadd.f32 0.0, %v2632
        %v2634 = vpop.f32.mrb[0].mxu0
        %2635 = vdwg.mxu0
        %2636 = vmatprep.subr.bf16.mxu0 0
        %2637 = vmatpush1.bf16.msra.mxu0 %v2499
        %2638 = vmatprep.subr.bf16.mxu0 0
        %2639 = vmatpush1.bf16.msra.mxu0 %v2500
        %2640 = vmatprep.subr.bf16.mxu0 0
        %2641 = vmatpush1.bf16.msra.mxu0 %v2501
        %2642 = vmatprep.subr.bf16.mxu0 0
        %2643 = vmatpush1.bf16.msra.mxu0 %v2502
        %2644 = vmatprep.subr.bf16.mxu0 0
        %2645 = vmatpush1.bf16.msra.mxu0 %v2503
        %2646 = vmatprep.subr.bf16.mxu0 0
        %2647 = vmatpush1.bf16.msra.mxu0 %v2504
        %2648 = vmatprep.subr.bf16.mxu0 0
        %2649 = vmatpush1.bf16.msra.mxu0 %v2505
        %2650 = vmatprep.subr.bf16.mxu0 0
        %2651 = vmatpush1.bf16.msra.mxu0 %v2506
        %2652 = vmatprep.subr.bf16.mxu0 0
        %2653 = vmatpush1.bf16.msra.mxu0 %v2507
        %2654 = vmatprep.subr.bf16.mxu0 0
        %2655 = vmatpush1.bf16.msra.mxu0 %v2508
        %2656 = vmatprep.subr.bf16.mxu0 0
        %2657 = vmatpush1.bf16.msra.mxu0 %v2509
        %2658 = vmatprep.subr.bf16.mxu0 0
        %2659 = vmatpush1.bf16.msra.mxu0 %v2510
        %2660 = vmatprep.subr.bf16.mxu0 0
        %2661 = vmatpush1.bf16.msra.mxu0 %v2511
        %2662 = vmatprep.subr.bf16.mxu0 0
        %2663 = vmatpush1.bf16.msra.mxu0 %v2512
        %2664 = vmatprep.subr.bf16.mxu0 0
        %2665 = vmatpush1.bf16.msra.mxu0 %v2513
        %2666 = vmatprep.subr.bf16.mxu0 0
        %2667 = vmatpush1.bf16.msra.mxu0 %v2514
        %2668 = vmatprep.mubr.bf16.mxu0 %v2200
        %2669 = vmatmul.mubr.bf16.gmra.mrb[0].mxu0 %v2191
        %v2670 = vpop.f32.mrb[0].mxu0
        %v2671 = vadd.f32 %v2630, %v2670
        %v2672 = vpop.f32.mrb[0].mxu0
        %v2673 = vpop.f32.mrb[0].mxu0
        %v2674 = vadd.f32 %v2633, %v2673
        %v2675 = vpop.f32.mrb[0].mxu0
        %2676 = vdwg.mxu0
        %2677 = vmatprep.subr.bf16.mxu0 0
        %2678 = vmatpush1.bf16.msra.mxu0 %v2515
        %2679 = vmatprep.subr.bf16.mxu0 0
        %2680 = vmatpush1.bf16.msra.mxu0 %v2516
        %2681 = vmatprep.subr.bf16.mxu0 0
        %2682 = vmatpush1.bf16.msra.mxu0 %v2517
        %2683 = vmatprep.subr.bf16.mxu0 0
        %2684 = vmatpush1.bf16.msra.mxu0 %v2518
        %2685 = vmatprep.subr.bf16.mxu0 0
        %2686 = vmatpush1.bf16.msra.mxu0 %v2519
        %2687 = vmatprep.subr.bf16.mxu0 0
        %2688 = vmatpush1.bf16.msra.mxu0 %v2520
        %2689 = vmatprep.subr.bf16.mxu0 0
        %2690 = vmatpush1.bf16.msra.mxu0 %v2521
        %2691 = vmatprep.subr.bf16.mxu0 0
        %2692 = vmatpush1.bf16.msra.mxu0 %v2522
        %2693 = vmatprep.subr.bf16.mxu0 0
        %2694 = vmatpush1.bf16.msra.mxu0 %v2523
        %2695 = vmatprep.subr.bf16.mxu0 0
        %2696 = vmatpush1.bf16.msra.mxu0 %v2524
        %2697 = vmatprep.subr.bf16.mxu0 0
        %2698 = vmatpush1.bf16.msra.mxu0 %v2525
        %2699 = vmatprep.subr.bf16.mxu0 0
        %2700 = vmatpush1.bf16.msra.mxu0 %v2526
        %2701 = vmatprep.subr.bf16.mxu0 0
        %2702 = vmatpush1.bf16.msra.mxu0 %v2527
        %2703 = vmatprep.subr.bf16.mxu0 0
        %2704 = vmatpush1.bf16.msra.mxu0 %v2528
        %2705 = vmatprep.subr.bf16.mxu0 0
        %2706 = vmatpush1.bf16.msra.mxu0 %v2529
        %2707 = vmatprep.subr.bf16.mxu0 0
        %2708 = vmatpush1.bf16.msra.mxu0 %v2530
        %2709 = vmatprep.mubr.bf16.mxu0 %v2234
        %2710 = vmatmul.mubr.bf16.gmra.mrb[0].mxu0 %v2217
        %v2711 = vpop.f32.mrb[0].mxu0
        %v2712 = vadd.f32 %v2671, %v2711
        %v2713 = vpop.f32.mrb[0].mxu0
        %v2714 = vpop.f32.mrb[0].mxu0
        %v2715 = vadd.f32 %v2674, %v2714
        %v2716 = vpop.f32.mrb[0].mxu0
        %2717 = vdwg.mxu0
        %2718 = vmatprep.subr.bf16.mxu0 0
        %2719 = vmatpush1.bf16.msra.mxu0 %v2531
        %2720 = vmatprep.subr.bf16.mxu0 0
        %2721 = vmatpush1.bf16.msra.mxu0 %v2532
        %2722 = vmatprep.subr.bf16.mxu0 0
        %2723 = vmatpush1.bf16.msra.mxu0 %v2533
        %2724 = vmatprep.subr.bf16.mxu0 0
        %2725 = vmatpush1.bf16.msra.mxu0 %v2534
        %2726 = vmatprep.subr.bf16.mxu0 0
        %2727 = vmatpush1.bf16.msra.mxu0 %v2535
        %2728 = vmatprep.subr.bf16.mxu0 0
        %2729 = vmatpush1.bf16.msra.mxu0 %v2536
        %2730 = vmatprep.subr.bf16.mxu0 0
        %2731 = vmatpush1.bf16.msra.mxu0 %v2537
        %2732 = vmatprep.subr.bf16.mxu0 0
        %2733 = vmatpush1.bf16.msra.mxu0 %v2538
        %2734 = vmatprep.subr.bf16.mxu0 0
        %2735 = vmatpush1.bf16.msra.mxu0 0
        %2736 = vmatprep.subr.bf16.mxu0 0
        %2737 = vmatpush1.bf16.msra.mxu0 0
        %2738 = vmatprep.subr.bf16.mxu0 0
        %2739 = vmatpush1.bf16.msra.mxu0 0
        %2740 = vmatprep.subr.bf16.mxu0 0
        %2741 = vmatpush1.bf16.msra.mxu0 0
        %2742 = vmatprep.subr.bf16.mxu0 0
        %2743 = vmatpush1.bf16.msra.mxu0 0
        %2744 = vmatprep.subr.bf16.mxu0 0
        %2745 = vmatpush1.bf16.msra.mxu0 0
        %2746 = vmatprep.subr.bf16.mxu0 0
        %2747 = vmatpush1.bf16.msra.mxu0 0
        %2748 = vmatprep.subr.bf16.mxu0 0
        %2749 = vmatpush1.bf16.msra.mxu0 0
        %2750 = vmatprep.mubr.bf16.mxu0 0
        %2751 = vmatmul.mubr.bf16.gmra.mrb[0].mxu0 %v2251
        %v2752 = vpop.f32.mrb[0].mxu0
        %v2753 = vadd.f32 %v2712, %v2752
        %v2754 = vpop.f32.mrb[0].mxu0
        %v2755 = vpop.f32.mrb[0].mxu0
        %v2756 = vadd.f32 %v2715, %v2755
        %v2757 = vpop.f32.mrb[0].mxu0
        %2758 = vdwg.mxu0
        %v2759 = vadd.f32 %v412, %v2753
        %v2760 = vadd.f32 %v413, %v2756
        %v2761 = vld [vmem:[%s8] sm:$0x1]
        %v2763 = vlaneseq
        %v2764 = vshrl.u32 %v2763, 7
        %v2765 = vsub.s32 0, %v2764
        %v2766 = vrot.slane %v2761, %v2765
        %v2768 = vadd.f32 %v2759, %v2766
        %v2769 = vadd.f32 %v2760, %v2766
        %2770 = vst [vmem:[%s408] sm:$0xff] %v2768
        %2771 = vst [vmem:[%s408 + $0x8] sm:$0xff] %v2769
        %s2772 = sand.u32 %s230, 1
        %s2773 = scalar_lea.sflag [#allocation5], %s2772
        %s2774 = sand.u32 %s230, 1
        %s2775 = smul.addr %s2774, 16
        %s2776 = scalar_lea.vmem [#allocation12], %s2775
        // Predicated region
        $region77: #{tpu_custom_call.1} parent=55 // pred_check
          %p2777 = pneg %p240
        $region78: #{tpu_custom_call.1} parent=55 // pred_check_branch
          %2779 = sbr.rel (%p2777) target = $region80
        $region79: #{tpu_custom_call.1} parent=55 // pred_region
          %s2781 = ssub.s32 256, 256
          %2782 = vsyncadd %s2773, %s2781
          %s2783 = smul.addr %s28, 2
          %s2784 = smul.addr %s2783, 128
          %s2785 = scalar_lea.hbm %s9, %s2784
          %s2786 = sshll.u32 %s2776, 4
          %s2787 = int_to_ptr.vmem [resolvable:$true] %s2786
          %2792 = dma.vmem_to_hbm [thread:$0]  %s2787, 256, %s2785, %s2773, 128, 128, 8
        $region80: #{tpu_custom_call.1} parent=55 // pred_fallthru
          _
      $region56: #{tpu_custom_call.1} parent=5 // pred_fallthru
        _
      %p2793 = scmp.le.s32.totalorder 2, %s23
      // Predicated region
      $region81: #{tpu_custom_call.1} parent=5 // pred_check
        %p2794 = pneg %p2793
      $region82: #{tpu_custom_call.1} parent=5 // pred_check_branch
        %2796 = sbr.rel (%p2794) target = $region84
      $region83: #{tpu_custom_call.1} parent=5 // pred_region
        %s2797 = ssub.s32 %s23, 2
        // Predicated region
        $region85: #{tpu_custom_call.1} parent=83 // pred_check
          %p2798 = pneg %p246
        $region86: #{tpu_custom_call.1} parent=83 // pred_check_branch
          %2800 = sbr.rel (%p2798) target = $region88
        $region87: #{tpu_custom_call.1} parent=83 // pred_region
          %s2801 = sand.u32 %s231, 1
          %s2802 = scalar_lea.sflag [#allocation5], %s2801
          %s2803 = sand.u32 %s231, 1
          %s2804 = smul.addr %s2803, 16
          %s2805 = scalar_lea.vmem [#allocation12], %s2804
          %2806 = dma.done %s2802, 256
        $region88: #{tpu_custom_call.1} parent=83 // pred_fallthru
          _
      $region84: #{tpu_custom_call.1} parent=5 // pred_fallthru
        _
    $region6: #{tpu_custom_call.1} parent=1 // loop_footer
      %s27 = sadd.s32 1, %s23
    $region7: #{tpu_custom_call.1} parent=1 // loop_footer_branch
      %22 = sbr.rel target = $region3
    $region8: #{tpu_custom_call.1} parent=1 // loop_exit
      _
    %2807 = vsyncpa [#allocation4], 1
    %s2808 = scalar_lea.sflag [#allocation4], 1
    %2809 = vsyncpa %s2808, 1
    %2810 = vsyncpa [#allocation7], 1
    %2811 = vsyncpa [#allocation10], 1
    %2812 = vsyncpa [#allocation5], 1
    %s2813 = scalar_lea.sflag [#allocation5], 1
    %2814 = vsyncpa %s2813, 1

// kernel: tpu_custom_call.1
$region0: #{tpu_custom_call.1}
  #allocation0 [shape = 'u32[]', space=smem, size = 0x4, offset = 0x4, fixed_abs, tag = 'smem constant byte address 0x4 - core index']
  #allocation1 [shape = 'u32[144,128]{1,0:T(1,128)}', space=vmem, size = 0x12000, scoped, tag = 'internal scratch']
  #allocation2 [shape = 'bf16[1,48,128]{2,1,0:T(16,128)(2,1)}', space=vmem, size = 0x3000, scoped, tag = 'scratch operand']
  %s0 = inlined_call_operand.hbm [shape: f32[2,16,128], index: 0, kind: input, shape index: {}]
  %s1 = inlined_call_operand.hbm [shape: bf16[896,128], index: 1, kind: input, shape index: {}]
  %s2 = inlined_call_operand.vmem [shape: f32[1,128], index: 2, kind: input, shape index: {}]
  %s3 = inlined_call_operand.hbm [shape: bf16[128,768], index: 3, kind: input, shape index: {}]
  %s4 = inlined_call_operand.vmem [shape: f32[1,768], index: 4, kind: input, shape index: {}]
  %s5 = inlined_call_operand.hbm [shape: bf16[384,128], index: 5, kind: input, shape index: {}]
  %s6 = inlined_call_operand.vmem [shape: f32[1,128], index: 6, kind: input, shape index: {}]
  %s7 = inlined_call_operand.hbm [shape: bf16[896,128], index: 7, kind: input, shape index: {}]
  %s8 = inlined_call_operand.vmem [shape: f32[1,128], index: 8, kind: input, shape index: {}]
  %s9 = inlined_call_operand.hbm [shape: f32[2,16,128], index: 9, kind: output, shape index: {}]
  %s10 = sld [smem:[#allocation0]]
  $region89: #{tpu_custom_call.1} parent=0
    _
  %s12 = ssub.s32 1, %s10
  %s13 = scalar_select 0, %s12, %s10
  $region1: #{tpu_custom_call.1} parent=0
    #allocation3 [shape = 'u8[16384]{0}', space=vmem, size = 0x4000, scoped, tag = 'input window, operand 0']
    #allocation4 [shape = 's32[2]{0}', space=sflag, size = 0x8, scoped, tag = 'scoped memory for tpu_custom_call.1']
    #allocation5 [shape = 's32[2]{0}', space=sflag, size = 0x8, scoped, tag = 'scoped memory for tpu_custom_call.1']
    #allocation6 [shape = 'u8[229376]{0}', space=vmem, size = 0x38000, scoped, tag = 'input window, operand 1, single buffered']
    #allocation7 [shape = 's32[1]{0}', space=sflag, size = 0x4, scoped, tag = 'scoped memory for tpu_custom_call.1']
    #allocation8 [shape = 'u8[196608]{0}', space=vmem, size = 0x30000, scoped, tag = 'input window, operand 3, single buffered']
    #allocation9 [shape = 'u8[98304]{0}', space=vmem, size = 0x18000, scoped, tag = 'input window, operand 5, single buffered']
    #allocation10 [shape = 's32[1]{0}', space=sflag, size = 0x4, scoped, tag = 'scoped memory for tpu_custom_call.1']
    #allocation11 [shape = 'u8[229376]{0}', space=vmem, size = 0x38000, scoped, tag = 'input window, operand 7, single buffered']
    #allocation12 [shape = 'u8[16384]{0}', space=vmem, size = 0x4000, scoped, tag = 'output window, operand 0']
    %14 = vsyncpa [#allocation4], 0
    %s15 = scalar_lea.sflag [#allocation4], 1
    %16 = vsyncpa %s15, 0
    %17 = vsyncpa [#allocation7], 0
    %18 = vsyncpa [#allocation10], 0
    %19 = vsyncpa [#allocation5], 0
    %s20 = scalar_lea.sflag [#allocation5], 1
    %21 = vsyncpa %s20, 0
    loop: start=0, step=1, limit=4
    $region2: #{tpu_custom_call.1} parent=1 // loop_pre_header
      _
    $region3: #{tpu_custom_call.1} parent=1 // loop_header
      %s23 = sphi 0, %s27
      %p24 = scmp.ge.s32.totalorder %s23, 4
      %s33 = sphi 0, %s35
      %s36 = sphi 0, %s33
      %s37 = sphi 0, %s36
      %s53 = sphi 0, %s37
      %s57 = sphi 0, %s57
      %s59 = sphi 0, %s57
      %s60 = sphi 0, %s59
      %s74 = sphi 0, %s60
      %s78 = sphi 0, %s78
      %s80 = sphi 0, %s78
      %s81 = sphi 0, %s80
      %s95 = sphi 0, %s81
      %s99 = sphi 0, %s99
      %s101 = sphi 0, %s99
      %s102 = sphi 0, %s101
      %s116 = sphi 0, %s102
      %s120 = sphi 0, %s120
      %s122 = sphi 0, %s120
      %s123 = sphi 0, %s122
      %s137 = sphi 0, %s123
      %s141 = sphi 0, %s141
      %s143 = sphi 0, %s141
      %s144 = sphi 0, %s143
      %s158 = sphi 0, %s144
      %s162 = sphi 0, %s162
      %s164 = sphi 0, %s162
      %s165 = sphi 0, %s164
      %s179 = sphi 0, %s165
      %s183 = sphi 0, %s183
      %s185 = sphi 0, %s183
      %s186 = sphi 0, %s185
      %s200 = sphi 0, %s186
      %s204 = sphi 0, %s204
      %s206 = sphi 0, %s204
      %s207 = sphi 0, %s206
      %s221 = sphi 0, %s207
      %s227 = sphi 0, %s229
      %s230 = sphi 0, %s227
      %s231 = sphi 0, %s230
      %s247 = sphi 0, %s231
    $region4: #{tpu_custom_call.1} parent=1 // loop_header_branch
      %26 = sbr.rel (%p24) target = $region8
    $region5: #{tpu_custom_call.1} parent=1 // loop_body
      %s28 = ssub.s32 %s23, 1
      %s29 = ssub.s32 %s23, 2
      %s30 = sadd.s32 %s23, 1
      %s31 = ssub.s32 %s23, %s30
      %p32 = scmp.eq.s32.totalorder %s31, 0
      %s34 = sadd.s32 %s33, 1
      %s35 = scalar_select %p32, %s33, %s34
      %p38 = pneg %p32
      %p39 = scmp.eq.s32.totalorder %s23, 1
      %p40 = por %p38, %p39
      %p41 = scmp.ne.s32.totalorder %s33, %s36
      %p42 = scmp.eq.s32.totalorder %s23, 0
      %p43 = por %p41, %p42
      %p44 = scmp.ne.s32.totalorder %s33, %s36
      %p45 = scmp.eq.s32.totalorder %s28, 1
      %p46 = por %p44, %p45
      %p47 = scmp.ne.s32.totalorder %s36, %s37
      %p48 = scmp.eq.s32.totalorder %s28, 0
      %p49 = por %p47, %p48
      %p50 = scmp.ne.s32.totalorder %s36, %s37
      %p51 = scmp.eq.s32.totalorder %s29, 1
      %p52 = por %p50, %p51
      %p54 = scmp.ne.s32.totalorder %s37, %s53
      %p55 = scmp.eq.s32.totalorder %s29, 0
      %p56 = por %p54, %p55
      %s58 = sadd.s32 %s57, 1
      %p61 = scmp.eq.s32.totalorder %s23, 1
      %p62 = scmp.ne.s32.totalorder %s57, %s59
      %p63 = scmp.eq.s32.totalorder %s23, 0
      %p64 = por %p62, %p63
      %p65 = scmp.ne.s32.totalorder %s57, %s59
      %p66 = scmp.eq.s32.totalorder %s28, 1
      %p67 = por %p65, %p66
      %p68 = scmp.ne.s32.totalorder %s59, %s60
      %p69 = scmp.eq.s32.totalorder %s28, 0
      %p70 = por %p68, %p69
      %p71 = scmp.ne.s32.totalorder %s59, %s60
      %p72 = scmp.eq.s32.totalorder %s29, 1
      %p73 = por %p71, %p72
      %p75 = scmp.ne.s32.totalorder %s60, %s74
      %p76 = scmp.eq.s32.totalorder %s29, 0
      %p77 = por %p75, %p76
      %s79 = sadd.s32 %s78, 1
      %p82 = scmp.eq.s32.totalorder %s23, 1
      %p83 = scmp.ne.s32.totalorder %s78, %s80
      %p84 = scmp.eq.s32.totalorder %s23, 0
      %p85 = por %p83, %p84
      %p86 = scmp.ne.s32.totalorder %s78, %s80
      %p87 = scmp.eq.s32.totalorder %s28, 1
      %p88 = por %p86, %p87
      %p89 = scmp.ne.s32.totalorder %s80, %s81
      %p90 = scmp.eq.s32.totalorder %s28, 0
      %p91 = por %p89, %p90
      %p92 = scmp.ne.s32.totalorder %s80, %s81
      %p93 = scmp.eq.s32.totalorder %s29, 1
      %p94 = por %p92, %p93
      %p96 = scmp.ne.s32.totalorder %s81, %s95
      %p97 = scmp.eq.s32.totalorder %s29, 0
      %p98 = por %p96, %p97
      %s100 = sadd.s32 %s99, 1
      %p103 = scmp.eq.s32.totalorder %s23, 1
      %p104 = scmp.ne.s32.totalorder %s99, %s101
      %p105 = scmp.eq.s32.totalorder %s23, 0
      %p106 = por %p104, %p105
      %p107 = scmp.ne.s32.totalorder %s99, %s101
      %p108 = scmp.eq.s32.totalorder %s28, 1
      %p109 = por %p107, %p108
      %p110 = scmp.ne.s32.totalorder %s101, %s102
      %p111 = scmp.eq.s32.totalorder %s28, 0
      %p112 = por %p110, %p111
      %p113 = scmp.ne.s32.totalorder %s101, %s102
      %p114 = scmp.eq.s32.totalorder %s29, 1
      %p115 = por %p113, %p114
      %p117 = scmp.ne.s32.totalorder %s102, %s116
      %p118 = scmp.eq.s32.totalorder %s29, 0
      %p119 = por %p117, %p118
      %s121 = sadd.s32 %s120, 1
      %p124 = scmp.eq.s32.totalorder %s23, 1
      %p125 = scmp.ne.s32.totalorder %s120, %s122
      %p126 = scmp.eq.s32.totalorder %s23, 0
      %p127 = por %p125, %p126
      %p128 = scmp.ne.s32.totalorder %s120, %s122
      %p129 = scmp.eq.s32.totalorder %s28, 1
      %p130 = por %p128, %p129
      %p131 = scmp.ne.s32.totalorder %s122, %s123
      %p132 = scmp.eq.s32.totalorder %s28, 0
      %p133 = por %p131, %p132
      %p134 = scmp.ne.s32.totalorder %s122, %s123
      %p135 = scmp.eq.s32.totalorder %s29, 1
      %p136 = por %p134, %p135
      %p138 = scmp.ne.s32.totalorder %s123, %s137
      %p139 = scmp.eq.s32.totalorder %s29, 0
      %p140 = por %p138, %p139
      %s142 = sadd.s32 %s141, 1
      %p145 = scmp.eq.s32.totalorder %s23, 1
      %p146 = scmp.ne.s32.totalorder %s141, %s143
      %p147 = scmp.eq.s32.totalorder %s23, 0
      %p148 = por %p146, %p147
      %p149 = scmp.ne.s32.totalorder %s141, %s143
      %p150 = scmp.eq.s32.totalorder %s28, 1
      %p151 = por %p149, %p150
      %p152 = scmp.ne.s32.totalorder %s143, %s144
      %p153 = scmp.eq.s32.totalorder %s28, 0
      %p154 = por %p152, %p153
      %p155 = scmp.ne.s32.totalorder %s143, %s144
      %p156 = scmp.eq.s32.totalorder %s29, 1
      %p157 = por %p155, %p156
      %p159 = scmp.ne.s32.totalorder %s144, %s158
      %p160 = scmp.eq.s32.totalorder %s29, 0
      %p161 = por %p159, %p160
      %s163 = sadd.s32 %s162, 1
      %p166 = scmp.eq.s32.totalorder %s23, 1
      %p167 = scmp.ne.s32.totalorder %s162, %s164
      %p168 = scmp.eq.s32.totalorder %s23, 0
      %p169 = por %p167, %p168
      %p170 = scmp.ne.s32.totalorder %s162, %s164
      %p171 = scmp.eq.s32.totalorder %s28, 1
      %p172 = por %p170, %p171
      %p173 = scmp.ne.s32.totalorder %s164, %s165
      %p174 = scmp.eq.s32.totalorder %s28, 0
      %p175 = por %p173, %p174
      %p176 = scmp.ne.s32.totalorder %s164, %s165
      %p177 = scmp.eq.s32.totalorder %s29, 1
      %p178 = por %p176, %p177
      %p180 = scmp.ne.s32.totalorder %s165, %s179
      %p181 = scmp.eq.s32.totalorder %s29, 0
      %p182 = por %p180, %p181
      %s184 = sadd.s32 %s183, 1
      %p187 = scmp.eq.s32.totalorder %s23, 1
      %p188 = scmp.ne.s32.totalorder %s183, %s185
      %p189 = scmp.eq.s32.totalorder %s23, 0
      %p190 = por %p188, %p189
      %p191 = scmp.ne.s32.totalorder %s183, %s185
      %p192 = scmp.eq.s32.totalorder %s28, 1
      %p193 = por %p191, %p192
      %p194 = scmp.ne.s32.totalorder %s185, %s186
      %p195 = scmp.eq.s32.totalorder %s28, 0
      %p196 = por %p194, %p195
      %p197 = scmp.ne.s32.totalorder %s185, %s186
      %p198 = scmp.eq.s32.totalorder %s29, 1
      %p199 = por %p197, %p198
      %p201 = scmp.ne.s32.totalorder %s186, %s200
      %p202 = scmp.eq.s32.totalorder %s29, 0
      %p203 = por %p201, %p202
      %s205 = sadd.s32 %s204, 1
      %p208 = scmp.eq.s32.totalorder %s23, 1
      %p209 = scmp.ne.s32.totalorder %s204, %s206
      %p210 = scmp.eq.s32.totalorder %s23, 0
      %p211 = por %p209, %p210
      %p212 = scmp.ne.s32.totalorder %s204, %s206
      %p213 = scmp.eq.s32.totalorder %s28, 1
      %p214 = por %p212, %p213
      %p215 = scmp.ne.s32.totalorder %s206, %s207
      %p216 = scmp.eq.s32.totalorder %s28, 0
      %p217 = por %p215, %p216
      %p218 = scmp.ne.s32.totalorder %s206, %s207
      %p219 = scmp.eq.s32.totalorder %s29, 1
      %p220 = por %p218, %p219
      %p222 = scmp.ne.s32.totalorder %s207, %s221
      %p223 = scmp.eq.s32.totalorder %s29, 0
      %p224 = por %p222, %p223
      %s225 = ssub.s32 %s23, %s30
      %p226 = scmp.eq.s32.totalorder %s225, 0
      %s228 = sadd.s32 %s227, 1
      %s229 = scalar_select %p226, %s227, %s228
      %p232 = pneg %p226
      %p233 = scmp.eq.s32.totalorder %s23, 1
      %p234 = por %p232, %p233
      %p235 = scmp.ne.s32.totalorder %s227, %s230
      %p236 = scmp.eq.s32.totalorder %s23, 0
      %p237 = por %p235, %p236
      %p238 = scmp.ne.s32.totalorder %s227, %s230
      %p239 = scmp.eq.s32.totalorder %s28, 1
      %p240 = por %p238, %p239
      %p241 = scmp.ne.s32.totalorder %s230, %s231
      %p242 = scmp.eq.s32.totalorder %s28, 0
      %p243 = por %p241, %p242
      %p244 = scmp.ne.s32.totalorder %s230, %s231
      %p245 = scmp.eq.s32.totalorder %s29, 1
      %p246 = por %p244, %p245
      %p248 = scmp.ne.s32.totalorder %s231, %s247
      %p249 = scmp.eq.s32.totalorder %s29, 0
      %p250 = por %p248, %p249
      %p251 = scmp.le.s32.totalorder 1, %s23
      %p252 = scmp.lt.s32.totalorder %s23, 3
      %p253 = pnand %p251, %p252
      %p254 = pneg %p253
      // Predicated region
      $region9: #{tpu_custom_call.1} parent=5 // pred_check
        _
      $region10: #{tpu_custom_call.1} parent=5 // pred_check_branch
        %256 = sbr.rel (%p253) target = $region12
      $region11: #{tpu_custom_call.1} parent=5 // pred_region
        %s257 = ssub.s32 %s23, 1
        // Predicated region
        $region13: #{tpu_custom_call.1} parent=11 // pred_check
          %p258 = pneg %p70
        $region14: #{tpu_custom_call.1} parent=11 // pred_check_branch
          %260 = sbr.rel (%p258) target = $region16
        $region15: #{tpu_custom_call.1} parent=11 // pred_region
          %s262 = ssub.s32 7168, 7168
          %263 = vsyncadd [#allocation7], %s262
          %s264 = sshll.u32 [#allocation6], 4
          %s265 = int_to_ptr.vmem [resolvable:$true] %s264
          %270 = dma.hbm_to_vmem [thread:$0]  %s1, 7168, %s265, [#allocation7], 64, 64, 4
        $region16: #{tpu_custom_call.1} parent=11 // pred_fallthru
          _
        // Predicated region
        $region17: #{tpu_custom_call.1} parent=11 // pred_check
          %p271 = pneg %p91
        $region18: #{tpu_custom_call.1} parent=11 // pred_check_branch
          %273 = sbr.rel (%p271) target = $region20
        $region19: #{tpu_custom_call.1} parent=11 // pred_region
          _
        $region20: #{tpu_custom_call.1} parent=11 // pred_fallthru
          _
        // Predicated region
        $region21: #{tpu_custom_call.1} parent=11 // pred_check
          %p274 = pneg %p112
        $region22: #{tpu_custom_call.1} parent=11 // pred_check_branch
          %276 = sbr.rel (%p274) target = $region24
        $region23: #{tpu_custom_call.1} parent=11 // pred_region
          %s278 = ssub.s32 6144, 6144
          %279 = vsyncadd [#allocation7], %s278
          %s280 = sshll.u32 [#allocation8], 4
          %s281 = int_to_ptr.vmem [resolvable:$true] %s280
          %286 = dma.hbm_to_vmem [thread:$0]  %s3, 6144, %s281, [#allocation7], 384, 384, 24
        $region24: #{tpu_custom_call.1} parent=11 // pred_fallthru
          _
        // Predicated region
        $region25: #{tpu_custom_call.1} parent=11 // pred_check
          %p287 = pneg %p133
        $region26: #{tpu_custom_call.1} parent=11 // pred_check_branch
          %289 = sbr.rel (%p287) target = $region28
        $region27: #{tpu_custom_call.1} parent=11 // pred_region
          _
        $region28: #{tpu_custom_call.1} parent=11 // pred_fallthru
          _
        // Predicated region
        $region29: #{tpu_custom_call.1} parent=11 // pred_check
          %p290 = pneg %p154
        $region30: #{tpu_custom_call.1} parent=11 // pred_check_branch
          %292 = sbr.rel (%p290) target = $region32
        $region31: #{tpu_custom_call.1} parent=11 // pred_region
          %s294 = ssub.s32 3072, 3072
          %295 = vsyncadd [#allocation10], %s294
          %s296 = sshll.u32 [#allocation9], 4
          %s297 = int_to_ptr.vmem [resolvable:$true] %s296
          %302 = dma.hbm_to_vmem [thread:$0]  %s5, 3072, %s297, [#allocation10], 64, 64, 4
        $region32: #{tpu_custom_call.1} parent=11 // pred_fallthru
          _
        // Predicated region
        $region33: #{tpu_custom_call.1} parent=11 // pred_check
          %p303 = pneg %p175
        $region34: #{tpu_custom_call.1} parent=11 // pred_check_branch
          %305 = sbr.rel (%p303) target = $region36
        $region35: #{tpu_custom_call.1} parent=11 // pred_region
          _
        $region36: #{tpu_custom_call.1} parent=11 // pred_fallthru
          _
        // Predicated region
        $region37: #{tpu_custom_call.1} parent=11 // pred_check
          %p306 = pneg %p196
        $region38: #{tpu_custom_call.1} parent=11 // pred_check_branch
          %308 = sbr.rel (%p306) target = $region40
        $region39: #{tpu_custom_call.1} parent=11 // pred_region
          %s310 = ssub.s32 7168, 7168
          %311 = vsyncadd [#allocation10], %s310
          %s312 = sshll.u32 [#allocation11], 4
          %s313 = int_to_ptr.vmem [resolvable:$true] %s312
          %318 = dma.hbm_to_vmem [thread:$0]  %s7, 7168, %s313, [#allocation10], 64, 64, 4
        $region40: #{tpu_custom_call.1} parent=11 // pred_fallthru
          _
        // Predicated region
        $region41: #{tpu_custom_call.1} parent=11 // pred_check
          %p319 = pneg %p217
        $region42: #{tpu_custom_call.1} parent=11 // pred_check_branch
          %321 = sbr.rel (%p319) target = $region44
        $region43: #{tpu_custom_call.1} parent=11 // pred_region
          _
        $region44: #{tpu_custom_call.1} parent=11 // pred_fallthru
          _
      $region12: #{tpu_custom_call.1} parent=5 // pred_fallthru
        _
      %p322 = scmp.lt.s32.totalorder %s23, 2
      // Predicated region
      $region45: #{tpu_custom_call.1} parent=5 // pred_check
        %p323 = pneg %p322
      $region46: #{tpu_custom_call.1} parent=5 // pred_check_branch
        %325 = sbr.rel (%p323) target = $region48
      $region47: #{tpu_custom_call.1} parent=5 // pred_region
        // Predicated region
        $region49: #{tpu_custom_call.1} parent=47 // pred_check
          %p326 = pneg %p43
        $region50: #{tpu_custom_call.1} parent=47 // pred_check_branch
          %328 = sbr.rel (%p326) target = $region52
        $region51: #{tpu_custom_call.1} parent=47 // pred_region
          %s329 = sand.u32 %s33, 1
          %s330 = scalar_lea.sflag [#allocation4], %s329
          %s331 = sand.u32 %s33, 1
          %s332 = smul.addr %s331, 16
          %s333 = scalar_lea.vmem [#allocation3], %s332
          %s335 = ssub.s32 256, 256
          %336 = vsyncadd %s330, %s335
          %s337 = smul.addr %s23, 2
          %s338 = smul.addr %s337, 128
          %s339 = scalar_lea.hbm %s0, %s338
          %s340 = sshll.u32 %s333, 4
          %s341 = int_to_ptr.vmem [resolvable:$true] %s340
          %346 = dma.hbm_to_vmem [thread:$0]  %s339, 256, %s341, %s330, 128, 128, 8
        $region52: #{tpu_custom_call.1} parent=47 // pred_fallthru
          _
      $region48: #{tpu_custom_call.1} parent=5 // pred_fallthru
        _
      %p347 = scmp.le.s32.totalorder 1, %s23
      %p348 = scmp.lt.s32.totalorder %s23, 3
      %p349 = pnand %p347, %p348
      %p350 = pneg %p349
      // Predicated region
      $region53: #{tpu_custom_call.1} parent=5 // pred_check
        _
      $region54: #{tpu_custom_call.1} parent=5 // pred_check_branch
        %352 = sbr.rel (%p349) target = $region56
      $region55: #{tpu_custom_call.1} parent=5 // pred_region
        %s353 = ssub.s32 %s23, 1
        %s354 = sand.u32 %s36, 1
        %s355 = scalar_lea.sflag [#allocation4], %s354
        %s356 = sand.u32 %s36, 1
        %s357 = smul.addr %s356, 16
        %s358 = scalar_lea.vmem [#allocation3], %s357
        // Predicated region
        $region57: #{tpu_custom_call.1} parent=55 // pred_check
          %p359 = pneg %p49
        $region58: #{tpu_custom_call.1} parent=55 // pred_check_branch
          %361 = sbr.rel (%p359) target = $region60
        $region59: #{tpu_custom_call.1} parent=55 // pred_region
          %362 = dma.done %s355, 256
        $region60: #{tpu_custom_call.1} parent=55 // pred_fallthru
          _
        // Predicated region
        $region61: #{tpu_custom_call.1} parent=55 // pred_check
          %p363 = pneg %p70
        $region62: #{tpu_custom_call.1} parent=55 // pred_check_branch
          %365 = sbr.rel (%p363) target = $region64
        $region63: #{tpu_custom_call.1} parent=55 // pred_region
          %366 = dma.done [#allocation7], 7168
        $region64: #{tpu_custom_call.1} parent=55 // pred_fallthru
          _
        // Predicated region
        $region65: #{tpu_custom_call.1} parent=55 // pred_check
          %p367 = pneg %p112
        $region66: #{tpu_custom_call.1} parent=55 // pred_check_branch
          %369 = sbr.rel (%p367) target = $region68
        $region67: #{tpu_custom_call.1} parent=55 // pred_region
          %370 = dma.done [#allocation7], 6144
        $region68: #{tpu_custom_call.1} parent=55 // pred_fallthru
          _
        // Predicated region
        $region69: #{tpu_custom_call.1} parent=55 // pred_check
          %p371 = pneg %p154
        $region70: #{tpu_custom_call.1} parent=55 // pred_check_branch
          %373 = sbr.rel (%p371) target = $region72
        $region71: #{tpu_custom_call.1} parent=55 // pred_region
          %374 = dma.done [#allocation10], 3072
        $region72: #{tpu_custom_call.1} parent=55 // pred_fallthru
          _
        // Predicated region
        $region73: #{tpu_custom_call.1} parent=55 // pred_check
          %p375 = pneg %p196
        $region74: #{tpu_custom_call.1} parent=55 // pred_check_branch
          %377 = sbr.rel (%p375) target = $region76
        $region75: #{tpu_custom_call.1} parent=55 // pred_region
          %378 = dma.done [#allocation10], 7168
        $region76: #{tpu_custom_call.1} parent=55 // pred_fallthru
          _
        %s379 = sand.u32 %s36, 1
        %s380 = scalar_lea.sflag [#allocation4], %s379
        %s381 = sand.u32 %s36, 1
        %s382 = smul.addr %s381, 16
        %s383 = scalar_lea.vmem [#allocation3], %s382
        %p384 = pneg %p49
        %p385 = pneg %p46
        %p386 = pneg %p70
        %p387 = pneg %p67
        %p388 = pneg %p91
        %p389 = pneg %p88
        %p390 = pneg %p112
        %p391 = pneg %p109
        %p392 = pneg %p133
        %p393 = pneg %p130
        %p394 = pneg %p154
        %p395 = pneg %p151
        %p396 = pneg %p175
        %p397 = pneg %p172
        %p398 = pneg %p196
        %p399 = pneg %p193
        %p400 = pneg %p217
        %p401 = pneg %p214
        %p402 = pneg %p243
        %p403 = pneg %p240
        %s404 = sand.u32 %s230, 1
        %s405 = scalar_lea.sflag [#allocation5], %s404
        %s406 = sand.u32 %s230, 1
        %s407 = smul.addr %s406, 16
        %s408 = scalar_lea.vmem [#allocation12], %s407
        %410 = vst [vmem:[#allocation2] sm:$0xc0] 0
        %411 = vst [vmem:[#allocation2 + $0x10] sm:$0x3] 0
        %v412 = vld [vmem:[%s358] sm:$0xff]
        %v413 = vld [vmem:[%s358 + $0x8] sm:$0xff]
        %v414 = vpack.c.bf16 %v413, %v412
        %415 = vst [vmem:[#allocation2 + $0x8] sm:$0xff] %v414
        %v416 = vld [vmem:[#allocation2] sm:$0xc0]
        %v417 = vld [vmem:[#allocation2 + $0x8] sm:$0x7f]
        %v418 = vld [vmem:[#allocation2] sm:$0x80]
        %v419 = vld [vmem:[#allocation2 + $0x8] sm:$0xff]
        %v420 = vld [vmem:[#allocation2 + $0x8] sm:$0xff]
        %v421 = vld [vmem:[#allocation2 + $0x10] sm:$0x1]
        %v422 = vld [vmem:[#allocation2 + $0x8] sm:$0xfe]
        %v423 = vld [vmem:[#allocation2 + $0x10] sm:$0x3]
        %vm424 = vsmask.f32 7424
        %v426 = vshrl.u32 %v418, 16
        %v428 = vshll.u32 %v418, 16
        %v430 = vrot.slane %v428, 1
        %v431 = vor.u32 %v426, %v430
        %v433 = vshll.u32 %v417, 16
        %v435 = vrot.slane %v433, 1
        %v436 = vsel %vm424, %v431, %v435
        %v437 = vshrl.u32 %v417, 16
        %v439 = vor.u32 %v437, %v435
        %vm442 = vcmask 1046528
        %v443 = vrot.slane %v418, 1
        %v444 = vrot.slane %v419, 1
        %v445 = vsel %vm442, %v443, %v444
        %v447 = vshrl.u32 %v419, 16
        %v449 = vrot.slane %v447, 1
        %v450 = vshll.u32 %v419, 16
        %v452 = vrot.slane %v450, 2
        %v453 = vor.u32 %v449, %v452
        %vm456 = vcmask 1045504
        %v457 = vrot.slane %v420, 2
        %v458 = vrot.slane %v421, 2
        %v459 = vsel %vm456, %v457, %v458
        %vm460 = vsmask.f32 5376
        %v462 = vshrl.u32 %v422, 16
        %v464 = vrot.slane %v462, 2
        %v465 = vshll.u32 %v422, 16
        %v467 = vrot.slane %v465, 3
        %v468 = vor.u32 %v464, %v467
        %v470 = vshrl.u32 %v421, 16
        %v472 = vrot.slane %v470, 2
        %v473 = vshll.u32 %v421, 16
        %v475 = vrot.slane %v473, 3
        %v476 = vor.u32 %v472, %v475
        %v477 = vsel %vm460, %v468, %v476
        %vm480 = vcmask 1044480
        %v481 = vrot.slane %v422, 3
        %v482 = vrot.slane %v423, 3
        %v483 = vsel %vm480, %v481, %v482
        %v484 = vld [vmem:[#allocation6] sm:$0xf]
        %v485 = vld [vmem:[#allocation6 + $0x4] sm:$0xf]
        %v486 = vld [vmem:[#allocation6 + $0x8] sm:$0xf]
        %v487 = vld [vmem:[#allocation6 + $0xc] sm:$0xf]
        %v488 = vld [vmem:[#allocation6 + $0x10] sm:$0xf]
        %v489 = vld [vmem:[#allocation6 + $0x14] sm:$0xf]
        %v490 = vld [vmem:[#allocation6 + $0x18] sm:$0xf]
        %v491 = vld [vmem:[#allocation6 + $0x1c] sm:$0xf]
        %v492 = vld [vmem:[#allocation6 + $0x20] sm:$0xf]
        %v493 = vld [vmem:[#allocation6 + $0x24] sm:$0xf]
        %v494 = vld [vmem:[#allocation6 + $0x28] sm:$0xf]
        %v495 = vld [vmem:[#allocation6 + $0x2c] sm:$0xf]
        %v496 = vld [vmem:[#allocation6 + $0x30] sm:$0xf]
        %v497 = vld [vmem:[#allocation6 + $0x34] sm:$0xf]
        %v498 = vld [vmem:[#allocation6 + $0x38] sm:$0xf]
        %v499 = vld [vmem:[#allocation6 + $0x3c] sm:$0xf]
        %v500 = vld [vmem:[#allocation6 + $0x40] sm:$0xf]
        %v501 = vld [vmem:[#allocation6 + $0x44] sm:$0xf]
        %v502 = vld [vmem:[#allocation6 + $0x48] sm:$0xf]
        %v503 = vld [vmem:[#allocation6 + $0x4c] sm:$0xf]
        %v504 = vld [vmem:[#allocation6 + $0x50] sm:$0xf]
        %v505 = vld [vmem:[#allocation6 + $0x54] sm:$0xf]
        %v506 = vld [vmem:[#allocation6 + $0x58] sm:$0xf]
        %v507 = vld [vmem:[#allocation6 + $0x5c] sm:$0xf]
        %v508 = vld [vmem:[#allocation6 + $0x60] sm:$0xf]
        %v509 = vld [vmem:[#allocation6 + $0x64] sm:$0xf]
        %v510 = vld [vmem:[#allocation6 + $0x68] sm:$0xf]
        %v511 = vld [vmem:[#allocation6 + $0x6c] sm:$0xf]
        %v512 = vld [vmem:[#allocation6 + $0x70] sm:$0xf]
        %v513 = vld [vmem:[#allocation6 + $0x74] sm:$0xf]
        %v514 = vld [vmem:[#allocation6 + $0x78] sm:$0xf]
        %v515 = vld [vmem:[#allocation6 + $0x7c] sm:$0xf]
        %v516 = vld [vmem:[#allocation6 + $0x80] sm:$0xf]
        %v517 = vld [vmem:[#allocation6 + $0x84] sm:$0xf]
        %v518 = vld [vmem:[#allocation6 + $0x88] sm:$0xf]
        %v519 = vld [vmem:[#allocation6 + $0x8c] sm:$0xf]
        %v520 = vld [vmem:[#allocation6 + $0x90] sm:$0xf]
        %v521 = vld [vmem:[#allocation6 + $0x94] sm:$0xf]
        %v522 = vld [vmem:[#allocation6 + $0x98] sm:$0xf]
        %v523 = vld [vmem:[#allocation6 + $0x9c] sm:$0xf]
        %v524 = vld [vmem:[#allocation6 + $0xa0] sm:$0xf]
        %v525 = vld [vmem:[#allocation6 + $0xa4] sm:$0xf]
        %v526 = vld [vmem:[#allocation6 + $0xa8] sm:$0xf]
        %v527 = vld [vmem:[#allocation6 + $0xac] sm:$0xf]
        %v528 = vld [vmem:[#allocation6 + $0xb0] sm:$0xf]
        %v529 = vld [vmem:[#allocation6 + $0xb4] sm:$0xf]
        %v530 = vld [vmem:[#allocation6 + $0xb8] sm:$0xf]
        %v531 = vld [vmem:[#allocation6 + $0xbc] sm:$0xf]
        %v532 = vld [vmem:[#allocation6 + $0xc0] sm:$0xf]
        %v533 = vld [vmem:[#allocation6 + $0xc4] sm:$0xf]
        %v534 = vld [vmem:[#allocation6 + $0xc8] sm:$0xf]
        %v535 = vld [vmem:[#allocation6 + $0xcc] sm:$0xf]
        %v536 = vld [vmem:[#allocation6 + $0xd0] sm:$0xf]
        %v537 = vld [vmem:[#allocation6 + $0xd4] sm:$0xf]
        %v538 = vld [vmem:[#allocation6 + $0xd8] sm:$0xf]
        %v539 = vld [vmem:[#allocation6 + $0xdc] sm:$0xf]
        %v540 = vld [vmem:[#allocation6 + $0xe0] sm:$0xf]
        %v541 = vld [vmem:[#allocation6 + $0xe4] sm:$0xf]
        %v542 = vld [vmem:[#allocation6 + $0xe8] sm:$0xf]
        %v543 = vld [vmem:[#allocation6 + $0xec] sm:$0xf]
        %v544 = vld [vmem:[#allocation6 + $0xf0] sm:$0xf]
        %v545 = vld [vmem:[#allocation6 + $0xf4] sm:$0xf]
        %v546 = vld [vmem:[#allocation6 + $0xf8] sm:$0xf]
        %v547 = vld [vmem:[#allocation6 + $0xfc] sm:$0xf]
        %v548 = vld [vmem:[#allocation6 + $0x100] sm:$0xf]
        %v549 = vld [vmem:[#allocation6 + $0x104] sm:$0xf]
        %v550 = vld [vmem:[#allocation6 + $0x108] sm:$0xf]
        %v551 = vld [vmem:[#allocation6 + $0x10c] sm:$0xf]
        %v552 = vld [vmem:[#allocation6 + $0x110] sm:$0xf]
        %v553 = vld [vmem:[#allocation6 + $0x114] sm:$0xf]
        %v554 = vld [vmem:[#allocation6 + $0x118] sm:$0xf]
        %v555 = vld [vmem:[#allocation6 + $0x11c] sm:$0xf]
        %v556 = vld [vmem:[#allocation6 + $0x120] sm:$0xf]
        %v557 = vld [vmem:[#allocation6 + $0x124] sm:$0xf]
        %v558 = vld [vmem:[#allocation6 + $0x128] sm:$0xf]
        %v559 = vld [vmem:[#allocation6 + $0x12c] sm:$0xf]
        %v560 = vld [vmem:[#allocation6 + $0x130] sm:$0xf]
        %v561 = vld [vmem:[#allocation6 + $0x134] sm:$0xf]
        %v562 = vld [vmem:[#allocation6 + $0x138] sm:$0xf]
        %v563 = vld [vmem:[#allocation6 + $0x13c] sm:$0xf]
        %v564 = vld [vmem:[#allocation6 + $0x140] sm:$0xf]
        %v565 = vld [vmem:[#allocation6 + $0x144] sm:$0xf]
        %v566 = vld [vmem:[#allocation6 + $0x148] sm:$0xf]
        %v567 = vld [vmem:[#allocation6 + $0x14c] sm:$0xf]
        %v568 = vld [vmem:[#allocation6 + $0x150] sm:$0xf]
        %v569 = vld [vmem:[#allocation6 + $0x154] sm:$0xf]
        %v570 = vld [vmem:[#allocation6 + $0x158] sm:$0xf]
        %v571 = vld [vmem:[#allocation6 + $0x15c] sm:$0xf]
        %v572 = vld [vmem:[#allocation6 + $0x160] sm:$0xf]
        %v573 = vld [vmem:[#allocation6 + $0x164] sm:$0xf]
        %v574 = vld [vmem:[#allocation6 + $0x168] sm:$0xf]
        %v575 = vld [vmem:[#allocation6 + $0x16c] sm:$0xf]
        %v576 = vld [vmem:[#allocation6 + $0x170] sm:$0xf]
        %v577 = vld [vmem:[#allocation6 + $0x174] sm:$0xf]
        %v578 = vld [vmem:[#allocation6 + $0x178] sm:$0xf]
        %v579 = vld [vmem:[#allocation6 + $0x17c] sm:$0xf]
        %v580 = vld [vmem:[#allocation6 + $0x180] sm:$0xf]
        %v581 = vld [vmem:[#allocation6 + $0x184] sm:$0xf]
        %v582 = vld [vmem:[#allocation6 + $0x188] sm:$0xf]
        %v583 = vld [vmem:[#allocation6 + $0x18c] sm:$0xf]
        %v584 = vld [vmem:[#allocation6 + $0x190] sm:$0xf]
        %v585 = vld [vmem:[#allocation6 + $0x194] sm:$0xf]
        %v586 = vld [vmem:[#allocation6 + $0x198] sm:$0xf]
        %v587 = vld [vmem:[#allocation6 + $0x19c] sm:$0xf]
        %v588 = vld [vmem:[#allocation6 + $0x1a0] sm:$0xf]
        %v589 = vld [vmem:[#allocation6 + $0x1a4] sm:$0xf]
        %v590 = vld [vmem:[#allocation6 + $0x1a8] sm:$0xf]
        %v591 = vld [vmem:[#allocation6 + $0x1ac] sm:$0xf]
        %v592 = vld [vmem:[#allocation6 + $0x1b0] sm:$0xf]
        %v593 = vld [vmem:[#allocation6 + $0x1b4] sm:$0xf]
        %v594 = vld [vmem:[#allocation6 + $0x1b8] sm:$0xf]
        %v595 = vld [vmem:[#allocation6 + $0x1bc] sm:$0xf]
        %v596 = vld [vmem:[%s2] sm:$0x1]
        %v598 = vlaneseq
        %v599 = vshrl.u32 %v598, 7
        %v600 = vsub.s32 0, %v599
        %v601 = vrot.slane %v596, %v600
        %vm603 = vsmask.f32 1280
        %v605 = vshrl.u32 %v416, 16
        %v607 = vrot.slane %v605, 6
        %v608 = vshll.u32 %v416, 16
        %v610 = vrot.slane %v608, 7
        %v611 = vor.u32 %v607, %v610
        %v612 = vrot.slane %v437, 6
        %v613 = vrot.slane %v433, 7
        %v614 = vor.u32 %v612, %v613
        %v615 = vsel %vm603, %v611, %v614
        %v617 = vshrl.u32 %v436, 16
        %v619 = vrot.slane %v617, 6
        %v620 = vshll.u32 %v436, 16
        %v622 = vrot.slane %v620, 7
        %v623 = vor.u32 %v619, %v622
        %v625 = vshrl.u32 %v439, 16
        %v627 = vrot.slane %v625, 6
        %v628 = vshll.u32 %v439, 16
        %v630 = vrot.slane %v628, 7
        %v631 = vor.u32 %v627, %v630
        %v632 = vsel %vm603, %v623, %v631
        %v634 = vshrl.u32 %v445, 16
        %v636 = vrot.slane %v634, 6
        %v637 = vshll.u32 %v445, 16
        %v639 = vrot.slane %v637, 7
        %v640 = vor.u32 %v636, %v639
        %v642 = vshrl.u32 %v444, 16
        %v644 = vrot.slane %v642, 6
        %v645 = vshll.u32 %v444, 16
        %v647 = vrot.slane %v645, 7
        %v648 = vor.u32 %v644, %v647
        %v649 = vsel %vm603, %v640, %v648
        %v651 = vshrl.u32 %v453, 16
        %v653 = vrot.slane %v651, 6
        %v654 = vshll.u32 %v453, 16
        %v656 = vrot.slane %v654, 7
        %v657 = vor.u32 %v653, %v656
        %v658 = vsel %vm603, %v657, %v657
        %v660 = vshrl.u32 %v457, 16
        %v662 = vrot.slane %v660, 6
        %v663 = vshll.u32 %v457, 16
        %v665 = vrot.slane %v663, 7
        %v666 = vor.u32 %v662, %v665
        %v668 = vshrl.u32 %v459, 16
        %v670 = vrot.slane %v668, 6
        %v671 = vshll.u32 %v459, 16
        %v673 = vrot.slane %v671, 7
        %v674 = vor.u32 %v670, %v673
        %v675 = vsel %vm603, %v666, %v674
        %v677 = vshrl.u32 %v468, 16
        %v679 = vrot.slane %v677, 6
        %v680 = vshll.u32 %v468, 16
        %v682 = vrot.slane %v680, 7
        %v683 = vor.u32 %v679, %v682
        %v685 = vshrl.u32 %v477, 16
        %v687 = vrot.slane %v685, 6
        %v688 = vshll.u32 %v477, 16
        %v690 = vrot.slane %v688, 7
        %v691 = vor.u32 %v687, %v690
        %v692 = vsel %vm603, %v683, %v691
        %v694 = vshrl.u32 %v481, 16
        %v696 = vrot.slane %v694, 6
        %v697 = vshll.u32 %v481, 16
        %v699 = vrot.slane %v697, 7
        %v700 = vor.u32 %v696, %v699
        %v702 = vshrl.u32 %v483, 16
        %v704 = vrot.slane %v702, 6
        %v705 = vshll.u32 %v483, 16
        %v707 = vrot.slane %v705, 7
        %v708 = vor.u32 %v704, %v707
        %v709 = vsel %vm603, %v700, %v708
        %v829 = vunpack.c.l.b16 %v484
        %v830 = vunpack.c.l.b16 %v485
        %v831 = vunpack.c.l.b16 %v486
        %v832 = vunpack.c.l.b16 %v487
        %v833 = vunpack.c.l.b16 %v488
        %v834 = vunpack.c.l.b16 %v489
        %v835 = vunpack.c.l.b16 %v490
        %v836 = vunpack.c.l.b16 %v491
        %v837 = vunpack.c.l.b16 %v492
        %v838 = vunpack.c.l.b16 %v493
        %v839 = vunpack.c.l.b16 %v494
        %v840 = vunpack.c.l.b16 %v495
        %v841 = vunpack.c.l.b16 %v496
        %v842 = vunpack.c.l.b16 %v497
        %v843 = vunpack.c.l.b16 %v498
        %v844 = vunpack.c.l.b16 %v499
        %v845 = vunpack.c.l.b16 %v500
        %v846 = vunpack.c.l.b16 %v501
        %v847 = vunpack.c.l.b16 %v502
        %v848 = vunpack.c.l.b16 %v503
        %v849 = vunpack.c.l.b16 %v504
        %v850 = vunpack.c.l.b16 %v505
        %v851 = vunpack.c.l.b16 %v506
        %v852 = vunpack.c.l.b16 %v507
        %v853 = vunpack.c.l.b16 %v508
        %v854 = vunpack.c.l.b16 %v509
        %v855 = vunpack.c.l.b16 %v510
        %v856 = vunpack.c.l.b16 %v511
        %v857 = vunpack.c.l.b16 %v512
        %v858 = vunpack.c.l.b16 %v513
        %v859 = vunpack.c.l.b16 %v514
        %v860 = vunpack.c.l.b16 %v515
        %v861 = vunpack.c.l.b16 %v516
        %v862 = vunpack.c.l.b16 %v517
        %v863 = vunpack.c.l.b16 %v518
        %v864 = vunpack.c.l.b16 %v519
        %v865 = vunpack.c.l.b16 %v520
        %v866 = vunpack.c.l.b16 %v521
        %v867 = vunpack.c.l.b16 %v522
        %v868 = vunpack.c.l.b16 %v523
        %v869 = vunpack.c.l.b16 %v524
        %v870 = vunpack.c.l.b16 %v525
        %v871 = vunpack.c.l.b16 %v526
        %v872 = vunpack.c.l.b16 %v527
        %v873 = vunpack.c.l.b16 %v528
        %v874 = vunpack.c.l.b16 %v529
        %v875 = vunpack.c.l.b16 %v530
        %v876 = vunpack.c.l.b16 %v531
        %v877 = vunpack.c.l.b16 %v532
        %v878 = vunpack.c.l.b16 %v533
        %v879 = vunpack.c.l.b16 %v534
        %v880 = vunpack.c.l.b16 %v535
        %v881 = vunpack.c.l.b16 %v536
        %v882 = vunpack.c.l.b16 %v537
        %v883 = vunpack.c.l.b16 %v538
        %v884 = vunpack.c.l.b16 %v539
        %v885 = vunpack.c.l.b16 %v540
        %v886 = vunpack.c.l.b16 %v541
        %v887 = vunpack.c.l.b16 %v542
        %v888 = vunpack.c.l.b16 %v543
        %v889 = vunpack.c.l.b16 %v544
        %v890 = vunpack.c.l.b16 %v545
        %v891 = vunpack.c.l.b16 %v546
        %v892 = vunpack.c.l.b16 %v547
        %v893 = vunpack.c.l.b16 %v548
        %v894 = vunpack.c.l.b16 %v549
        %v895 = vunpack.c.l.b16 %v550
        %v896 = vunpack.c.l.b16 %v551
        %v897 = vunpack.c.l.b16 %v552
        %v898 = vunpack.c.l.b16 %v553
        %v899 = vunpack.c.l.b16 %v554
        %v900 = vunpack.c.l.b16 %v555
        %v901 = vunpack.c.l.b16 %v556
        %v902 = vunpack.c.l.b16 %v557
        %v903 = vunpack.c.l.b16 %v558
        %v904 = vunpack.c.l.b16 %v559
        %v905 = vunpack.c.l.b16 %v560
        %v906 = vunpack.c.l.b16 %v561
        %v907 = vunpack.c.l.b16 %v562
        %v908 = vunpack.c.l.b16 %v563
        %v909 = vunpack.c.l.b16 %v564
        %v910 = vunpack.c.l.b16 %v565
        %v911 = vunpack.c.l.b16 %v566
        %v912 = vunpack.c.l.b16 %v567
        %v913 = vunpack.c.l.b16 %v568
        %v914 = vunpack.c.l.b16 %v569
        %v915 = vunpack.c.l.b16 %v570
        %v916 = vunpack.c.l.b16 %v571
        %v917 = vunpack.c.l.b16 %v572
        %v918 = vunpack.c.l.b16 %v573
        %v919 = vunpack.c.l.b16 %v574
        %v920 = vunpack.c.l.b16 %v575
        %v921 = vunpack.c.l.b16 %v576
        %v922 = vunpack.c.l.b16 %v577
        %v923 = vunpack.c.l.b16 %v578
        %v924 = vunpack.c.l.b16 %v579
        %v925 = vunpack.c.l.b16 %v580
        %v926 = vunpack.c.l.b16 %v581
        %v927 = vunpack.c.l.b16 %v582
        %v928 = vunpack.c.l.b16 %v583
        %v929 = vunpack.c.l.b16 %v584
        %v930 = vunpack.c.l.b16 %v585
        %v931 = vunpack.c.l.b16 %v586
        %v932 = vunpack.c.l.b16 %v587
        %v933 = vunpack.c.l.b16 %v588
        %v934 = vunpack.c.l.b16 %v589
        %v935 = vunpack.c.l.b16 %v590
        %v936 = vunpack.c.l.b16 %v591
        %v937 = vunpack.c.l.b16 %v592
        %v938 = vunpack.c.l.b16 %v593
        %v939 = vunpack.c.l.b16 %v594
        %v940 = vunpack.c.l.b16 %v595
        %v941 = vpack.c.b16 %v830, %v829
        %v942 = vpack.c.b16 %v832, %v831
        %v943 = vpack.c.b16 %v834, %v833
        %v944 = vpack.c.b16 %v836, %v835
        %v945 = vpack.c.b16 %v838, %v837
        %v946 = vpack.c.b16 %v840, %v839
        %v947 = vpack.c.b16 %v842, %v841
        %v948 = vpack.c.b16 %v844, %v843
        %v949 = vpack.c.b16 %v846, %v845
        %v950 = vpack.c.b16 %v848, %v847
        %v951 = vpack.c.b16 %v850, %v849
        %v952 = vpack.c.b16 %v852, %v851
        %v953 = vpack.c.b16 %v854, %v853
        %v954 = vpack.c.b16 %v856, %v855
        %v955 = vpack.c.b16 %v858, %v857
        %v956 = vpack.c.b16 %v860, %v859
        %v957 = vpack.c.b16 %v862, %v861
        %v958 = vpack.c.b16 %v864, %v863
        %v959 = vpack.c.b16 %v866, %v865
        %v960 = vpack.c.b16 %v868, %v867
        %v961 = vpack.c.b16 %v870, %v869
        %v962 = vpack.c.b16 %v872, %v871
        %v963 = vpack.c.b16 %v874, %v873
        %v964 = vpack.c.b16 %v876, %v875
        %v965 = vpack.c.b16 %v878, %v877
        %v966 = vpack.c.b16 %v880, %v879
        %v967 = vpack.c.b16 %v882, %v881
        %v968 = vpack.c.b16 %v884, %v883
        %v969 = vpack.c.b16 %v886, %v885
        %v970 = vpack.c.b16 %v888, %v887
        %v971 = vpack.c.b16 %v890, %v889
        %v972 = vpack.c.b16 %v892, %v891
        %v973 = vpack.c.b16 %v894, %v893
        %v974 = vpack.c.b16 %v896, %v895
        %v975 = vpack.c.b16 %v898, %v897
        %v976 = vpack.c.b16 %v900, %v899
        %v977 = vpack.c.b16 %v902, %v901
        %v978 = vpack.c.b16 %v904, %v903
        %v979 = vpack.c.b16 %v906, %v905
        %v980 = vpack.c.b16 %v908, %v907
        %v981 = vpack.c.b16 %v910, %v909
        %v982 = vpack.c.b16 %v912, %v911
        %v983 = vpack.c.b16 %v914, %v913
        %v984 = vpack.c.b16 %v916, %v915
        %v985 = vpack.c.b16 %v918, %v917
        %v986 = vpack.c.b16 %v920, %v919
        %v987 = vpack.c.b16 %v922, %v921
        %v988 = vpack.c.b16 %v924, %v923
        %v989 = vpack.c.b16 %v926, %v925
        %v990 = vpack.c.b16 %v928, %v927
        %v991 = vpack.c.b16 %v930, %v929
        %v992 = vpack.c.b16 %v932, %v931
        %v993 = vpack.c.b16 %v934, %v933
        %v994 = vpack.c.b16 %v936, %v935
        %v995 = vpack.c.b16 %v938, %v937
        %v996 = vpack.c.b16 %v940, %v939
        %1053 = vmatprep.subr.bf16.mxu0 0
        %1054 = vmatpush1.bf16.msra.mxu0 %v941
        %1055 = vmatprep.subr.bf16.mxu0 0
        %1056 = vmatpush1.bf16.msra.mxu0 %v942
        %1057 = vmatprep.subr.bf16.mxu0 0
        %1058 = vmatpush1.bf16.msra.mxu0 %v943
        %1059 = vmatprep.subr.bf16.mxu0 0
        %1060 = vmatpush1.bf16.msra.mxu0 %v944
        %1061 = vmatprep.subr.bf16.mxu0 0
        %1062 = vmatpush1.bf16.msra.mxu0 %v945
        %1063 = vmatprep.subr.bf16.mxu0 0
        %1064 = vmatpush1.bf16.msra.mxu0 %v946
        %1065 = vmatprep.subr.bf16.mxu0 0
        %1066 = vmatpush1.bf16.msra.mxu0 %v947
        %1067 = vmatprep.subr.bf16.mxu0 0
        %1068 = vmatpush1.bf16.msra.mxu0 %v948
        %1069 = vmatprep.subr.bf16.mxu0 0
        %1070 = vmatpush1.bf16.msra.mxu0 %v949
        %1071 = vmatprep.subr.bf16.mxu0 0
        %1072 = vmatpush1.bf16.msra.mxu0 %v950
        %1073 = vmatprep.subr.bf16.mxu0 0
        %1074 = vmatpush1.bf16.msra.mxu0 %v951
        %1075 = vmatprep.subr.bf16.mxu0 0
        %1076 = vmatpush1.bf16.msra.mxu0 %v952
        %1077 = vmatprep.subr.bf16.mxu0 0
        %1078 = vmatpush1.bf16.msra.mxu0 %v953
        %1079 = vmatprep.subr.bf16.mxu0 0
        %1080 = vmatpush1.bf16.msra.mxu0 %v954
        %1081 = vmatprep.subr.bf16.mxu0 0
        %1082 = vmatpush1.bf16.msra.mxu0 %v955
        %1083 = vmatprep.subr.bf16.mxu0 0
        %1084 = vmatpush1.bf16.msra.mxu0 %v956
        %1085 = vmatprep.mubr.bf16.mxu0 %v632
        %1086 = vmatmul.mubr.bf16.gmra.mrb[0].mxu0 %v615
        %v1087 = vpop.f32.mrb[0].mxu0
        %v1088 = vadd.f32 %v601, %v1087
        %v1089 = vpop.f32.mrb[0].mxu0
        %v1090 = vpop.f32.mrb[0].mxu0
        %v1091 = vadd.f32 %v601, %v1090
        %v1092 = vpop.f32.mrb[0].mxu0
        %1093 = vdwg.mxu0
        %1094 = vmatprep.subr.bf16.mxu0 0
        %1095 = vmatpush1.bf16.msra.mxu0 %v957
        %1096 = vmatprep.subr.bf16.mxu0 0
        %1097 = vmatpush1.bf16.msra.mxu0 %v958
        %1098 = vmatprep.subr.bf16.mxu0 0
        %1099 = vmatpush1.bf16.msra.mxu0 %v959
        %1100 = vmatprep.subr.bf16.mxu0 0
        %1101 = vmatpush1.bf16.msra.mxu0 %v960
        %1102 = vmatprep.subr.bf16.mxu0 0
        %1103 = vmatpush1.bf16.msra.mxu0 %v961
        %1104 = vmatprep.subr.bf16.mxu0 0
        %1105 = vmatpush1.bf16.msra.mxu0 %v962
        %1106 = vmatprep.subr.bf16.mxu0 0
        %1107 = vmatpush1.bf16.msra.mxu0 %v963
        %1108 = vmatprep.subr.bf16.mxu0 0
        %1109 = vmatpush1.bf16.msra.mxu0 %v964
        %1110 = vmatprep.subr.bf16.mxu0 0
        %1111 = vmatpush1.bf16.msra.mxu0 %v965
        %1112 = vmatprep.subr.bf16.mxu0 0
        %1113 = vmatpush1.bf16.msra.mxu0 %v966
        %1114 = vmatprep.subr.bf16.mxu0 0
        %1115 = vmatpush1.bf16.msra.mxu0 %v967
        %1116 = vmatprep.subr.bf16.mxu0 0
        %1117 = vmatpush1.bf16.msra.mxu0 %v968
        %1118 = vmatprep.subr.bf16.mxu0 0
        %1119 = vmatpush1.bf16.msra.mxu0 %v969
        %1120 = vmatprep.subr.bf16.mxu0 0
        %1121 = vmatpush1.bf16.msra.mxu0 %v970
        %1122 = vmatprep.subr.bf16.mxu0 0
        %1123 = vmatpush1.bf16.msra.mxu0 %v971
        %1124 = vmatprep.subr.bf16.mxu0 0
        %1125 = vmatpush1.bf16.msra.mxu0 %v972
        %1126 = vmatprep.mubr.bf16.mxu0 %v658
        %1127 = vmatmul.mubr.bf16.gmra.mrb[0].mxu0 %v649
        %v1128 = vpop.f32.mrb[0].mxu0
        %v1129 = vadd.f32 %v1088, %v1128
        %v1130 = vpop.f32.mrb[0].mxu0
        %v1131 = vpop.f32.mrb[0].mxu0
        %v1132 = vadd.f32 %v1091, %v1131
        %v1133 = vpop.f32.mrb[0].mxu0
        %1134 = vdwg.mxu0
        %1135 = vmatprep.subr.bf16.mxu0 0
        %1136 = vmatpush1.bf16.msra.mxu0 %v973
        %1137 = vmatprep.subr.bf16.mxu0 0
        %1138 = vmatpush1.bf16.msra.mxu0 %v974
        %1139 = vmatprep.subr.bf16.mxu0 0
        %1140 = vmatpush1.bf16.msra.mxu0 %v975
        %1141 = vmatprep.subr.bf16.mxu0 0
        %1142 = vmatpush1.bf16.msra.mxu0 %v976
        %1143 = vmatprep.subr.bf16.mxu0 0
        %1144 = vmatpush1.bf16.msra.mxu0 %v977
        %1145 = vmatprep.subr.bf16.mxu0 0
        %1146 = vmatpush1.bf16.msra.mxu0 %v978
        %1147 = vmatprep.subr.bf16.mxu0 0
        %1148 = vmatpush1.bf16.msra.mxu0 %v979
        %1149 = vmatprep.subr.bf16.mxu0 0
        %1150 = vmatpush1.bf16.msra.mxu0 %v980
        %1151 = vmatprep.subr.bf16.mxu0 0
        %1152 = vmatpush1.bf16.msra.mxu0 %v981
        %1153 = vmatprep.subr.bf16.mxu0 0
        %1154 = vmatpush1.bf16.msra.mxu0 %v982
        %1155 = vmatprep.subr.bf16.mxu0 0
        %1156 = vmatpush1.bf16.msra.mxu0 %v983
        %1157 = vmatprep.subr.bf16.mxu0 0
        %1158 = vmatpush1.bf16.msra.mxu0 %v984
        %1159 = vmatprep.subr.bf16.mxu0 0
        %1160 = vmatpush1.bf16.msra.mxu0 %v985
        %1161 = vmatprep.subr.bf16.mxu0 0
        %1162 = vmatpush1.bf16.msra.mxu0 %v986
        %1163 = vmatprep.subr.bf16.mxu0 0
        %1164 = vmatpush1.bf16.msra.mxu0 %v987
        %1165 = vmatprep.subr.bf16.mxu0 0
        %1166 = vmatpush1.bf16.msra.mxu0 %v988
        %1167 = vmatprep.mubr.bf16.mxu0 %v692
        %1168 = vmatmul.mubr.bf16.gmra.mrb[0].mxu0 %v675
        %v1169 = vpop.f32.mrb[0].mxu0
        %v1170 = vadd.f32 %v1129, %v1169
        %v1171 = vpop.f32.mrb[0].mxu0
        %v1172 = vpop.f32.mrb[0].mxu0
        %v1173 = vadd.f32 %v1132, %v1172
        %v1174 = vpop.f32.mrb[0].mxu0
        %1175 = vdwg.mxu0
        %1176 = vmatprep.subr.bf16.mxu0 0
        %1177 = vmatpush1.bf16.msra.mxu0 %v989
        %1178 = vmatprep.subr.bf16.mxu0 0
        %1179 = vmatpush1.bf16.msra.mxu0 %v990
        %1180 = vmatprep.subr.bf16.mxu0 0
        %1181 = vmatpush1.bf16.msra.mxu0 %v991
        %1182 = vmatprep.subr.bf16.mxu0 0
        %1183 = vmatpush1.bf16.msra.mxu0 %v992
        %1184 = vmatprep.subr.bf16.mxu0 0
        %1185 = vmatpush1.bf16.msra.mxu0 %v993
        %1186 = vmatprep.subr.bf16.mxu0 0
        %1187 = vmatpush1.bf16.msra.mxu0 %v994
        %1188 = vmatprep.subr.bf16.mxu0 0
        %1189 = vmatpush1.bf16.msra.mxu0 %v995
        %1190 = vmatprep.subr.bf16.mxu0 0
        %1191 = vmatpush1.bf16.msra.mxu0 %v996
        %1192 = vmatprep.subr.bf16.mxu0 0
        %1193 = vmatpush1.bf16.msra.mxu0 0
        %1194 = vmatprep.subr.bf16.mxu0 0
        %1195 = vmatpush1.bf16.msra.mxu0 0
        %1196 = vmatprep.subr.bf16.mxu0 0
        %1197 = vmatpush1.bf16.msra.mxu0 0
        %1198 = vmatprep.subr.bf16.mxu0 0
        %1199 = vmatpush1.bf16.msra.mxu0 0
        %1200 = vmatprep.subr.bf16.mxu0 0
        %1201 = vmatpush1.bf16.msra.mxu0 0
        %1202 = vmatprep.subr.bf16.mxu0 0
        %1203 = vmatpush1.bf16.msra.mxu0 0
        %1204 = vmatprep.subr.bf16.mxu0 0
        %1205 = vmatpush1.bf16.msra.mxu0 0
        %1206 = vmatprep.subr.bf16.mxu0 0
        %1207 = vmatpush1.bf16.msra.mxu0 0
        %1208 = vmatprep.mubr.bf16.mxu0 0
        %1209 = vmatmul.mubr.bf16.gmra.mrb[0].mxu0 %v709
        %v1210 = vpop.f32.mrb[0].mxu0
        %v1211 = vadd.f32 %v1170, %v1210
        %v1212 = vpop.f32.mrb[0].mxu0
        %v1213 = vpop.f32.mrb[0].mxu0
        %v1214 = vadd.f32 %v1173, %v1213
        %v1215 = vpop.f32.mrb[0].mxu0
        %1216 = vdwg.mxu0
        %v1217 = vpack.c.bf16 %v1214, %v1211
        %v1218 = vld [vmem:[#allocation8] sm:$0xff]
        %v1219 = vld [vmem:[#allocation8 + $0x8] sm:$0xff]
        %v1220 = vld [vmem:[#allocation8 + $0x10] sm:$0xff]
        %v1221 = vld [vmem:[#allocation8 + $0x18] sm:$0xff]
        %v1222 = vld [vmem:[#allocation8 + $0x20] sm:$0xff]
        %v1223 = vld [vmem:[#allocation8 + $0x28] sm:$0xff]
        %v1224 = vld [vmem:[#allocation8 + $0x30] sm:$0xff]
        %v1225 = vld [vmem:[#allocation8 + $0x38] sm:$0xff]
        %v1226 = vld [vmem:[#allocation8 + $0x40] sm:$0xff]
        %v1227 = vld [vmem:[#allocation8 + $0x48] sm:$0xff]
        %v1228 = vld [vmem:[#allocation8 + $0x50] sm:$0xff]
        %v1229 = vld [vmem:[#allocation8 + $0x58] sm:$0xff]
        %v1230 = vld [vmem:[#allocation8 + $0x60] sm:$0xff]
        %v1231 = vld [vmem:[#allocation8 + $0x68] sm:$0xff]
        %v1232 = vld [vmem:[#allocation8 + $0x70] sm:$0xff]
        %v1233 = vld [vmem:[#allocation8 + $0x78] sm:$0xff]
        %v1234 = vld [vmem:[#allocation8 + $0x80] sm:$0xff]
        %v1235 = vld [vmem:[#allocation8 + $0x88] sm:$0xff]
        %v1236 = vld [vmem:[#allocation8 + $0x90] sm:$0xff]
        %v1237 = vld [vmem:[#allocation8 + $0x98] sm:$0xff]
        %v1238 = vld [vmem:[#allocation8 + $0xa0] sm:$0xff]
        %v1239 = vld [vmem:[#allocation8 + $0xa8] sm:$0xff]
        %v1240 = vld [vmem:[#allocation8 + $0xb0] sm:$0xff]
        %v1241 = vld [vmem:[#allocation8 + $0xb8] sm:$0xff]
        %v1242 = vld [vmem:[#allocation8 + $0xc0] sm:$0xff]
        %v1243 = vld [vmem:[#allocation8 + $0xc8] sm:$0xff]
        %v1244 = vld [vmem:[#allocation8 + $0xd0] sm:$0xff]
        %v1245 = vld [vmem:[#allocation8 + $0xd8] sm:$0xff]
        %v1246 = vld [vmem:[#allocation8 + $0xe0] sm:$0xff]
        %v1247 = vld [vmem:[#allocation8 + $0xe8] sm:$0xff]
        %v1248 = vld [vmem:[#allocation8 + $0xf0] sm:$0xff]
        %v1249 = vld [vmem:[#allocation8 + $0xf8] sm:$0xff]
        %v1250 = vld [vmem:[#allocation8 + $0x100] sm:$0xff]
        %v1251 = vld [vmem:[#allocation8 + $0x108] sm:$0xff]
        %v1252 = vld [vmem:[#allocation8 + $0x110] sm:$0xff]
        %v1253 = vld [vmem:[#allocation8 + $0x118] sm:$0xff]
        %v1254 = vld [vmem:[#allocation8 + $0x120] sm:$0xff]
        %v1255 = vld [vmem:[#allocation8 + $0x128] sm:$0xff]
        %v1256 = vld [vmem:[#allocation8 + $0x130] sm:$0xff]
        %v1257 = vld [vmem:[#allocation8 + $0x138] sm:$0xff]
        %v1258 = vld [vmem:[#allocation8 + $0x140] sm:$0xff]
        %v1259 = vld [vmem:[#allocation8 + $0x148] sm:$0xff]
        %v1260 = vld [vmem:[#allocation8 + $0x150] sm:$0xff]
        %v1261 = vld [vmem:[#allocation8 + $0x158] sm:$0xff]
        %v1262 = vld [vmem:[#allocation8 + $0x160] sm:$0xff]
        %v1263 = vld [vmem:[#allocation8 + $0x168] sm:$0xff]
        %v1264 = vld [vmem:[#allocation8 + $0x170] sm:$0xff]
        %v1265 = vld [vmem:[#allocation8 + $0x178] sm:$0xff]
        %v1266 = vld [vmem:[%s4] sm:$0x3f]
        %v1268 = vlaneseq
        %v1269 = vshrl.u32 %v1268, 7
        %v1270 = vsub.s32 0, %v1269
        %v1271 = vrot.slane %v1266, %v1270
        %v1272 = vlaneseq
        %v1273 = vshrl.u32 %v1272, 7
        %v1274 = vsub.s32 1, %v1273
        %v1275 = vrot.slane %v1266, %v1274
        %v1276 = vlaneseq
        %v1277 = vshrl.u32 %v1276, 7
        %v1278 = vsub.s32 2, %v1277
        %v1279 = vrot.slane %v1266, %v1278
        %v1280 = vlaneseq
        %v1281 = vshrl.u32 %v1280, 7
        %v1282 = vsub.s32 3, %v1281
        %v1283 = vrot.slane %v1266, %v1282
        %v1284 = vlaneseq
        %v1285 = vshrl.u32 %v1284, 7
        %v1286 = vsub.s32 4, %v1285
        %v1287 = vrot.slane %v1266, %v1286
        %v1288 = vlaneseq
        %v1289 = vshrl.u32 %v1288, 7
        %v1290 = vsub.s32 5, %v1289
        %v1291 = vrot.slane %v1266, %v1290
        %v1346 = vunpack.c.l.b16 %v1218
        %v1347 = vunpack.c.h.b16 %v1218
        %v1348 = vunpack.c.l.b16 %v1219
        %v1349 = vunpack.c.h.b16 %v1219
        %v1350 = vunpack.c.l.b16 %v1220
        %v1351 = vunpack.c.h.b16 %v1220
        %v1352 = vunpack.c.l.b16 %v1221
        %v1353 = vunpack.c.h.b16 %v1221
        %v1354 = vunpack.c.l.b16 %v1222
        %v1355 = vunpack.c.h.b16 %v1222
        %v1356 = vunpack.c.l.b16 %v1223
        %v1357 = vunpack.c.h.b16 %v1223
        %v1358 = vunpack.c.l.b16 %v1224
        %v1359 = vunpack.c.h.b16 %v1224
        %v1360 = vunpack.c.l.b16 %v1225
        %v1361 = vunpack.c.h.b16 %v1225
        %v1362 = vunpack.c.l.b16 %v1226
        %v1363 = vunpack.c.h.b16 %v1226
        %v1364 = vunpack.c.l.b16 %v1227
        %v1365 = vunpack.c.h.b16 %v1227
        %v1366 = vunpack.c.l.b16 %v1228
        %v1367 = vunpack.c.h.b16 %v1228
        %v1368 = vunpack.c.l.b16 %v1229
        %v1369 = vunpack.c.h.b16 %v1229
        %v1370 = vunpack.c.l.b16 %v1230
        %v1371 = vunpack.c.h.b16 %v1230
        %v1372 = vunpack.c.l.b16 %v1231
        %v1373 = vunpack.c.h.b16 %v1231
        %v1374 = vunpack.c.l.b16 %v1232
        %v1375 = vunpack.c.h.b16 %v1232
        %v1376 = vunpack.c.l.b16 %v1233
        %v1377 = vunpack.c.h.b16 %v1233
        %v1378 = vunpack.c.l.b16 %v1234
        %v1379 = vunpack.c.h.b16 %v1234
        %v1380 = vunpack.c.l.b16 %v1235
        %v1381 = vunpack.c.h.b16 %v1235
        %v1382 = vunpack.c.l.b16 %v1236
        %v1383 = vunpack.c.h.b16 %v1236
        %v1384 = vunpack.c.l.b16 %v1237
        %v1385 = vunpack.c.h.b16 %v1237
        %v1386 = vunpack.c.l.b16 %v1238
        %v1387 = vunpack.c.h.b16 %v1238
        %v1388 = vunpack.c.l.b16 %v1239
        %v1389 = vunpack.c.h.b16 %v1239
        %v1390 = vunpack.c.l.b16 %v1240
        %v1391 = vunpack.c.h.b16 %v1240
        %v1392 = vunpack.c.l.b16 %v1241
        %v1393 = vunpack.c.h.b16 %v1241
        %v1394 = vunpack.c.l.b16 %v1242
        %v1395 = vunpack.c.h.b16 %v1242
        %v1396 = vunpack.c.l.b16 %v1243
        %v1397 = vunpack.c.h.b16 %v1243
        %v1398 = vunpack.c.l.b16 %v1244
        %v1399 = vunpack.c.h.b16 %v1244
        %v1400 = vunpack.c.l.b16 %v1245
        %v1401 = vunpack.c.h.b16 %v1245
        %v1402 = vunpack.c.l.b16 %v1246
        %v1403 = vunpack.c.h.b16 %v1246
        %v1404 = vunpack.c.l.b16 %v1247
        %v1405 = vunpack.c.h.b16 %v1247
        %v1406 = vunpack.c.l.b16 %v1248
        %v1407 = vunpack.c.h.b16 %v1248
        %v1408 = vunpack.c.l.b16 %v1249
        %v1409 = vunpack.c.h.b16 %v1249
        %v1410 = vunpack.c.l.b16 %v1250
        %v1411 = vunpack.c.h.b16 %v1250
        %v1412 = vunpack.c.l.b16 %v1251
        %v1413 = vunpack.c.h.b16 %v1251
        %v1414 = vunpack.c.l.b16 %v1252
        %v1415 = vunpack.c.h.b16 %v1252
        %v1416 = vunpack.c.l.b16 %v1253
        %v1417 = vunpack.c.h.b16 %v1253
        %v1418 = vunpack.c.l.b16 %v1254
        %v1419 = vunpack.c.h.b16 %v1254
        %v1420 = vunpack.c.l.b16 %v1255
        %v1421 = vunpack.c.h.b16 %v1255
        %v1422 = vunpack.c.l.b16 %v1256
        %v1423 = vunpack.c.h.b16 %v1256
        %v1424 = vunpack.c.l.b16 %v1257
        %v1425 = vunpack.c.h.b16 %v1257
        %v1426 = vunpack.c.l.b16 %v1258
        %v1427 = vunpack.c.h.b16 %v1258
        %v1428 = vunpack.c.l.b16 %v1259
        %v1429 = vunpack.c.h.b16 %v1259
        %v1430 = vunpack.c.l.b16 %v1260
        %v1431 = vunpack.c.h.b16 %v1260
        %v1432 = vunpack.c.l.b16 %v1261
        %v1433 = vunpack.c.h.b16 %v1261
        %v1434 = vunpack.c.l.b16 %v1262
        %v1435 = vunpack.c.h.b16 %v1262
        %v1436 = vunpack.c.l.b16 %v1263
        %v1437 = vunpack.c.h.b16 %v1263
        %v1438 = vunpack.c.l.b16 %v1264
        %v1439 = vunpack.c.h.b16 %v1264
        %v1440 = vunpack.c.l.b16 %v1265
        %v1441 = vunpack.c.h.b16 %v1265
        %v1442 = vpack.c.b16 %v1352, %v1346
        %v1443 = vpack.c.b16 %v1353, %v1347
        %v1444 = vpack.c.b16 %v1354, %v1348
        %v1445 = vpack.c.b16 %v1355, %v1349
        %v1446 = vpack.c.b16 %v1356, %v1350
        %v1447 = vpack.c.b16 %v1357, %v1351
        %v1448 = vpack.c.b16 %v1364, %v1358
        %v1449 = vpack.c.b16 %v1365, %v1359
        %v1450 = vpack.c.b16 %v1366, %v1360
        %v1451 = vpack.c.b16 %v1367, %v1361
        %v1452 = vpack.c.b16 %v1368, %v1362
        %v1453 = vpack.c.b16 %v1369, %v1363
        %v1454 = vpack.c.b16 %v1376, %v1370
        %v1455 = vpack.c.b16 %v1377, %v1371
        %v1456 = vpack.c.b16 %v1378, %v1372
        %v1457 = vpack.c.b16 %v1379, %v1373
        %v1458 = vpack.c.b16 %v1380, %v1374
        %v1459 = vpack.c.b16 %v1381, %v1375
        %v1460 = vpack.c.b16 %v1388, %v1382
        %v1461 = vpack.c.b16 %v1389, %v1383
        %v1462 = vpack.c.b16 %v1390, %v1384
        %v1463 = vpack.c.b16 %v1391, %v1385
        %v1464 = vpack.c.b16 %v1392, %v1386
        %v1465 = vpack.c.b16 %v1393, %v1387
        %v1466 = vpack.c.b16 %v1400, %v1394
        %v1467 = vpack.c.b16 %v1401, %v1395
        %v1468 = vpack.c.b16 %v1402, %v1396
        %v1469 = vpack.c.b16 %v1403, %v1397
        %v1470 = vpack.c.b16 %v1404, %v1398
        %v1471 = vpack.c.b16 %v1405, %v1399
        %v1472 = vpack.c.b16 %v1412, %v1406
        %v1473 = vpack.c.b16 %v1413, %v1407
        %v1474 = vpack.c.b16 %v1414, %v1408
        %v1475 = vpack.c.b16 %v1415, %v1409
        %v1476 = vpack.c.b16 %v1416, %v1410
        %v1477 = vpack.c.b16 %v1417, %v1411
        %v1478 = vpack.c.b16 %v1424, %v1418
        %v1479 = vpack.c.b16 %v1425, %v1419
        %v1480 = vpack.c.b16 %v1426, %v1420
        %v1481 = vpack.c.b16 %v1427, %v1421
        %v1482 = vpack.c.b16 %v1428, %v1422
        %v1483 = vpack.c.b16 %v1429, %v1423
        %v1484 = vpack.c.b16 %v1436, %v1430
        %v1485 = vpack.c.b16 %v1437, %v1431
        %v1486 = vpack.c.b16 %v1438, %v1432
        %v1487 = vpack.c.b16 %v1439, %v1433
        %v1488 = vpack.c.b16 %v1440, %v1434
        %v1489 = vpack.c.b16 %v1441, %v1435
        %1538 = vmatprep.subr.bf16.mxu0 %v1443
        %1539 = vmatpush1.bf16.msra.mxu0 %v1442
        %1540 = vmatprep.subr.bf16.mxu0 %v1449
        %1541 = vmatpush1.bf16.msra.mxu0 %v1448
        %1542 = vmatprep.subr.bf16.mxu0 %v1455
        %1543 = vmatpush1.bf16.msra.mxu0 %v1454
        %1544 = vmatprep.subr.bf16.mxu0 %v1461
        %1545 = vmatpush1.bf16.msra.mxu0 %v1460
        %1546 = vmatprep.subr.bf16.mxu0 %v1467
        %1547 = vmatpush1.bf16.msra.mxu0 %v1466
        %1548 = vmatprep.subr.bf16.mxu0 %v1473
        %1549 = vmatpush1.bf16.msra.mxu0 %v1472
        %1550 = vmatprep.subr.bf16.mxu0 %v1479
        %1551 = vmatpush1.bf16.msra.mxu0 %v1478
        %1552 = vmatprep.subr.bf16.mxu0 %v1485
        %1553 = vmatpush1.bf16.msra.mxu0 %v1484
        %1554 = vmatprep.subr.bf16.mxu0 0
        %1555 = vmatpush1.bf16.msra.mxu0 0
        %1556 = vmatprep.subr.bf16.mxu0 0
        %1557 = vmatpush1.bf16.msra.mxu0 0
        %1558 = vmatprep.subr.bf16.mxu0 0
        %1559 = vmatpush1.bf16.msra.mxu0 0
        %1560 = vmatprep.subr.bf16.mxu0 0
        %1561 = vmatpush1.bf16.msra.mxu0 0
        %1562 = vmatprep.subr.bf16.mxu0 0
        %1563 = vmatpush1.bf16.msra.mxu0 0
        %1564 = vmatprep.subr.bf16.mxu0 0
        %1565 = vmatpush1.bf16.msra.mxu0 0
        %1566 = vmatprep.subr.bf16.mxu0 0
        %1567 = vmatpush1.bf16.msra.mxu0 0
        %1568 = vmatprep.subr.bf16.mxu0 0
        %1569 = vmatpush1.bf16.msra.mxu0 0
        %1570 = vmatprep.mubr.bf16.mxu0 0
        %1571 = vmatmul.mubr.bf16.gmra.mrb[0].mxu0 %v1217
        %v1572 = vpop.f32.mrb[0].mxu0
        %v1573 = vadd.f32 %v1271, %v1572
        %v1574 = vpop.f32.mrb[0].mxu0
        %v1575 = vadd.f32 %v1275, %v1574
        %v1576 = vpop.f32.mrb[0].mxu0
        %v1577 = vadd.f32 %v1271, %v1576
        %v1578 = vpop.f32.mrb[0].mxu0
        %v1579 = vadd.f32 %v1275, %v1578
        %1580 = vdwg.mxu0
        %1581 = vmatprep.subr.bf16.mxu0 %v1445
        %1582 = vmatpush1.bf16.msra.mxu0 %v1444
        %1583 = vmatprep.subr.bf16.mxu0 %v1451
        %1584 = vmatpush1.bf16.msra.mxu0 %v1450
        %1585 = vmatprep.subr.bf16.mxu0 %v1457
        %1586 = vmatpush1.bf16.msra.mxu0 %v1456
        %1587 = vmatprep.subr.bf16.mxu0 %v1463
        %1588 = vmatpush1.bf16.msra.mxu0 %v1462
        %1589 = vmatprep.subr.bf16.mxu0 %v1469
        %1590 = vmatpush1.bf16.msra.mxu0 %v1468
        %1591 = vmatprep.subr.bf16.mxu0 %v1475
        %1592 = vmatpush1.bf16.msra.mxu0 %v1474
        %1593 = vmatprep.subr.bf16.mxu0 %v1481
        %1594 = vmatpush1.bf16.msra.mxu0 %v1480
        %1595 = vmatprep.subr.bf16.mxu0 %v1487
        %1596 = vmatpush1.bf16.msra.mxu0 %v1486
        %1597 = vmatprep.subr.bf16.mxu0 0
        %1598 = vmatpush1.bf16.msra.mxu0 0
        %1599 = vmatprep.subr.bf16.mxu0 0
        %1600 = vmatpush1.bf16.msra.mxu0 0
        %1601 = vmatprep.subr.bf16.mxu0 0
        %1602 = vmatpush1.bf16.msra.mxu0 0
        %1603 = vmatprep.subr.bf16.mxu0 0
        %1604 = vmatpush1.bf16.msra.mxu0 0
        %1605 = vmatprep.subr.bf16.mxu0 0
        %1606 = vmatpush1.bf16.msra.mxu0 0
        %1607 = vmatprep.subr.bf16.mxu0 0
        %1608 = vmatpush1.bf16.msra.mxu0 0
        %1609 = vmatprep.subr.bf16.mxu0 0
        %1610 = vmatpush1.bf16.msra.mxu0 0
        %1611 = vmatprep.subr.bf16.mxu0 0
        %1612 = vmatpush1.bf16.msra.mxu0 0
        %1613 = vmatprep.mubr.bf16.mxu0 0
        %1614 = vmatmul.mubr.bf16.gmra.mrb[0].mxu0 %v1217
        %v1615 = vpop.f32.mrb[0].mxu0
        %v1616 = vadd.f32 %v1279, %v1615
        %v1617 = vpop.f32.mrb[0].mxu0
        %v1618 = vadd.f32 %v1283, %v1617
        %v1619 = vpop.f32.mrb[0].mxu0
        %v1620 = vadd.f32 %v1279, %v1619
        %v1621 = vpop.f32.mrb[0].mxu0
        %v1622 = vadd.f32 %v1283, %v1621
        %1623 = vdwg.mxu0
        %1624 = vmatprep.subr.bf16.mxu0 %v1447
        %1625 = vmatpush1.bf16.msra.mxu0 %v1446
        %1626 = vmatprep.subr.bf16.mxu0 %v1453
        %1627 = vmatpush1.bf16.msra.mxu0 %v1452
        %1628 = vmatprep.subr.bf16.mxu0 %v1459
        %1629 = vmatpush1.bf16.msra.mxu0 %v1458
        %1630 = vmatprep.subr.bf16.mxu0 %v1465
        %1631 = vmatpush1.bf16.msra.mxu0 %v1464
        %1632 = vmatprep.subr.bf16.mxu0 %v1471
        %1633 = vmatpush1.bf16.msra.mxu0 %v1470
        %1634 = vmatprep.subr.bf16.mxu0 %v1477
        %1635 = vmatpush1.bf16.msra.mxu0 %v1476
        %1636 = vmatprep.subr.bf16.mxu0 %v1483
        %1637 = vmatpush1.bf16.msra.mxu0 %v1482
        %1638 = vmatprep.subr.bf16.mxu0 %v1489
        %1639 = vmatpush1.bf16.msra.mxu0 %v1488
        %1640 = vmatprep.subr.bf16.mxu0 0
        %1641 = vmatpush1.bf16.msra.mxu0 0
        %1642 = vmatprep.subr.bf16.mxu0 0
        %1643 = vmatpush1.bf16.msra.mxu0 0
        %1644 = vmatprep.subr.bf16.mxu0 0
        %1645 = vmatpush1.bf16.msra.mxu0 0
        %1646 = vmatprep.subr.bf16.mxu0 0
        %1647 = vmatpush1.bf16.msra.mxu0 0
        %1648 = vmatprep.subr.bf16.mxu0 0
        %1649 = vmatpush1.bf16.msra.mxu0 0
        %1650 = vmatprep.subr.bf16.mxu0 0
        %1651 = vmatpush1.bf16.msra.mxu0 0
        %1652 = vmatprep.subr.bf16.mxu0 0
        %1653 = vmatpush1.bf16.msra.mxu0 0
        %1654 = vmatprep.subr.bf16.mxu0 0
        %1655 = vmatpush1.bf16.msra.mxu0 0
        %1656 = vmatprep.mubr.bf16.mxu0 0
        %1657 = vmatmul.mubr.bf16.gmra.mrb[0].mxu0 %v1217
        %v1658 = vpop.f32.mrb[0].mxu0
        %v1659 = vadd.f32 %v1287, %v1658
        %v1660 = vpop.f32.mrb[0].mxu0
        %v1661 = vadd.f32 %v1291, %v1660
        %v1662 = vpop.f32.mrb[0].mxu0
        %v1663 = vadd.f32 %v1287, %v1662
        %v1664 = vpop.f32.mrb[0].mxu0
        %v1665 = vadd.f32 %v1291, %v1664
        %1666 = vdwg.mxu0
        %v1667 = vmax.f32 %v1573, 0.0
        %v1668 = vmax.f32 %v1575, 0.0
        %v1669 = vmax.f32 %v1616, 0.0
        %v1670 = vmax.f32 %v1577, 0.0
        %v1671 = vmax.f32 %v1579, 0.0
        %v1672 = vmax.f32 %v1620, 0.0
        %v1673 = vmin.f32 %v1667, 6.0
        %v1674 = vmin.f32 %v1668, 6.0
        %v1675 = vmin.f32 %v1669, 6.0
        %v1676 = vmin.f32 %v1670, 6.0
        %v1677 = vmin.f32 %v1671, 6.0
        %v1678 = vmin.f32 %v1672, 6.0
        %v1679 = vmul.f32 %v1673, %v1618
        %v1680 = vmul.f32 %v1674, %v1659
        %v1681 = vmul.f32 %v1675, %v1661
        %v1682 = vmul.f32 %v1676, %v1622
        %v1683 = vmul.f32 %v1677, %v1663
        %v1684 = vmul.f32 %v1678, %v1665
        %v1685 = vpack.c.bf16 %v1682, %v1679
        %v1686 = vpack.c.bf16 %v1683, %v1680
        %v1687 = vpack.c.bf16 %v1684, %v1681
        %v1688 = vld [vmem:[#allocation9] sm:$0xf]
        %v1689 = vld [vmem:[#allocation9 + $0x4] sm:$0xf]
        %v1690 = vld [vmem:[#allocation9 + $0x8] sm:$0xf]
        %v1691 = vld [vmem:[#allocation9 + $0xc] sm:$0xf]
        %v1692 = vld [vmem:[#allocation9 + $0x10] sm:$0xf]
        %v1693 = vld [vmem:[#allocation9 + $0x14] sm:$0xf]
        %v1694 = vld [vmem:[#allocation9 + $0x18] sm:$0xf]
        %v1695 = vld [vmem:[#allocation9 + $0x1c] sm:$0xf]
        %v1696 = vld [vmem:[#allocation9 + $0x20] sm:$0xf]
        %v1697 = vld [vmem:[#allocation9 + $0x24] sm:$0xf]
        %v1698 = vld [vmem:[#allocation9 + $0x28] sm:$0xf]
        %v1699 = vld [vmem:[#allocation9 + $0x2c] sm:$0xf]
        %v1700 = vld [vmem:[#allocation9 + $0x30] sm:$0xf]
        %v1701 = vld [vmem:[#allocation9 + $0x34] sm:$0xf]
        %v1702 = vld [vmem:[#allocation9 + $0x38] sm:$0xf]
        %v1703 = vld [vmem:[#allocation9 + $0x3c] sm:$0xf]
        %v1704 = vld [vmem:[#allocation9 + $0x40] sm:$0xf]
        %v1705 = vld [vmem:[#allocation9 + $0x44] sm:$0xf]
        %v1706 = vld [vmem:[#allocation9 + $0x48] sm:$0xf]
        %v1707 = vld [vmem:[#allocation9 + $0x4c] sm:$0xf]
        %v1708 = vld [vmem:[#allocation9 + $0x50] sm:$0xf]
        %v1709 = vld [vmem:[#allocation9 + $0x54] sm:$0xf]
        %v1710 = vld [vmem:[#allocation9 + $0x58] sm:$0xf]
        %v1711 = vld [vmem:[#allocation9 + $0x5c] sm:$0xf]
        %v1712 = vld [vmem:[#allocation9 + $0x60] sm:$0xf]
        %v1713 = vld [vmem:[#allocation9 + $0x64] sm:$0xf]
        %v1714 = vld [vmem:[#allocation9 + $0x68] sm:$0xf]
        %v1715 = vld [vmem:[#allocation9 + $0x6c] sm:$0xf]
        %v1716 = vld [vmem:[#allocation9 + $0x70] sm:$0xf]
        %v1717 = vld [vmem:[#allocation9 + $0x74] sm:$0xf]
        %v1718 = vld [vmem:[#allocation9 + $0x78] sm:$0xf]
        %v1719 = vld [vmem:[#allocation9 + $0x7c] sm:$0xf]
        %v1720 = vld [vmem:[#allocation9 + $0x80] sm:$0xf]
        %v1721 = vld [vmem:[#allocation9 + $0x84] sm:$0xf]
        %v1722 = vld [vmem:[#allocation9 + $0x88] sm:$0xf]
        %v1723 = vld [vmem:[#allocation9 + $0x8c] sm:$0xf]
        %v1724 = vld [vmem:[#allocation9 + $0x90] sm:$0xf]
        %v1725 = vld [vmem:[#allocation9 + $0x94] sm:$0xf]
        %v1726 = vld [vmem:[#allocation9 + $0x98] sm:$0xf]
        %v1727 = vld [vmem:[#allocation9 + $0x9c] sm:$0xf]
        %v1728 = vld [vmem:[#allocation9 + $0xa0] sm:$0xf]
        %v1729 = vld [vmem:[#allocation9 + $0xa4] sm:$0xf]
        %v1730 = vld [vmem:[#allocation9 + $0xa8] sm:$0xf]
        %v1731 = vld [vmem:[#allocation9 + $0xac] sm:$0xf]
        %v1732 = vld [vmem:[#allocation9 + $0xb0] sm:$0xf]
        %v1733 = vld [vmem:[#allocation9 + $0xb4] sm:$0xf]
        %v1734 = vld [vmem:[#allocation9 + $0xb8] sm:$0xf]
        %v1735 = vld [vmem:[#allocation9 + $0xbc] sm:$0xf]
        %v1736 = vld [vmem:[%s6] sm:$0x1]
        %v1738 = vlaneseq
        %v1739 = vshrl.u32 %v1738, 7
        %v1740 = vsub.s32 0, %v1739
        %v1741 = vrot.slane %v1736, %v1740
        %v1791 = vunpack.c.l.b16 %v1688
        %v1792 = vunpack.c.l.b16 %v1689
        %v1793 = vunpack.c.l.b16 %v1690
        %v1794 = vunpack.c.l.b16 %v1691
        %v1795 = vunpack.c.l.b16 %v1692
        %v1796 = vunpack.c.l.b16 %v1693
        %v1797 = vunpack.c.l.b16 %v1694
        %v1798 = vunpack.c.l.b16 %v1695
        %v1799 = vunpack.c.l.b16 %v1696
        %v1800 = vunpack.c.l.b16 %v1697
        %v1801 = vunpack.c.l.b16 %v1698
        %v1802 = vunpack.c.l.b16 %v1699
        %v1803 = vunpack.c.l.b16 %v1700
        %v1804 = vunpack.c.l.b16 %v1701
        %v1805 = vunpack.c.l.b16 %v1702
        %v1806 = vunpack.c.l.b16 %v1703
        %v1807 = vunpack.c.l.b16 %v1704
        %v1808 = vunpack.c.l.b16 %v1705
        %v1809 = vunpack.c.l.b16 %v1706
        %v1810 = vunpack.c.l.b16 %v1707
        %v1811 = vunpack.c.l.b16 %v1708
        %v1812 = vunpack.c.l.b16 %v1709
        %v1813 = vunpack.c.l.b16 %v1710
        %v1814 = vunpack.c.l.b16 %v1711
        %v1815 = vunpack.c.l.b16 %v1712
        %v1816 = vunpack.c.l.b16 %v1713
        %v1817 = vunpack.c.l.b16 %v1714
        %v1818 = vunpack.c.l.b16 %v1715
        %v1819 = vunpack.c.l.b16 %v1716
        %v1820 = vunpack.c.l.b16 %v1717
        %v1821 = vunpack.c.l.b16 %v1718
        %v1822 = vunpack.c.l.b16 %v1719
        %v1823 = vunpack.c.l.b16 %v1720
        %v1824 = vunpack.c.l.b16 %v1721
        %v1825 = vunpack.c.l.b16 %v1722
        %v1826 = vunpack.c.l.b16 %v1723
        %v1827 = vunpack.c.l.b16 %v1724
        %v1828 = vunpack.c.l.b16 %v1725
        %v1829 = vunpack.c.l.b16 %v1726
        %v1830 = vunpack.c.l.b16 %v1727
        %v1831 = vunpack.c.l.b16 %v1728
        %v1832 = vunpack.c.l.b16 %v1729
        %v1833 = vunpack.c.l.b16 %v1730
        %v1834 = vunpack.c.l.b16 %v1731
        %v1835 = vunpack.c.l.b16 %v1732
        %v1836 = vunpack.c.l.b16 %v1733
        %v1837 = vunpack.c.l.b16 %v1734
        %v1838 = vunpack.c.l.b16 %v1735
        %v1839 = vpack.c.b16 %v1792, %v1791
        %v1840 = vpack.c.b16 %v1794, %v1793
        %v1841 = vpack.c.b16 %v1796, %v1795
        %v1842 = vpack.c.b16 %v1798, %v1797
        %v1843 = vpack.c.b16 %v1800, %v1799
        %v1844 = vpack.c.b16 %v1802, %v1801
        %v1845 = vpack.c.b16 %v1804, %v1803
        %v1846 = vpack.c.b16 %v1806, %v1805
        %v1847 = vpack.c.b16 %v1808, %v1807
        %v1848 = vpack.c.b16 %v1810, %v1809
        %v1849 = vpack.c.b16 %v1812, %v1811
        %v1850 = vpack.c.b16 %v1814, %v1813
        %v1851 = vpack.c.b16 %v1816, %v1815
        %v1852 = vpack.c.b16 %v1818, %v1817
        %v1853 = vpack.c.b16 %v1820, %v1819
        %v1854 = vpack.c.b16 %v1822, %v1821
        %v1855 = vpack.c.b16 %v1824, %v1823
        %v1856 = vpack.c.b16 %v1826, %v1825
        %v1857 = vpack.c.b16 %v1828, %v1827
        %v1858 = vpack.c.b16 %v1830, %v1829
        %v1859 = vpack.c.b16 %v1832, %v1831
        %v1860 = vpack.c.b16 %v1834, %v1833
        %v1861 = vpack.c.b16 %v1836, %v1835
        %v1862 = vpack.c.b16 %v1838, %v1837
        %1887 = vmatprep.subr.bf16.mxu0 0
        %1888 = vmatpush1.bf16.msra.mxu0 %v1839
        %1889 = vmatprep.subr.bf16.mxu0 0
        %1890 = vmatpush1.bf16.msra.mxu0 %v1840
        %1891 = vmatprep.subr.bf16.mxu0 0
        %1892 = vmatpush1.bf16.msra.mxu0 %v1841
        %1893 = vmatprep.subr.bf16.mxu0 0
        %1894 = vmatpush1.bf16.msra.mxu0 %v1842
        %1895 = vmatprep.subr.bf16.mxu0 0
        %1896 = vmatpush1.bf16.msra.mxu0 %v1843
        %1897 = vmatprep.subr.bf16.mxu0 0
        %1898 = vmatpush1.bf16.msra.mxu0 %v1844
        %1899 = vmatprep.subr.bf16.mxu0 0
        %1900 = vmatpush1.bf16.msra.mxu0 %v1845
        %1901 = vmatprep.subr.bf16.mxu0 0
        %1902 = vmatpush1.bf16.msra.mxu0 %v1846
        %1903 = vmatprep.subr.bf16.mxu0 0
        %1904 = vmatpush1.bf16.msra.mxu0 %v1847
        %1905 = vmatprep.subr.bf16.mxu0 0
        %1906 = vmatpush1.bf16.msra.mxu0 %v1848
        %1907 = vmatprep.subr.bf16.mxu0 0
        %1908 = vmatpush1.bf16.msra.mxu0 %v1849
        %1909 = vmatprep.subr.bf16.mxu0 0
        %1910 = vmatpush1.bf16.msra.mxu0 %v1850
        %1911 = vmatprep.subr.bf16.mxu0 0
        %1912 = vmatpush1.bf16.msra.mxu0 %v1851
        %1913 = vmatprep.subr.bf16.mxu0 0
        %1914 = vmatpush1.bf16.msra.mxu0 %v1852
        %1915 = vmatprep.subr.bf16.mxu0 0
        %1916 = vmatpush1.bf16.msra.mxu0 %v1853
        %1917 = vmatprep.subr.bf16.mxu0 0
        %1918 = vmatpush1.bf16.msra.mxu0 %v1854
        %1919 = vmatprep.mubr.bf16.mxu0 %v1686
        %1920 = vmatmul.mubr.bf16.gmra.mrb[0].mxu0 %v1685
        %v1921 = vpop.f32.mrb[0].mxu0
        %v1922 = vadd.f32 %v1741, %v1921
        %v1923 = vpop.f32.mrb[0].mxu0
        %v1924 = vpop.f32.mrb[0].mxu0
        %v1925 = vadd.f32 %v1741, %v1924
        %v1926 = vpop.f32.mrb[0].mxu0
        %1927 = vdwg.mxu0
        %1928 = vmatprep.subr.bf16.mxu0 0
        %1929 = vmatpush1.bf16.msra.mxu0 %v1855
        %1930 = vmatprep.subr.bf16.mxu0 0
        %1931 = vmatpush1.bf16.msra.mxu0 %v1856
        %1932 = vmatprep.subr.bf16.mxu0 0
        %1933 = vmatpush1.bf16.msra.mxu0 %v1857
        %1934 = vmatprep.subr.bf16.mxu0 0
        %1935 = vmatpush1.bf16.msra.mxu0 %v1858
        %1936 = vmatprep.subr.bf16.mxu0 0
        %1937 = vmatpush1.bf16.msra.mxu0 %v1859
        %1938 = vmatprep.subr.bf16.mxu0 0
        %1939 = vmatpush1.bf16.msra.mxu0 %v1860
        %1940 = vmatprep.subr.bf16.mxu0 0
        %1941 = vmatpush1.bf16.msra.mxu0 %v1861
        %1942 = vmatprep.subr.bf16.mxu0 0
        %1943 = vmatpush1.bf16.msra.mxu0 %v1862
        %1944 = vmatprep.subr.bf16.mxu0 0
        %1945 = vmatpush1.bf16.msra.mxu0 0
        %1946 = vmatprep.subr.bf16.mxu0 0
        %1947 = vmatpush1.bf16.msra.mxu0 0
        %1948 = vmatprep.subr.bf16.mxu0 0
        %1949 = vmatpush1.bf16.msra.mxu0 0
        %1950 = vmatprep.subr.bf16.mxu0 0
        %1951 = vmatpush1.bf16.msra.mxu0 0
        %1952 = vmatprep.subr.bf16.mxu0 0
        %1953 = vmatpush1.bf16.msra.mxu0 0
        %1954 = vmatprep.subr.bf16.mxu0 0
        %1955 = vmatpush1.bf16.msra.mxu0 0
        %1956 = vmatprep.subr.bf16.mxu0 0
        %1957 = vmatpush1.bf16.msra.mxu0 0
        %1958 = vmatprep.subr.bf16.mxu0 0
        %1959 = vmatpush1.bf16.msra.mxu0 0
        %1960 = vmatprep.mubr.bf16.mxu0 0
        %1961 = vmatmul.mubr.bf16.gmra.mrb[0].mxu0 %v1687
        %v1962 = vpop.f32.mrb[0].mxu0
        %v1963 = vadd.f32 %v1922, %v1962
        %v1964 = vpop.f32.mrb[0].mxu0
        %v1965 = vpop.f32.mrb[0].mxu0
        %v1966 = vadd.f32 %v1925, %v1965
        %v1967 = vpop.f32.mrb[0].mxu0
        %1968 = vdwg.mxu0
        %v1969 = vpack.c.bf16 %v1966, %v1963
        %1970 = vst [vmem:[#allocation2 + $0x8] sm:$0xff] %v1969
        %v1971 = vld [vmem:[#allocation2] sm:$0xc0]
        %v1972 = vld [vmem:[#allocation2 + $0x8] sm:$0x7f]
        %v1973 = vld [vmem:[#allocation2] sm:$0x80]
        %v1974 = vld [vmem:[#allocation2 + $0x8] sm:$0xff]
        %v1975 = vld [vmem:[#allocation2 + $0x8] sm:$0xff]
        %v1976 = vld [vmem:[#allocation2 + $0x10] sm:$0x1]
        %v1977 = vld [vmem:[#allocation2 + $0x8] sm:$0xfe]
        %v1978 = vld [vmem:[#allocation2 + $0x10] sm:$0x3]
        %v1980 = vshrl.u32 %v1973, 16
        %v1982 = vshll.u32 %v1973, 16
        %v1984 = vrot.slane %v1982, 1
        %v1985 = vor.u32 %v1980, %v1984
        %v1987 = vshll.u32 %v1972, 16
        %v1989 = vrot.slane %v1987, 1
        %v1990 = vsel %vm424, %v1985, %v1989
        %v1991 = vshrl.u32 %v1972, 16
        %v1993 = vor.u32 %v1991, %v1989
        %v1996 = vrot.slane %v1973, 1
        %v1997 = vrot.slane %v1974, 1
        %v1998 = vsel %vm442, %v1996, %v1997
        %v2000 = vshrl.u32 %v1974, 16
        %v2002 = vrot.slane %v2000, 1
        %v2003 = vshll.u32 %v1974, 16
        %v2005 = vrot.slane %v2003, 2
        %v2006 = vor.u32 %v2002, %v2005
        %v2009 = vrot.slane %v1975, 2
        %v2010 = vrot.slane %v1976, 2
        %v2011 = vsel %vm456, %v2009, %v2010
        %v2013 = vshrl.u32 %v1977, 16
        %v2015 = vrot.slane %v2013, 2
        %v2016 = vshll.u32 %v1977, 16
        %v2018 = vrot.slane %v2016, 3
        %v2019 = vor.u32 %v2015, %v2018
        %v2021 = vshrl.u32 %v1976, 16
        %v2023 = vrot.slane %v2021, 2
        %v2024 = vshll.u32 %v1976, 16
        %v2026 = vrot.slane %v2024, 3
        %v2027 = vor.u32 %v2023, %v2026
        %v2028 = vsel %vm460, %v2019, %v2027
        %v2031 = vrot.slane %v1977, 3
        %v2032 = vrot.slane %v1978, 3
        %v2033 = vsel %vm480, %v2031, %v2032
        %v2034 = vld [vmem:[#allocation11] sm:$0xf]
        %v2035 = vld [vmem:[#allocation11 + $0x4] sm:$0xf]
        %v2036 = vld [vmem:[#allocation11 + $0x8] sm:$0xf]
        %v2037 = vld [vmem:[#allocation11 + $0xc] sm:$0xf]
        %v2038 = vld [vmem:[#allocation11 + $0x10] sm:$0xf]
        %v2039 = vld [vmem:[#allocation11 + $0x14] sm:$0xf]
        %v2040 = vld [vmem:[#allocation11 + $0x18] sm:$0xf]
        %v2041 = vld [vmem:[#allocation11 + $0x1c] sm:$0xf]
        %v2042 = vld [vmem:[#allocation11 + $0x20] sm:$0xf]
        %v2043 = vld [vmem:[#allocation11 + $0x24] sm:$0xf]
        %v2044 = vld [vmem:[#allocation11 + $0x28] sm:$0xf]
        %v2045 = vld [vmem:[#allocation11 + $0x2c] sm:$0xf]
        %v2046 = vld [vmem:[#allocation11 + $0x30] sm:$0xf]
        %v2047 = vld [vmem:[#allocation11 + $0x34] sm:$0xf]
        %v2048 = vld [vmem:[#allocation11 + $0x38] sm:$0xf]
        %v2049 = vld [vmem:[#allocation11 + $0x3c] sm:$0xf]
        %v2050 = vld [vmem:[#allocation11 + $0x40] sm:$0xf]
        %v2051 = vld [vmem:[#allocation11 + $0x44] sm:$0xf]
        %v2052 = vld [vmem:[#allocation11 + $0x48] sm:$0xf]
        %v2053 = vld [vmem:[#allocation11 + $0x4c] sm:$0xf]
        %v2054 = vld [vmem:[#allocation11 + $0x50] sm:$0xf]
        %v2055 = vld [vmem:[#allocation11 + $0x54] sm:$0xf]
        %v2056 = vld [vmem:[#allocation11 + $0x58] sm:$0xf]
        %v2057 = vld [vmem:[#allocation11 + $0x5c] sm:$0xf]
        %v2058 = vld [vmem:[#allocation11 + $0x60] sm:$0xf]
        %v2059 = vld [vmem:[#allocation11 + $0x64] sm:$0xf]
        %v2060 = vld [vmem:[#allocation11 + $0x68] sm:$0xf]
        %v2061 = vld [vmem:[#allocation11 + $0x6c] sm:$0xf]
        %v2062 = vld [vmem:[#allocation11 + $0x70] sm:$0xf]
        %v2063 = vld [vmem:[#allocation11 + $0x74] sm:$0xf]
        %v2064 = vld [vmem:[#allocation11 + $0x78] sm:$0xf]
        %v2065 = vld [vmem:[#allocation11 + $0x7c] sm:$0xf]
        %v2066 = vld [vmem:[#allocation11 + $0x80] sm:$0xf]
        %v2067 = vld [vmem:[#allocation11 + $0x84] sm:$0xf]
        %v2068 = vld [vmem:[#allocation11 + $0x88] sm:$0xf]
        %v2069 = vld [vmem:[#allocation11 + $0x8c] sm:$0xf]
        %v2070 = vld [vmem:[#allocation11 + $0x90] sm:$0xf]
        %v2071 = vld [vmem:[#allocation11 + $0x94] sm:$0xf]
        %v2072 = vld [vmem:[#allocation11 + $0x98] sm:$0xf]
        %v2073 = vld [vmem:[#allocation11 + $0x9c] sm:$0xf]
        %v2074 = vld [vmem:[#allocation11 + $0xa0] sm:$0xf]
        %v2075 = vld [vmem:[#allocation11 + $0xa4] sm:$0xf]
        %v2076 = vld [vmem:[#allocation11 + $0xa8] sm:$0xf]
        %v2077 = vld [vmem:[#allocation11 + $0xac] sm:$0xf]
        %v2078 = vld [vmem:[#allocation11 + $0xb0] sm:$0xf]
        %v2079 = vld [vmem:[#allocation11 + $0xb4] sm:$0xf]
        %v2080 = vld [vmem:[#allocation11 + $0xb8] sm:$0xf]
        %v2081 = vld [vmem:[#allocation11 + $0xbc] sm:$0xf]
        %v2082 = vld [vmem:[#allocation11 + $0xc0] sm:$0xf]
        %v2083 = vld [vmem:[#allocation11 + $0xc4] sm:$0xf]
        %v2084 = vld [vmem:[#allocation11 + $0xc8] sm:$0xf]
        %v2085 = vld [vmem:[#allocation11 + $0xcc] sm:$0xf]
        %v2086 = vld [vmem:[#allocation11 + $0xd0] sm:$0xf]
        %v2087 = vld [vmem:[#allocation11 + $0xd4] sm:$0xf]
        %v2088 = vld [vmem:[#allocation11 + $0xd8] sm:$0xf]
        %v2089 = vld [vmem:[#allocation11 + $0xdc] sm:$0xf]
        %v2090 = vld [vmem:[#allocation11 + $0xe0] sm:$0xf]
        %v2091 = vld [vmem:[#allocation11 + $0xe4] sm:$0xf]
        %v2092 = vld [vmem:[#allocation11 + $0xe8] sm:$0xf]
        %v2093 = vld [vmem:[#allocation11 + $0xec] sm:$0xf]
        %v2094 = vld [vmem:[#allocation11 + $0xf0] sm:$0xf]
        %v2095 = vld [vmem:[#allocation11 + $0xf4] sm:$0xf]
        %v2096 = vld [vmem:[#allocation11 + $0xf8] sm:$0xf]
        %v2097 = vld [vmem:[#allocation11 + $0xfc] sm:$0xf]
        %v2098 = vld [vmem:[#allocation11 + $0x100] sm:$0xf]
        %v2099 = vld [vmem:[#allocation11 + $0x104] sm:$0xf]
        %v2100 = vld [vmem:[#allocation11 + $0x108] sm:$0xf]
        %v2101 = vld [vmem:[#allocation11 + $0x10c] sm:$0xf]
        %v2102 = vld [vmem:[#allocation11 + $0x110] sm:$0xf]
        %v2103 = vld [vmem:[#allocation11 + $0x114] sm:$0xf]
        %v2104 = vld [vmem:[#allocation11 + $0x118] sm:$0xf]
        %v2105 = vld [vmem:[#allocation11 + $0x11c] sm:$0xf]
        %v2106 = vld [vmem:[#allocation11 + $0x120] sm:$0xf]
        %v2107 = vld [vmem:[#allocation11 + $0x124] sm:$0xf]
        %v2108 = vld [vmem:[#allocation11 + $0x128] sm:$0xf]
        %v2109 = vld [vmem:[#allocation11 + $0x12c] sm:$0xf]
        %v2110 = vld [vmem:[#allocation11 + $0x130] sm:$0xf]
        %v2111 = vld [vmem:[#allocation11 + $0x134] sm:$0xf]
        %v2112 = vld [vmem:[#allocation11 + $0x138] sm:$0xf]
        %v2113 = vld [vmem:[#allocation11 + $0x13c] sm:$0xf]
        %v2114 = vld [vmem:[#allocation11 + $0x140] sm:$0xf]
        %v2115 = vld [vmem:[#allocation11 + $0x144] sm:$0xf]
        %v2116 = vld [vmem:[#allocation11 + $0x148] sm:$0xf]
        %v2117 = vld [vmem:[#allocation11 + $0x14c] sm:$0xf]
        %v2118 = vld [vmem:[#allocation11 + $0x150] sm:$0xf]
        %v2119 = vld [vmem:[#allocation11 + $0x154] sm:$0xf]
        %v2120 = vld [vmem:[#allocation11 + $0x158] sm:$0xf]
        %v2121 = vld [vmem:[#allocation11 + $0x15c] sm:$0xf]
        %v2122 = vld [vmem:[#allocation11 + $0x160] sm:$0xf]
        %v2123 = vld [vmem:[#allocation11 + $0x164] sm:$0xf]
        %v2124 = vld [vmem:[#allocation11 + $0x168] sm:$0xf]
        %v2125 = vld [vmem:[#allocation11 + $0x16c] sm:$0xf]
        %v2126 = vld [vmem:[#allocation11 + $0x170] sm:$0xf]
        %v2127 = vld [vmem:[#allocation11 + $0x174] sm:$0xf]
        %v2128 = vld [vmem:[#allocation11 + $0x178] sm:$0xf]
        %v2129 = vld [vmem:[#allocation11 + $0x17c] sm:$0xf]
        %v2130 = vld [vmem:[#allocation11 + $0x180] sm:$0xf]
        %v2131 = vld [vmem:[#allocation11 + $0x184] sm:$0xf]
        %v2132 = vld [vmem:[#allocation11 + $0x188] sm:$0xf]
        %v2133 = vld [vmem:[#allocation11 + $0x18c] sm:$0xf]
        %v2134 = vld [vmem:[#allocation11 + $0x190] sm:$0xf]
        %v2135 = vld [vmem:[#allocation11 + $0x194] sm:$0xf]
        %v2136 = vld [vmem:[#allocation11 + $0x198] sm:$0xf]
        %v2137 = vld [vmem:[#allocation11 + $0x19c] sm:$0xf]
        %v2138 = vld [vmem:[#allocation11 + $0x1a0] sm:$0xf]
        %v2139 = vld [vmem:[#allocation11 + $0x1a4] sm:$0xf]
        %v2140 = vld [vmem:[#allocation11 + $0x1a8] sm:$0xf]
        %v2141 = vld [vmem:[#allocation11 + $0x1ac] sm:$0xf]
        %v2142 = vld [vmem:[#allocation11 + $0x1b0] sm:$0xf]
        %v2143 = vld [vmem:[#allocation11 + $0x1b4] sm:$0xf]
        %v2144 = vld [vmem:[#allocation11 + $0x1b8] sm:$0xf]
        %v2145 = vld [vmem:[#allocation11 + $0x1bc] sm:$0xf]
        %v2147 = vshrl.u32 %v1971, 16
        %v2149 = vrot.slane %v2147, 6
        %v2150 = vshll.u32 %v1971, 16
        %v2152 = vrot.slane %v2150, 7
        %v2153 = vor.u32 %v2149, %v2152
        %v2154 = vrot.slane %v1991, 6
        %v2155 = vrot.slane %v1987, 7
        %v2156 = vor.u32 %v2154, %v2155
        %v2157 = vsel %vm603, %v2153, %v2156
        %v2159 = vshrl.u32 %v1990, 16
        %v2161 = vrot.slane %v2159, 6
        %v2162 = vshll.u32 %v1990, 16
        %v2164 = vrot.slane %v2162, 7
        %v2165 = vor.u32 %v2161, %v2164
        %v2167 = vshrl.u32 %v1993, 16
        %v2169 = vrot.slane %v2167, 6
        %v2170 = vshll.u32 %v1993, 16
        %v2172 = vrot.slane %v2170, 7
        %v2173 = vor.u32 %v2169, %v2172
        %v2174 = vsel %vm603, %v2165, %v2173
        %v2176 = vshrl.u32 %v1998, 16
        %v2178 = vrot.slane %v2176, 6
        %v2179 = vshll.u32 %v1998, 16
        %v2181 = vrot.slane %v2179, 7
        %v2182 = vor.u32 %v2178, %v2181
        %v2184 = vshrl.u32 %v1997, 16
        %v2186 = vrot.slane %v2184, 6
        %v2187 = vshll.u32 %v1997, 16
        %v2189 = vrot.slane %v2187, 7
        %v2190 = vor.u32 %v2186, %v2189
        %v2191 = vsel %vm603, %v2182, %v2190
        %v2193 = vshrl.u32 %v2006, 16
        %v2195 = vrot.slane %v2193, 6
        %v2196 = vshll.u32 %v2006, 16
        %v2198 = vrot.slane %v2196, 7
        %v2199 = vor.u32 %v2195, %v2198
        %v2200 = vsel %vm603, %v2199, %v2199
        %v2202 = vshrl.u32 %v2009, 16
        %v2204 = vrot.slane %v2202, 6
        %v2205 = vshll.u32 %v2009, 16
        %v2207 = vrot.slane %v2205, 7
        %v2208 = vor.u32 %v2204, %v2207
        %v2210 = vshrl.u32 %v2011, 16
        %v2212 = vrot.slane %v2210, 6
        %v2213 = vshll.u32 %v2011, 16
        %v2215 = vrot.slane %v2213, 7
        %v2216 = vor.u32 %v2212, %v2215
        %v2217 = vsel %vm603, %v2208, %v2216
        %v2219 = vshrl.u32 %v2019, 16
        %v2221 = vrot.slane %v2219, 6
        %v2222 = vshll.u32 %v2019, 16
        %v2224 = vrot.slane %v2222, 7
        %v2225 = vor.u32 %v2221, %v2224
        %v2227 = vshrl.u32 %v2028, 16
        %v2229 = vrot.slane %v2227, 6
        %v2230 = vshll.u32 %v2028, 16
        %v2232 = vrot.slane %v2230, 7
        %v2233 = vor.u32 %v2229, %v2232
        %v2234 = vsel %vm603, %v2225, %v2233
        %v2236 = vshrl.u32 %v2031, 16
        %v2238 = vrot.slane %v2236, 6
        %v2239 = vshll.u32 %v2031, 16
        %v2241 = vrot.slane %v2239, 7
        %v2242 = vor.u32 %v2238, %v2241
        %v2244 = vshrl.u32 %v2033, 16
        %v2246 = vrot.slane %v2244, 6
        %v2247 = vshll.u32 %v2033, 16
        %v2249 = vrot.slane %v2247, 7
        %v2250 = vor.u32 %v2246, %v2249
        %v2251 = vsel %vm603, %v2242, %v2250
        %v2371 = vunpack.c.l.b16 %v2034
        %v2372 = vunpack.c.l.b16 %v2035
        %v2373 = vunpack.c.l.b16 %v2036
        %v2374 = vunpack.c.l.b16 %v2037
        %v2375 = vunpack.c.l.b16 %v2038
        %v2376 = vunpack.c.l.b16 %v2039
        %v2377 = vunpack.c.l.b16 %v2040
        %v2378 = vunpack.c.l.b16 %v2041
        %v2379 = vunpack.c.l.b16 %v2042
        %v2380 = vunpack.c.l.b16 %v2043
        %v2381 = vunpack.c.l.b16 %v2044
        %v2382 = vunpack.c.l.b16 %v2045
        %v2383 = vunpack.c.l.b16 %v2046
        %v2384 = vunpack.c.l.b16 %v2047
        %v2385 = vunpack.c.l.b16 %v2048
        %v2386 = vunpack.c.l.b16 %v2049
        %v2387 = vunpack.c.l.b16 %v2050
        %v2388 = vunpack.c.l.b16 %v2051
        %v2389 = vunpack.c.l.b16 %v2052
        %v2390 = vunpack.c.l.b16 %v2053
        %v2391 = vunpack.c.l.b16 %v2054
        %v2392 = vunpack.c.l.b16 %v2055
        %v2393 = vunpack.c.l.b16 %v2056
        %v2394 = vunpack.c.l.b16 %v2057
        %v2395 = vunpack.c.l.b16 %v2058
        %v2396 = vunpack.c.l.b16 %v2059
        %v2397 = vunpack.c.l.b16 %v2060
        %v2398 = vunpack.c.l.b16 %v2061
        %v2399 = vunpack.c.l.b16 %v2062
        %v2400 = vunpack.c.l.b16 %v2063
        %v2401 = vunpack.c.l.b16 %v2064
        %v2402 = vunpack.c.l.b16 %v2065
        %v2403 = vunpack.c.l.b16 %v2066
        %v2404 = vunpack.c.l.b16 %v2067
        %v2405 = vunpack.c.l.b16 %v2068
        %v2406 = vunpack.c.l.b16 %v2069
        %v2407 = vunpack.c.l.b16 %v2070
        %v2408 = vunpack.c.l.b16 %v2071
        %v2409 = vunpack.c.l.b16 %v2072
        %v2410 = vunpack.c.l.b16 %v2073
        %v2411 = vunpack.c.l.b16 %v2074
        %v2412 = vunpack.c.l.b16 %v2075
        %v2413 = vunpack.c.l.b16 %v2076
        %v2414 = vunpack.c.l.b16 %v2077
        %v2415 = vunpack.c.l.b16 %v2078
        %v2416 = vunpack.c.l.b16 %v2079
        %v2417 = vunpack.c.l.b16 %v2080
        %v2418 = vunpack.c.l.b16 %v2081
        %v2419 = vunpack.c.l.b16 %v2082
        %v2420 = vunpack.c.l.b16 %v2083
        %v2421 = vunpack.c.l.b16 %v2084
        %v2422 = vunpack.c.l.b16 %v2085
        %v2423 = vunpack.c.l.b16 %v2086
        %v2424 = vunpack.c.l.b16 %v2087
        %v2425 = vunpack.c.l.b16 %v2088
        %v2426 = vunpack.c.l.b16 %v2089
        %v2427 = vunpack.c.l.b16 %v2090
        %v2428 = vunpack.c.l.b16 %v2091
        %v2429 = vunpack.c.l.b16 %v2092
        %v2430 = vunpack.c.l.b16 %v2093
        %v2431 = vunpack.c.l.b16 %v2094
        %v2432 = vunpack.c.l.b16 %v2095
        %v2433 = vunpack.c.l.b16 %v2096
        %v2434 = vunpack.c.l.b16 %v2097
        %v2435 = vunpack.c.l.b16 %v2098
        %v2436 = vunpack.c.l.b16 %v2099
        %v2437 = vunpack.c.l.b16 %v2100
        %v2438 = vunpack.c.l.b16 %v2101
        %v2439 = vunpack.c.l.b16 %v2102
        %v2440 = vunpack.c.l.b16 %v2103
        %v2441 = vunpack.c.l.b16 %v2104
        %v2442 = vunpack.c.l.b16 %v2105
        %v2443 = vunpack.c.l.b16 %v2106
        %v2444 = vunpack.c.l.b16 %v2107
        %v2445 = vunpack.c.l.b16 %v2108
        %v2446 = vunpack.c.l.b16 %v2109
        %v2447 = vunpack.c.l.b16 %v2110
        %v2448 = vunpack.c.l.b16 %v2111
        %v2449 = vunpack.c.l.b16 %v2112
        %v2450 = vunpack.c.l.b16 %v2113
        %v2451 = vunpack.c.l.b16 %v2114
        %v2452 = vunpack.c.l.b16 %v2115
        %v2453 = vunpack.c.l.b16 %v2116
        %v2454 = vunpack.c.l.b16 %v2117
        %v2455 = vunpack.c.l.b16 %v2118
        %v2456 = vunpack.c.l.b16 %v2119
        %v2457 = vunpack.c.l.b16 %v2120
        %v2458 = vunpack.c.l.b16 %v2121
        %v2459 = vunpack.c.l.b16 %v2122
        %v2460 = vunpack.c.l.b16 %v2123
        %v2461 = vunpack.c.l.b16 %v2124
        %v2462 = vunpack.c.l.b16 %v2125
        %v2463 = vunpack.c.l.b16 %v2126
        %v2464 = vunpack.c.l.b16 %v2127
        %v2465 = vunpack.c.l.b16 %v2128
        %v2466 = vunpack.c.l.b16 %v2129
        %v2467 = vunpack.c.l.b16 %v2130
        %v2468 = vunpack.c.l.b16 %v2131
        %v2469 = vunpack.c.l.b16 %v2132
        %v2470 = vunpack.c.l.b16 %v2133
        %v2471 = vunpack.c.l.b16 %v2134
        %v2472 = vunpack.c.l.b16 %v2135
        %v2473 = vunpack.c.l.b16 %v2136
        %v2474 = vunpack.c.l.b16 %v2137
        %v2475 = vunpack.c.l.b16 %v2138
        %v2476 = vunpack.c.l.b16 %v2139
        %v2477 = vunpack.c.l.b16 %v2140
        %v2478 = vunpack.c.l.b16 %v2141
        %v2479 = vunpack.c.l.b16 %v2142
        %v2480 = vunpack.c.l.b16 %v2143
        %v2481 = vunpack.c.l.b16 %v2144
        %v2482 = vunpack.c.l.b16 %v2145
        %v2483 = vpack.c.b16 %v2372, %v2371
        %v2484 = vpack.c.b16 %v2374, %v2373
        %v2485 = vpack.c.b16 %v2376, %v2375
        %v2486 = vpack.c.b16 %v2378, %v2377
        %v2487 = vpack.c.b16 %v2380, %v2379
        %v2488 = vpack.c.b16 %v2382, %v2381
        %v2489 = vpack.c.b16 %v2384, %v2383
        %v2490 = vpack.c.b16 %v2386, %v2385
        %v2491 = vpack.c.b16 %v2388, %v2387
        %v2492 = vpack.c.b16 %v2390, %v2389
        %v2493 = vpack.c.b16 %v2392, %v2391
        %v2494 = vpack.c.b16 %v2394, %v2393
        %v2495 = vpack.c.b16 %v2396, %v2395
        %v2496 = vpack.c.b16 %v2398, %v2397
        %v2497 = vpack.c.b16 %v2400, %v2399
        %v2498 = vpack.c.b16 %v2402, %v2401
        %v2499 = vpack.c.b16 %v2404, %v2403
        %v2500 = vpack.c.b16 %v2406, %v2405
        %v2501 = vpack.c.b16 %v2408, %v2407
        %v2502 = vpack.c.b16 %v2410, %v2409
        %v2503 = vpack.c.b16 %v2412, %v2411
        %v2504 = vpack.c.b16 %v2414, %v2413
        %v2505 = vpack.c.b16 %v2416, %v2415
        %v2506 = vpack.c.b16 %v2418, %v2417
        %v2507 = vpack.c.b16 %v2420, %v2419
        %v2508 = vpack.c.b16 %v2422, %v2421
        %v2509 = vpack.c.b16 %v2424, %v2423
        %v2510 = vpack.c.b16 %v2426, %v2425
        %v2511 = vpack.c.b16 %v2428, %v2427
        %v2512 = vpack.c.b16 %v2430, %v2429
        %v2513 = vpack.c.b16 %v2432, %v2431
        %v2514 = vpack.c.b16 %v2434, %v2433
        %v2515 = vpack.c.b16 %v2436, %v2435
        %v2516 = vpack.c.b16 %v2438, %v2437
        %v2517 = vpack.c.b16 %v2440, %v2439
        %v2518 = vpack.c.b16 %v2442, %v2441
        %v2519 = vpack.c.b16 %v2444, %v2443
        %v2520 = vpack.c.b16 %v2446, %v2445
        %v2521 = vpack.c.b16 %v2448, %v2447
        %v2522 = vpack.c.b16 %v2450, %v2449
        %v2523 = vpack.c.b16 %v2452, %v2451
        %v2524 = vpack.c.b16 %v2454, %v2453
        %v2525 = vpack.c.b16 %v2456, %v2455
        %v2526 = vpack.c.b16 %v2458, %v2457
        %v2527 = vpack.c.b16 %v2460, %v2459
        %v2528 = vpack.c.b16 %v2462, %v2461
        %v2529 = vpack.c.b16 %v2464, %v2463
        %v2530 = vpack.c.b16 %v2466, %v2465
        %v2531 = vpack.c.b16 %v2468, %v2467
        %v2532 = vpack.c.b16 %v2470, %v2469
        %v2533 = vpack.c.b16 %v2472, %v2471
        %v2534 = vpack.c.b16 %v2474, %v2473
        %v2535 = vpack.c.b16 %v2476, %v2475
        %v2536 = vpack.c.b16 %v2478, %v2477
        %v2537 = vpack.c.b16 %v2480, %v2479
        %v2538 = vpack.c.b16 %v2482, %v2481
        %2595 = vmatprep.subr.bf16.mxu0 0
        %2596 = vmatpush1.bf16.msra.mxu0 %v2483
        %2597 = vmatprep.subr.bf16.mxu0 0
        %2598 = vmatpush1.bf16.msra.mxu0 %v2484
        %2599 = vmatprep.subr.bf16.mxu0 0
        %2600 = vmatpush1.bf16.msra.mxu0 %v2485
        %2601 = vmatprep.subr.bf16.mxu0 0
        %2602 = vmatpush1.bf16.msra.mxu0 %v2486
        %2603 = vmatprep.subr.bf16.mxu0 0
        %2604 = vmatpush1.bf16.msra.mxu0 %v2487
        %2605 = vmatprep.subr.bf16.mxu0 0
        %2606 = vmatpush1.bf16.msra.mxu0 %v2488
        %2607 = vmatprep.subr.bf16.mxu0 0
        %2608 = vmatpush1.bf16.msra.mxu0 %v2489
        %2609 = vmatprep.subr.bf16.mxu0 0
        %2610 = vmatpush1.bf16.msra.mxu0 %v2490
        %2611 = vmatprep.subr.bf16.mxu0 0
        %2612 = vmatpush1.bf16.msra.mxu0 %v2491
        %2613 = vmatprep.subr.bf16.mxu0 0
        %2614 = vmatpush1.bf16.msra.mxu0 %v2492
        %2615 = vmatprep.subr.bf16.mxu0 0
        %2616 = vmatpush1.bf16.msra.mxu0 %v2493
        %2617 = vmatprep.subr.bf16.mxu0 0
        %2618 = vmatpush1.bf16.msra.mxu0 %v2494
        %2619 = vmatprep.subr.bf16.mxu0 0
        %2620 = vmatpush1.bf16.msra.mxu0 %v2495
        %2621 = vmatprep.subr.bf16.mxu0 0
        %2622 = vmatpush1.bf16.msra.mxu0 %v2496
        %2623 = vmatprep.subr.bf16.mxu0 0
        %2624 = vmatpush1.bf16.msra.mxu0 %v2497
        %2625 = vmatprep.subr.bf16.mxu0 0
        %2626 = vmatpush1.bf16.msra.mxu0 %v2498
        %2627 = vmatprep.mubr.bf16.mxu0 %v2174
        %2628 = vmatmul.mubr.bf16.gmra.mrb[0].mxu0 %v2157
        %v2629 = vpop.f32.mrb[0].mxu0
        %v2630 = vadd.f32 0.0, %v2629
        %v2631 = vpop.f32.mrb[0].mxu0
        %v2632 = vpop.f32.mrb[0].mxu0
        %v2633 = vadd.f32 0.0, %v2632
        %v2634 = vpop.f32.mrb[0].mxu0
        %2635 = vdwg.mxu0
        %2636 = vmatprep.subr.bf16.mxu0 0
        %2637 = vmatpush1.bf16.msra.mxu0 %v2499
        %2638 = vmatprep.subr.bf16.mxu0 0
        %2639 = vmatpush1.bf16.msra.mxu0 %v2500
        %2640 = vmatprep.subr.bf16.mxu0 0
        %2641 = vmatpush1.bf16.msra.mxu0 %v2501
        %2642 = vmatprep.subr.bf16.mxu0 0
        %2643 = vmatpush1.bf16.msra.mxu0 %v2502
        %2644 = vmatprep.subr.bf16.mxu0 0
        %2645 = vmatpush1.bf16.msra.mxu0 %v2503
        %2646 = vmatprep.subr.bf16.mxu0 0
        %2647 = vmatpush1.bf16.msra.mxu0 %v2504
        %2648 = vmatprep.subr.bf16.mxu0 0
        %2649 = vmatpush1.bf16.msra.mxu0 %v2505
        %2650 = vmatprep.subr.bf16.mxu0 0
        %2651 = vmatpush1.bf16.msra.mxu0 %v2506
        %2652 = vmatprep.subr.bf16.mxu0 0
        %2653 = vmatpush1.bf16.msra.mxu0 %v2507
        %2654 = vmatprep.subr.bf16.mxu0 0
        %2655 = vmatpush1.bf16.msra.mxu0 %v2508
        %2656 = vmatprep.subr.bf16.mxu0 0
        %2657 = vmatpush1.bf16.msra.mxu0 %v2509
        %2658 = vmatprep.subr.bf16.mxu0 0
        %2659 = vmatpush1.bf16.msra.mxu0 %v2510
        %2660 = vmatprep.subr.bf16.mxu0 0
        %2661 = vmatpush1.bf16.msra.mxu0 %v2511
        %2662 = vmatprep.subr.bf16.mxu0 0
        %2663 = vmatpush1.bf16.msra.mxu0 %v2512
        %2664 = vmatprep.subr.bf16.mxu0 0
        %2665 = vmatpush1.bf16.msra.mxu0 %v2513
        %2666 = vmatprep.subr.bf16.mxu0 0
        %2667 = vmatpush1.bf16.msra.mxu0 %v2514
        %2668 = vmatprep.mubr.bf16.mxu0 %v2200
        %2669 = vmatmul.mubr.bf16.gmra.mrb[0].mxu0 %v2191
        %v2670 = vpop.f32.mrb[0].mxu0
        %v2671 = vadd.f32 %v2630, %v2670
        %v2672 = vpop.f32.mrb[0].mxu0
        %v2673 = vpop.f32.mrb[0].mxu0
        %v2674 = vadd.f32 %v2633, %v2673
        %v2675 = vpop.f32.mrb[0].mxu0
        %2676 = vdwg.mxu0
        %2677 = vmatprep.subr.bf16.mxu0 0
        %2678 = vmatpush1.bf16.msra.mxu0 %v2515
        %2679 = vmatprep.subr.bf16.mxu0 0
        %2680 = vmatpush1.bf16.msra.mxu0 %v2516
        %2681 = vmatprep.subr.bf16.mxu0 0
        %2682 = vmatpush1.bf16.msra.mxu0 %v2517
        %2683 = vmatprep.subr.bf16.mxu0 0
        %2684 = vmatpush1.bf16.msra.mxu0 %v2518
        %2685 = vmatprep.subr.bf16.mxu0 0
        %2686 = vmatpush1.bf16.msra.mxu0 %v2519
        %2687 = vmatprep.subr.bf16.mxu0 0
        %2688 = vmatpush1.bf16.msra.mxu0 %v2520
        %2689 = vmatprep.subr.bf16.mxu0 0
        %2690 = vmatpush1.bf16.msra.mxu0 %v2521
        %2691 = vmatprep.subr.bf16.mxu0 0
        %2692 = vmatpush1.bf16.msra.mxu0 %v2522
        %2693 = vmatprep.subr.bf16.mxu0 0
        %2694 = vmatpush1.bf16.msra.mxu0 %v2523
        %2695 = vmatprep.subr.bf16.mxu0 0
        %2696 = vmatpush1.bf16.msra.mxu0 %v2524
        %2697 = vmatprep.subr.bf16.mxu0 0
        %2698 = vmatpush1.bf16.msra.mxu0 %v2525
        %2699 = vmatprep.subr.bf16.mxu0 0
        %2700 = vmatpush1.bf16.msra.mxu0 %v2526
        %2701 = vmatprep.subr.bf16.mxu0 0
        %2702 = vmatpush1.bf16.msra.mxu0 %v2527
        %2703 = vmatprep.subr.bf16.mxu0 0
        %2704 = vmatpush1.bf16.msra.mxu0 %v2528
        %2705 = vmatprep.subr.bf16.mxu0 0
        %2706 = vmatpush1.bf16.msra.mxu0 %v2529
        %2707 = vmatprep.subr.bf16.mxu0 0
        %2708 = vmatpush1.bf16.msra.mxu0 %v2530
        %2709 = vmatprep.mubr.bf16.mxu0 %v2234
        %2710 = vmatmul.mubr.bf16.gmra.mrb[0].mxu0 %v2217
        %v2711 = vpop.f32.mrb[0].mxu0
        %v2712 = vadd.f32 %v2671, %v2711
        %v2713 = vpop.f32.mrb[0].mxu0
        %v2714 = vpop.f32.mrb[0].mxu0
        %v2715 = vadd.f32 %v2674, %v2714
        %v2716 = vpop.f32.mrb[0].mxu0
        %2717 = vdwg.mxu0
        %2718 = vmatprep.subr.bf16.mxu0 0
        %2719 = vmatpush1.bf16.msra.mxu0 %v2531
        %2720 = vmatprep.subr.bf16.mxu0 0
        %2721 = vmatpush1.bf16.msra.mxu0 %v2532
        %2722 = vmatprep.subr.bf16.mxu0 0
        %2723 = vmatpush1.bf16.msra.mxu0 %v2533
        %2724 = vmatprep.subr.bf16.mxu0 0
        %2725 = vmatpush1.bf16.msra.mxu0 %v2534
        %2726 = vmatprep.subr.bf16.mxu0 0
        %2727 = vmatpush1.bf16.msra.mxu0 %v2535
        %2728 = vmatprep.subr.bf16.mxu0 0
        %2729 = vmatpush1.bf16.msra.mxu0 %v2536
        %2730 = vmatprep.subr.bf16.mxu0 0
        %2731 = vmatpush1.bf16.msra.mxu0 %v2537
        %2732 = vmatprep.subr.bf16.mxu0 0
        %2733 = vmatpush1.bf16.msra.mxu0 %v2538
        %2734 = vmatprep.subr.bf16.mxu0 0
        %2735 = vmatpush1.bf16.msra.mxu0 0
        %2736 = vmatprep.subr.bf16.mxu0 0
        %2737 = vmatpush1.bf16.msra.mxu0 0
        %2738 = vmatprep.subr.bf16.mxu0 0
        %2739 = vmatpush1.bf16.msra.mxu0 0
        %2740 = vmatprep.subr.bf16.mxu0 0
        %2741 = vmatpush1.bf16.msra.mxu0 0
        %2742 = vmatprep.subr.bf16.mxu0 0
        %2743 = vmatpush1.bf16.msra.mxu0 0
        %2744 = vmatprep.subr.bf16.mxu0 0
        %2745 = vmatpush1.bf16.msra.mxu0 0
        %2746 = vmatprep.subr.bf16.mxu0 0
        %2747 = vmatpush1.bf16.msra.mxu0 0
        %2748 = vmatprep.subr.bf16.mxu0 0
        %2749 = vmatpush1.bf16.msra.mxu0 0
        %2750 = vmatprep.mubr.bf16.mxu0 0
        %2751 = vmatmul.mubr.bf16.gmra.mrb[0].mxu0 %v2251
        %v2752 = vpop.f32.mrb[0].mxu0
        %v2753 = vadd.f32 %v2712, %v2752
        %v2754 = vpop.f32.mrb[0].mxu0
        %v2755 = vpop.f32.mrb[0].mxu0
        %v2756 = vadd.f32 %v2715, %v2755
        %v2757 = vpop.f32.mrb[0].mxu0
        %2758 = vdwg.mxu0
        %v2759 = vadd.f32 %v412, %v2753
        %v2760 = vadd.f32 %v413, %v2756
        %v2761 = vld [vmem:[%s8] sm:$0x1]
        %v2763 = vlaneseq
        %v2764 = vshrl.u32 %v2763, 7
        %v2765 = vsub.s32 0, %v2764
        %v2766 = vrot.slane %v2761, %v2765
        %v2768 = vadd.f32 %v2759, %v2766
        %v2769 = vadd.f32 %v2760, %v2766
        %2770 = vst [vmem:[%s408] sm:$0xff] %v2768
        %2771 = vst [vmem:[%s408 + $0x8] sm:$0xff] %v2769
        %s2772 = sand.u32 %s230, 1
        %s2773 = scalar_lea.sflag [#allocation5], %s2772
        %s2774 = sand.u32 %s230, 1
        %s2775 = smul.addr %s2774, 16
        %s2776 = scalar_lea.vmem [#allocation12], %s2775
        // Predicated region
        $region77: #{tpu_custom_call.1} parent=55 // pred_check
          %p2777 = pneg %p240
        $region78: #{tpu_custom_call.1} parent=55 // pred_check_branch
          %2779 = sbr.rel (%p2777) target = $region80
        $region79: #{tpu_custom_call.1} parent=55 // pred_region
          %s2781 = ssub.s32 256, 256
          %2782 = vsyncadd %s2773, %s2781
          %s2783 = smul.addr %s28, 2
          %s2784 = smul.addr %s2783, 128
          %s2785 = scalar_lea.hbm %s9, %s2784
          %s2786 = sshll.u32 %s2776, 4
          %s2787 = int_to_ptr.vmem [resolvable:$true] %s2786
          %2792 = dma.vmem_to_hbm [thread:$0]  %s2787, 256, %s2785, %s2773, 128, 128, 8
        $region80: #{tpu_custom_call.1} parent=55 // pred_fallthru
          _
      $region56: #{tpu_custom_call.1} parent=5 // pred_fallthru
        _
      %p2793 = scmp.le.s32.totalorder 2, %s23
      // Predicated region
      $region81: #{tpu_custom_call.1} parent=5 // pred_check
        %p2794 = pneg %p2793
      $region82: #{tpu_custom_call.1} parent=5 // pred_check_branch
        %2796 = sbr.rel (%p2794) target = $region84
      $region83: #{tpu_custom_call.1} parent=5 // pred_region
        %s2797 = ssub.s32 %s23, 2
        // Predicated region
        $region85: #{tpu_custom_call.1} parent=83 // pred_check
          %p2798 = pneg %p246
        $region86: #{tpu_custom_call.1} parent=83 // pred_check_branch
          %2800 = sbr.rel (%p2798) target = $region88
        $region87: #{tpu_custom_call.1} parent=83 // pred_region
          %s2801 = sand.u32 %s231, 1
          %s2802 = scalar_lea.sflag [#allocation5], %s2801
          %s2803 = sand.u32 %s231, 1
          %s2804 = smul.addr %s2803, 16
          %s2805 = scalar_lea.vmem [#allocation12], %s2804
          %2806 = dma.done %s2802, 256
        $region88: #{tpu_custom_call.1} parent=83 // pred_fallthru
          _
      $region84: #{tpu_custom_call.1} parent=5 // pred_fallthru
        _
    $region6: #{tpu_custom_call.1} parent=1 // loop_footer
      %s27 = sadd.s32 1, %s23
    $region7: #{tpu_custom_call.1} parent=1 // loop_footer_branch
      %22 = sbr.rel target = $region3
    $region8: #{tpu_custom_call.1} parent=1 // loop_exit
      _
    %2807 = vsyncpa [#allocation4], 1
    %s2808 = scalar_lea.sflag [#allocation4], 1
    %2809 = vsyncpa %s2808, 1
    %2810 = vsyncpa [#allocation7], 1
    %2811 = vsyncpa [#allocation10], 1
    %2812 = vsyncpa [#allocation5], 1
    %s2813 = scalar_lea.sflag [#allocation5], 1
    %2814 = vsyncpa %s2813, 1

</llo_original>
